<compile_context>
chip_gen: v7x
topology: tpu7x:2x2x1
jax: 0.10.0
libtpu: 0.0.40
codegen_flags: <defaults>
</compile_context>

<pallas_src>
import functools

import jax
import jax.numpy as jnp
from jax.experimental import pallas as pl
from jax.experimental.pallas import tpu as pltpu


LN_EPS = 1e-5


def _layernorm(x, gamma, beta):
    # x: (M, D) fp32; gamma/beta: (1, D) fp32
    mean = jnp.mean(x, axis=-1, keepdims=True)
    var = jnp.mean(jnp.square(x - mean), axis=-1, keepdims=True)
    inv = jax.lax.rsqrt(var + LN_EPS)
    return (x - mean) * inv * gamma + beta


def _dot_t(a, w):
    """a:(M,K) @ w:(N,K)^T -> (M,N); contraction on last axes, fp32 accumulate."""
    return jax.lax.dot_general(
        a, w, (((1,), (1,)), ((), ())), preferred_element_type=jnp.float32)


def _block_kernel(*refs, n_head: int, has_mask: bool):
    if has_mask:
        (x_ref, mask_ref,
         ln1_g, ln1_b, in_w, in_b, out_w, out_b,
         ln2_g, ln2_b, fc_w, fc_b, proj_w, proj_b,
         o_ref, ctx_ref) = refs
    else:
        (x_ref,
         ln1_g, ln1_b, in_w, in_b, out_w, out_b,
         ln2_g, ln2_b, fc_w, fc_b, proj_w, proj_b,
         o_ref, ctx_ref) = refs
        mask_ref = None

    bt, L, D = x_ref.shape
    hd = D // n_head
    scale = 1.0 / float(hd) ** 0.5
    M = bt * L

    x = x_ref[...].astype(jnp.float32).reshape(M, D)

    # ---- ln_1 (fp32 stats) ----
    h = _layernorm(x, ln1_g[...], ln1_b[...])

    # ---- fused QKV projection (bf16 MXU, fp32 accumulation) ----
    qkv = _dot_t(h.astype(jnp.bfloat16), in_w[...]) + in_b[...]
    qkv = qkv.astype(jnp.bfloat16).reshape(bt, L, 3 * D)

    # ---- per-head attention via static lane slices (no head transposes) ----
    for hh in range(n_head):
        q = qkv[:, :, hh * hd:(hh + 1) * hd]                    # (bt, L, hd) bf16
        k = qkv[:, :, D + hh * hd:D + (hh + 1) * hd]
        v = qkv[:, :, 2 * D + hh * hd:2 * D + (hh + 1) * hd]

        s = jnp.einsum("bqd,bkd->bqk", q, k,
                       preferred_element_type=jnp.float32) * scale
        if has_mask:
            s = s + mask_ref[...][None, :, :]
        s = s - jnp.max(s, axis=-1, keepdims=True)
        p = jnp.exp(s)
        p = p * pl.reciprocal(jnp.sum(p, axis=-1, keepdims=True), approx=True)
        ctx = jnp.einsum("bqk,bkd->bqd", p.astype(jnp.bfloat16), v,
                         preferred_element_type=jnp.float32)
        ctx_ref[:, :, hh * hd:(hh + 1) * hd] = ctx.astype(jnp.bfloat16)

    # ---- output projection + residual ----
    attn_out = _dot_t(ctx_ref[...].reshape(M, D), out_w[...]) + out_b[...]
    x = x + attn_out

    # ---- ln_2 + MLP (c_fc -> QuickGELU -> c_proj) ----
    h2 = _layernorm(x, ln2_g[...], ln2_b[...])
    f = _dot_t(h2.astype(jnp.bfloat16), fc_w[...]) + fc_b[...]
    f = f * jax.nn.sigmoid(1.702 * f)                            # QuickGELU (fp32)
    m = _dot_t(f.astype(jnp.bfloat16), proj_w[...]) + proj_b[...]
    x = x + m

    o_ref[...] = x.reshape(bt, L, D).astype(o_ref.dtype)


def residual_attention_block(x_lnd, params, attn_mask=None, *, n_head):
    """x_lnd: (L, N, D) float32, PyTorch MultiheadAttention layout."""
    L, N, D = x_lnd.shape
    x_nld = jnp.transpose(x_lnd, (1, 0, 2))          # -> (N, L, D) kernel layout

    # batch tile: amortize per-step overhead / feed the MXU a bigger M dim
    bt = next(b for b in (8, 4, 2, 1) if N % b == 0)
    grid = (N // bt,)
    has_mask = attn_mask is not None

    # bf16 weights (halve HBM/VMEM traffic; MXU-native), fp32 biases/LN params
    w_bf = {k: params[k].astype(jnp.bfloat16)
            for k in ("in_w", "out_w", "fc_w", "proj_w")}

    flops = N * (24 * L * D * D + 4 * L * L * D)
    transcendentals = N * (n_head * L * L + 4 * L * D)
    bytes_accessed = 2 * N * L * D * 4 + 12 * D * D * 2 + (L * L * 4 if has_mask else 0)
    vmem_est = (2 * (12 * D * D * 2 + 13 * D * 4 + (L * L * 4 if has_mask else 0))
                + 4 * bt * L * 16 * D + (2 << 20))
    vmem_limit = int(max(32 * 1024 * 1024, min(vmem_est, 64 * 1024 * 1024)))

    def call(single_buffer):
        const_kw = {"pipeline_mode": pl.Buffered(1)} if single_buffer else {}

        def const(shape):
            return pl.BlockSpec(shape, lambda n: (0,) * len(shape), **const_kw)

        in_specs = [pl.BlockSpec((bt, L, D), lambda n: (n, 0, 0))]
        args = [x_nld]
        if has_mask:
            in_specs.append(const((L, L)))
            args.append(attn_mask.astype(jnp.float32))
        in_specs += [
            const((1, D)), const((1, D)),              # ln_1
            const((3 * D, D)), const((1, 3 * D)),      # in_proj
            const((D, D)), const((1, D)),              # out_proj
            const((1, D)), const((1, D)),              # ln_2
            const((4 * D, D)), const((1, 4 * D)),      # c_fc
            const((D, 4 * D)), const((1, D)),          # c_proj
        ]
        args += [
            params["ln1_g"], params["ln1_b"],
            w_bf["in_w"], params["in_b"],
            w_bf["out_w"], params["out_b"],
            params["ln2_g"], params["ln2_b"],
            w_bf["fc_w"], params["fc_b"],
            w_bf["proj_w"], params["proj_b"],
        ]

        kernel = functools.partial(_block_kernel, n_head=n_head, has_mask=has_mask)
        out = pl.pallas_call(
            kernel,
            out_shape=jax.ShapeDtypeStruct((N, L, D), x_lnd.dtype),
            grid_spec=pltpu.PrefetchScalarGridSpec(
                num_scalar_prefetch=0,
                grid=grid,
                in_specs=in_specs,
                out_specs=pl.BlockSpec((bt, L, D), lambda n: (n, 0, 0)),
                scratch_shapes=[pltpu.VMEM((bt, L, D), jnp.bfloat16)],
            ),
            compiler_params=pltpu.CompilerParams(
                dimension_semantics=("parallel",),
                vmem_limit_bytes=vmem_limit,
            ),
            cost_estimate=pl.CostEstimate(
                flops=flops,
                transcendentals=transcendentals,
                bytes_accessed=bytes_accessed,
            ),
        )(*args)
        return jax.block_until_ready(out)

    try:
        out_nld = call(single_buffer=True)
    except Exception:
        # Fallback if this JAX build rejects single-buffered pipeline_mode.
        out_nld = call(single_buffer=False)

    return jnp.transpose(out_nld, (1, 0, 2))          # back to (L, N, D)


def _reference(x_lnd, params, attn_mask, n_head):
    """Pure-JAX fp32 reference mirroring torch semantics."""
    L, N, D = x_lnd.shape
    hd = D // n_head

    def ln(x, g, b):
        mu = jnp.mean(x, -1, keepdims=True)
        var = jnp.mean((x - mu) ** 2, -1, keepdims=True)
        return (x - mu) / jnp.sqrt(var + LN_EPS) * g[0] + b[0]

    x = x_lnd
    h = ln(x, params["ln1_g"], params["ln1_b"])
    qkv = h @ params["in_w"].T + params["in_b"][0]
    q, k, v = jnp.split(qkv, 3, axis=-1)                        # (L, N, D)

    def heads(t):  # (L,N,D) -> (N,H,L,hd)
        return jnp.transpose(t.reshape(L, N, n_head, hd), (1, 2, 0, 3))

    qh, kh, vh = heads(q), heads(k), heads(v)
    s = jnp.einsum("nhqd,nhkd->nhqk", qh, kh) / (hd ** 0.5)
    if attn_mask is not None:
        s = s + attn_mask[None, None]
    p = jax.nn.softmax(s, axis=-1)
    c = jnp.einsum("nhqk,nhkd->nhqd", p, vh)
    c = jnp.transpose(c, (2, 0, 1, 3)).reshape(L, N, D)
    a = c @ params["out_w"].T + params["out_b"][0]
    x = x + a
    h2 = ln(x, params["ln2_g"], params["ln2_b"])
    f = h2 @ params["fc_w"].T + params["fc_b"][0]
    f = f * jax.nn.sigmoid(1.702 * f)
    m = f @ params["proj_w"].T + params["proj_b"][0]
    return x + m


def make_params(key, d_model):
    ks = jax.random.split(key, 8)
    s = 0.02
    return {
        "ln1_g": jnp.ones((1, d_model), jnp.float32),
        "ln1_b": jnp.zeros((1, d_model), jnp.float32),
        "in_w": s * jax.random.normal(ks[0], (3 * d_model, d_model), jnp.float32),
        "in_b": s * jax.random.normal(ks[1], (1, 3 * d_model), jnp.float32),
        "out_w": s * jax.random.normal(ks[2], (d_model, d_model), jnp.float32),
        "out_b": s * jax.random.normal(ks[3], (1, d_model), jnp.float32),
        "ln2_g": jnp.ones((1, d_model), jnp.float32),
        "ln2_b": jnp.zeros((1, d_model), jnp.float32),
        "fc_w": s * jax.random.normal(ks[4], (4 * d_model, d_model), jnp.float32),
        "fc_b": s * jax.random.normal(ks[5], (1, 4 * d_model), jnp.float32),
        "proj_w": s * jax.random.normal(ks[6], (d_model, 4 * d_model), jnp.float32),
        "proj_b": s * jax.random.normal(ks[7], (1, d_model), jnp.float32),
    }


if __name__ == "__main__":
    L, N, D, H = 8, 2, 32, 4          # seq, batch, d_model, n_head
    key = jax.random.PRNGKey(0)
    kx, kp = jax.random.split(key)

    x = jax.random.normal(kx, (L, N, D), jnp.float32)   # PyTorch (L, N, D) layout
    params = make_params(kp, D)

    # bf16 matmuls (fp32 accumulation) vs. an fp32 reference -> modest tolerance.
    TOL = dict(atol=2e-2, rtol=2e-2)

    # Case 1: no attention mask (common ViT case; specialized kernel, no mask DMA).
    out = jax.block_until_ready(residual_attention_block(x, params, None, n_head=H))
    ref = _reference(x, params, None, H)
    assert out.shape == (L, N, D)
    assert jnp.allclose(out, ref, **TOL), "mismatch vs reference (no mask)"

    # Case 2: additive causal mask.
    idx = jnp.arange(L)
    mask = jnp.where(idx[None, :] <= idx[:, None], 0.0, -jnp.inf).astype(jnp.float32)
    out_m = jax.block_until_ready(residual_attention_block(x, params, mask, n_head=H))
    ref_m = _reference(x, params, mask, H)
    assert jnp.allclose(out_m, ref_m, **TOL), "mismatch vs reference (masked)"

    print("KERNEL_OK")
</pallas_src>

<mosaic_0001>
module attributes {stable_mosaic.version = 11 : i64} {
  func.func @_block_kernel(%arg0: i32, %arg1: memref<2x8x32xf32, #tpu.memory_space<vmem>>, %arg2: memref<1x32xf32, #tpu.memory_space<vmem>>, %arg3: memref<1x32xf32, #tpu.memory_space<vmem>>, %arg4: memref<96x32xbf16, #tpu.memory_space<vmem>>, %arg5: memref<1x96xf32, #tpu.memory_space<vmem>>, %arg6: memref<32x32xbf16, #tpu.memory_space<vmem>>, %arg7: memref<1x32xf32, #tpu.memory_space<vmem>>, %arg8: memref<1x32xf32, #tpu.memory_space<vmem>>, %arg9: memref<1x32xf32, #tpu.memory_space<vmem>>, %arg10: memref<128x32xbf16, #tpu.memory_space<vmem>>, %arg11: memref<1x128xf32, #tpu.memory_space<vmem>>, %arg12: memref<32x128xbf16, #tpu.memory_space<vmem>>, %arg13: memref<1x32xf32, #tpu.memory_space<vmem>>, %arg14: memref<2x8x32xf32, #tpu.memory_space<vmem>>, %arg15: memref<2x8x32xbf16, #tpu.memory_space<vmem>>) attributes {dimension_semantics = [#tpu.dimension_semantics<parallel>], iteration_bounds = array<i64: 1>, scalar_prefetch = 0 : i64, scratch_operands = 1 : i64, tpu.core_type = #tpu.core_type<tc>, window_params = [{transform_indices = @transform_0, window_bounds = array<i64: 2, 8, 32>}, {pipeline_mode = #tpu.pipeline_mode<synchronous>, transform_indices = @transform_1, window_bounds = array<i64: 1, 32>}, {pipeline_mode = #tpu.pipeline_mode<synchronous>, transform_indices = @transform_2, window_bounds = array<i64: 1, 32>}, {pipeline_mode = #tpu.pipeline_mode<synchronous>, transform_indices = @transform_3, window_bounds = array<i64: 96, 32>}, {pipeline_mode = #tpu.pipeline_mode<synchronous>, transform_indices = @transform_4, window_bounds = array<i64: 1, 96>}, {pipeline_mode = #tpu.pipeline_mode<synchronous>, transform_indices = @transform_5, window_bounds = array<i64: 32, 32>}, {pipeline_mode = #tpu.pipeline_mode<synchronous>, transform_indices = @transform_6, window_bounds = array<i64: 1, 32>}, {pipeline_mode = #tpu.pipeline_mode<synchronous>, transform_indices = @transform_7, window_bounds = array<i64: 1, 32>}, {pipeline_mode = #tpu.pipeline_mode<synchronous>, transform_indices = @transform_8, window_bounds = array<i64: 1, 32>}, {pipeline_mode = #tpu.pipeline_mode<synchronous>, transform_indices = @transform_9, window_bounds = array<i64: 128, 32>}, {pipeline_mode = #tpu.pipeline_mode<synchronous>, transform_indices = @transform_10, window_bounds = array<i64: 1, 128>}, {pipeline_mode = #tpu.pipeline_mode<synchronous>, transform_indices = @transform_11, window_bounds = array<i64: 32, 128>}, {pipeline_mode = #tpu.pipeline_mode<synchronous>, transform_indices = @transform_12, window_bounds = array<i64: 1, 32>}, {transform_indices = @transform_13, window_bounds = array<i64: 2, 8, 32>}]} {
    %c0 = arith.constant 0 : index
    %c0_0 = arith.constant 0 : index
    %c0_1 = arith.constant 0 : index
    %0 = vector.load %arg1[%c0, %c0_0, %c0_1] : memref<2x8x32xf32, #tpu.memory_space<vmem>>, vector<2x8x32xf32>
    %1 = vector.shape_cast %0 : vector<2x8x32xf32> to vector<16x32xf32>
    %c0_2 = arith.constant 0 : index
    %c0_3 = arith.constant 0 : index
    %2 = vector.load %arg2[%c0_2, %c0_3] : memref<1x32xf32, #tpu.memory_space<vmem>>, vector<1x32xf32>
    %c0_4 = arith.constant 0 : index
    %c0_5 = arith.constant 0 : index
    %3 = vector.load %arg3[%c0_4, %c0_5] : memref<1x32xf32, #tpu.memory_space<vmem>>, vector<1x32xf32>
    %cst = arith.constant dense<0.000000e+00> : vector<16xf32>
    %4 = vector.multi_reduction <add>, %1, %cst [1] : vector<16x32xf32> to vector<16xf32>
    %5 = vector.shape_cast %4 : vector<16xf32> to vector<16x1xf32>
    %cst_6 = arith.constant 3.200000e+01 : f32
    %6 = vector.broadcast %cst_6 : f32 to vector<16x1xf32>
    %7 = arith.divf %5, %6 : vector<16x1xf32>
    %8 = vector.broadcast %7 : vector<16x1xf32> to vector<16x32xf32>
    %9 = arith.subf %1, %8 : vector<16x32xf32>
    %10 = arith.mulf %9, %9 : vector<16x32xf32>
    %cst_7 = arith.constant dense<0.000000e+00> : vector<16xf32>
    %11 = vector.multi_reduction <add>, %10, %cst_7 [1] : vector<16x32xf32> to vector<16xf32>
    %12 = vector.shape_cast %11 : vector<16xf32> to vector<16x1xf32>
    %cst_8 = arith.constant 3.200000e+01 : f32
    %13 = vector.broadcast %cst_8 : f32 to vector<16x1xf32>
    %14 = arith.divf %12, %13 : vector<16x1xf32>
    %cst_9 = arith.constant 9.99999974E-6 : f32
    %15 = vector.broadcast %cst_9 : f32 to vector<16x1xf32>
    %16 = arith.addf %14, %15 : vector<16x1xf32>
    %17 = math.rsqrt %16 : vector<16x1xf32>
    %18 = vector.broadcast %7 : vector<16x1xf32> to vector<16x32xf32>
    %19 = arith.subf %1, %18 : vector<16x32xf32>
    %20 = vector.broadcast %17 : vector<16x1xf32> to vector<16x32xf32>
    %21 = arith.mulf %19, %20 : vector<16x32xf32>
    %22 = vector.broadcast %2 : vector<1x32xf32> to vector<16x32xf32>
    %23 = arith.mulf %21, %22 : vector<16x32xf32>
    %24 = vector.broadcast %3 : vector<1x32xf32> to vector<16x32xf32>
    %25 = arith.addf %23, %24 : vector<16x32xf32>
    %26 = arith.truncf %25 : vector<16x32xf32> to vector<16x32xbf16>
    %c0_10 = arith.constant 0 : index
    %c0_11 = arith.constant 0 : index
    %27 = vector.load %arg4[%c0_10, %c0_11] : memref<96x32xbf16, #tpu.memory_space<vmem>>, vector<96x32xbf16>
    %cst_12 = arith.constant dense<0.000000e+00> : vector<16x96xf32>
    %28 = tpu.matmul %26, %27, %cst_12 {dimension_numbers = #tpu.dot_dimension_numbers<[1], [1], [0], [0], [0, 0, 1, 0], [], []>} : vector<16x32xbf16>, vector<96x32xbf16>, vector<16x96xf32> -> vector<16x96xf32>
    %c0_13 = arith.constant 0 : index
    %c0_14 = arith.constant 0 : index
    %29 = vector.load %arg5[%c0_13, %c0_14] : memref<1x96xf32, #tpu.memory_space<vmem>>, vector<1x96xf32>
    %30 = vector.broadcast %29 : vector<1x96xf32> to vector<16x96xf32>
    %31 = arith.addf %28, %30 : vector<16x96xf32>
    %32 = arith.truncf %31 : vector<16x96xf32> to vector<16x96xbf16>
    %33 = vector.shape_cast %32 : vector<16x96xbf16> to vector<2x8x96xbf16>
    %34 = vector.extract_strided_slice %33 {offsets = [0, 0, 0], sizes = [2, 8, 8], strides = [1, 1, 1]} : vector<2x8x96xbf16> to vector<2x8x8xbf16>
    %35 = vector.extract_strided_slice %33 {offsets = [0, 0, 32], sizes = [2, 8, 8], strides = [1, 1, 1]} : vector<2x8x96xbf16> to vector<2x8x8xbf16>
    %36 = vector.extract_strided_slice %33 {offsets = [0, 0, 64], sizes = [2, 8, 8], strides = [1, 1, 1]} : vector<2x8x96xbf16> to vector<2x8x8xbf16>
    "tpu.trace_start"() <{level = 10 : i32, message = "bqd,bkd->bqk"}> : () -> ()
    %cst_15 = arith.constant dense<0.000000e+00> : vector<2x8x8xf32>
    %37 = tpu.matmul %34, %35, %cst_15 {dimension_numbers = #tpu.dot_dimension_numbers<[2], [2], [1], [1], [0, 0, 0, 1, 1, 1], [0], [0]>} : vector<2x8x8xbf16>, vector<2x8x8xbf16>, vector<2x8x8xf32> -> vector<2x8x8xf32>
    "tpu.trace_stop"() : () -> ()
    %cst_16 = arith.constant 0.353553385 : f32
    %38 = vector.broadcast %cst_16 : f32 to vector<2x8x8xf32>
    %39 = arith.mulf %37, %38 : vector<2x8x8xf32>
    %cst_17 = arith.constant dense<0xFF800000> : vector<2x8xf32>
    %40 = vector.multi_reduction <maximumf>, %39, %cst_17 [2] : vector<2x8x8xf32> to vector<2x8xf32>
    %41 = vector.shape_cast %40 : vector<2x8xf32> to vector<2x8x1xf32>
    %42 = vector.broadcast %41 : vector<2x8x1xf32> to vector<2x8x8xf32>
    %43 = arith.subf %39, %42 : vector<2x8x8xf32>
    %44 = math.exp %43 : vector<2x8x8xf32>
    %cst_18 = arith.constant dense<0.000000e+00> : vector<2x8xf32>
    %45 = vector.multi_reduction <add>, %44, %cst_18 [2] : vector<2x8x8xf32> to vector<2x8xf32>
    %46 = vector.shape_cast %45 : vector<2x8xf32> to vector<2x8x1xf32>
    %47 = tpu.reciprocal %46 {approx = true} : vector<2x8x1xf32> -> vector<2x8x1xf32>
    %48 = vector.broadcast %47 : vector<2x8x1xf32> to vector<2x8x8xf32>
    %49 = arith.mulf %44, %48 : vector<2x8x8xf32>
    %50 = arith.truncf %49 : vector<2x8x8xf32> to vector<2x8x8xbf16>
    "tpu.trace_start"() <{level = 10 : i32, message = "bqk,bkd->bqd"}> : () -> ()
    %cst_19 = arith.constant dense<0.000000e+00> : vector<2x8x8xf32>
    %51 = tpu.matmul %50, %36, %cst_19 {dimension_numbers = #tpu.dot_dimension_numbers<[2], [1], [1], [2], [0, 0, 0, 1, 1, 2], [0], [0]>} : vector<2x8x8xbf16>, vector<2x8x8xbf16>, vector<2x8x8xf32> -> vector<2x8x8xf32>
    "tpu.trace_stop"() : () -> ()
    %52 = arith.truncf %51 : vector<2x8x8xf32> to vector<2x8x8xbf16>
    %c0_20 = arith.constant 0 : index
    %c0_21 = arith.constant 0 : index
    %c0_22 = arith.constant 0 : index
    %53 = vector.load %arg15[%c0_20, %c0_21, %c0_22] : memref<2x8x32xbf16, #tpu.memory_space<vmem>>, vector<2x8x8xbf16>
    tpu.vector_store %arg15[%c0_20, %c0_21, %c0_22], %52 {strides = array<i32>} : memref<2x8x32xbf16, #tpu.memory_space<vmem>>, vector<2x8x8xbf16>,
    %54 = vector.extract_strided_slice %33 {offsets = [0, 0, 8], sizes = [2, 8, 8], strides = [1, 1, 1]} : vector<2x8x96xbf16> to vector<2x8x8xbf16>
    %55 = vector.extract_strided_slice %33 {offsets = [0, 0, 40], sizes = [2, 8, 8], strides = [1, 1, 1]} : vector<2x8x96xbf16> to vector<2x8x8xbf16>
    %56 = vector.extract_strided_slice %33 {offsets = [0, 0, 72], sizes = [2, 8, 8], strides = [1, 1, 1]} : vector<2x8x96xbf16> to vector<2x8x8xbf16>
    "tpu.trace_start"() <{level = 10 : i32, message = "bqd,bkd->bqk"}> : () -> ()
    %cst_23 = arith.constant dense<0.000000e+00> : vector<2x8x8xf32>
    %57 = tpu.matmul %54, %55, %cst_23 {dimension_numbers = #tpu.dot_dimension_numbers<[2], [2], [1], [1], [0, 0, 0, 1, 1, 1], [0], [0]>} : vector<2x8x8xbf16>, vector<2x8x8xbf16>, vector<2x8x8xf32> -> vector<2x8x8xf32>
    "tpu.trace_stop"() : () -> ()
    %cst_24 = arith.constant 0.353553385 : f32
    %58 = vector.broadcast %cst_24 : f32 to vector<2x8x8xf32>
    %59 = arith.mulf %57, %58 : vector<2x8x8xf32>
    %cst_25 = arith.constant dense<0xFF800000> : vector<2x8xf32>
    %60 = vector.multi_reduction <maximumf>, %59, %cst_25 [2] : vector<2x8x8xf32> to vector<2x8xf32>
    %61 = vector.shape_cast %60 : vector<2x8xf32> to vector<2x8x1xf32>
    %62 = vector.broadcast %61 : vector<2x8x1xf32> to vector<2x8x8xf32>
    %63 = arith.subf %59, %62 : vector<2x8x8xf32>
    %64 = math.exp %63 : vector<2x8x8xf32>
    %cst_26 = arith.constant dense<0.000000e+00> : vector<2x8xf32>
    %65 = vector.multi_reduction <add>, %64, %cst_26 [2] : vector<2x8x8xf32> to vector<2x8xf32>
    %66 = vector.shape_cast %65 : vector<2x8xf32> to vector<2x8x1xf32>
    %67 = tpu.reciprocal %66 {approx = true} : vector<2x8x1xf32> -> vector<2x8x1xf32>
    %68 = vector.broadcast %67 : vector<2x8x1xf32> to vector<2x8x8xf32>
    %69 = arith.mulf %64, %68 : vector<2x8x8xf32>
    %70 = arith.truncf %69 : vector<2x8x8xf32> to vector<2x8x8xbf16>
    "tpu.trace_start"() <{level = 10 : i32, message = "bqk,bkd->bqd"}> : () -> ()
    %cst_27 = arith.constant dense<0.000000e+00> : vector<2x8x8xf32>
    %71 = tpu.matmul %70, %56, %cst_27 {dimension_numbers = #tpu.dot_dimension_numbers<[2], [1], [1], [2], [0, 0, 0, 1, 1, 2], [0], [0]>} : vector<2x8x8xbf16>, vector<2x8x8xbf16>, vector<2x8x8xf32> -> vector<2x8x8xf32>
    "tpu.trace_stop"() : () -> ()
    %72 = arith.truncf %71 : vector<2x8x8xf32> to vector<2x8x8xbf16>
    %c0_28 = arith.constant 0 : index
    %c0_29 = arith.constant 0 : index
    %c8 = arith.constant 8 : index
    %73 = vector.load %arg15[%c0_28, %c0_29, %c8] : memref<2x8x32xbf16, #tpu.memory_space<vmem>>, vector<2x8x8xbf16>
    tpu.vector_store %arg15[%c0_28, %c0_29, %c8], %72 {strides = array<i32>} : memref<2x8x32xbf16, #tpu.memory_space<vmem>>, vector<2x8x8xbf16>,
    %74 = vector.extract_strided_slice %33 {offsets = [0, 0, 16], sizes = [2, 8, 8], strides = [1, 1, 1]} : vector<2x8x96xbf16> to vector<2x8x8xbf16>
    %75 = vector.extract_strided_slice %33 {offsets = [0, 0, 48], sizes = [2, 8, 8], strides = [1, 1, 1]} : vector<2x8x96xbf16> to vector<2x8x8xbf16>
    %76 = vector.extract_strided_slice %33 {offsets = [0, 0, 80], sizes = [2, 8, 8], strides = [1, 1, 1]} : vector<2x8x96xbf16> to vector<2x8x8xbf16>
    "tpu.trace_start"() <{level = 10 : i32, message = "bqd,bkd->bqk"}> : () -> ()
    %cst_30 = arith.constant dense<0.000000e+00> : vector<2x8x8xf32>
    %77 = tpu.matmul %74, %75, %cst_30 {dimension_numbers = #tpu.dot_dimension_numbers<[2], [2], [1], [1], [0, 0, 0, 1, 1, 1], [0], [0]>} : vector<2x8x8xbf16>, vector<2x8x8xbf16>, vector<2x8x8xf32> -> vector<2x8x8xf32>
    "tpu.trace_stop"() : () -> ()
    %cst_31 = arith.constant 0.353553385 : f32
    %78 = vector.broadcast %cst_31 : f32 to vector<2x8x8xf32>
    %79 = arith.mulf %77, %78 : vector<2x8x8xf32>
    %cst_32 = arith.constant dense<0xFF800000> : vector<2x8xf32>
    %80 = vector.multi_reduction <maximumf>, %79, %cst_32 [2] : vector<2x8x8xf32> to vector<2x8xf32>
    %81 = vector.shape_cast %80 : vector<2x8xf32> to vector<2x8x1xf32>
    %82 = vector.broadcast %81 : vector<2x8x1xf32> to vector<2x8x8xf32>
    %83 = arith.subf %79, %82 : vector<2x8x8xf32>
    %84 = math.exp %83 : vector<2x8x8xf32>
    %cst_33 = arith.constant dense<0.000000e+00> : vector<2x8xf32>
    %85 = vector.multi_reduction <add>, %84, %cst_33 [2] : vector<2x8x8xf32> to vector<2x8xf32>
    %86 = vector.shape_cast %85 : vector<2x8xf32> to vector<2x8x1xf32>
    %87 = tpu.reciprocal %86 {approx = true} : vector<2x8x1xf32> -> vector<2x8x1xf32>
    %88 = vector.broadcast %87 : vector<2x8x1xf32> to vector<2x8x8xf32>
    %89 = arith.mulf %84, %88 : vector<2x8x8xf32>
    %90 = arith.truncf %89 : vector<2x8x8xf32> to vector<2x8x8xbf16>
    "tpu.trace_start"() <{level = 10 : i32, message = "bqk,bkd->bqd"}> : () -> ()
    %cst_34 = arith.constant dense<0.000000e+00> : vector<2x8x8xf32>
    %91 = tpu.matmul %90, %76, %cst_34 {dimension_numbers = #tpu.dot_dimension_numbers<[2], [1], [1], [2], [0, 0, 0, 1, 1, 2], [0], [0]>} : vector<2x8x8xbf16>, vector<2x8x8xbf16>, vector<2x8x8xf32> -> vector<2x8x8xf32>
    "tpu.trace_stop"() : () -> ()
    %92 = arith.truncf %91 : vector<2x8x8xf32> to vector<2x8x8xbf16>
    %c0_35 = arith.constant 0 : index
    %c0_36 = arith.constant 0 : index
    %c16 = arith.constant 16 : index
    %93 = vector.load %arg15[%c0_35, %c0_36, %c16] : memref<2x8x32xbf16, #tpu.memory_space<vmem>>, vector<2x8x8xbf16>
    tpu.vector_store %arg15[%c0_35, %c0_36, %c16], %92 {strides = array<i32>} : memref<2x8x32xbf16, #tpu.memory_space<vmem>>, vector<2x8x8xbf16>,
    %94 = vector.extract_strided_slice %33 {offsets = [0, 0, 24], sizes = [2, 8, 8], strides = [1, 1, 1]} : vector<2x8x96xbf16> to vector<2x8x8xbf16>
    %95 = vector.extract_strided_slice %33 {offsets = [0, 0, 56], sizes = [2, 8, 8], strides = [1, 1, 1]} : vector<2x8x96xbf16> to vector<2x8x8xbf16>
    %96 = vector.extract_strided_slice %33 {offsets = [0, 0, 88], sizes = [2, 8, 8], strides = [1, 1, 1]} : vector<2x8x96xbf16> to vector<2x8x8xbf16>
    "tpu.trace_start"() <{level = 10 : i32, message = "bqd,bkd->bqk"}> : () -> ()
    %cst_37 = arith.constant dense<0.000000e+00> : vector<2x8x8xf32>
    %97 = tpu.matmul %94, %95, %cst_37 {dimension_numbers = #tpu.dot_dimension_numbers<[2], [2], [1], [1], [0, 0, 0, 1, 1, 1], [0], [0]>} : vector<2x8x8xbf16>, vector<2x8x8xbf16>, vector<2x8x8xf32> -> vector<2x8x8xf32>
    "tpu.trace_stop"() : () -> ()
    %cst_38 = arith.constant 0.353553385 : f32
    %98 = vector.broadcast %cst_38 : f32 to vector<2x8x8xf32>
    %99 = arith.mulf %97, %98 : vector<2x8x8xf32>
    %cst_39 = arith.constant dense<0xFF800000> : vector<2x8xf32>
    %100 = vector.multi_reduction <maximumf>, %99, %cst_39 [2] : vector<2x8x8xf32> to vector<2x8xf32>
    %101 = vector.shape_cast %100 : vector<2x8xf32> to vector<2x8x1xf32>
    %102 = vector.broadcast %101 : vector<2x8x1xf32> to vector<2x8x8xf32>
    %103 = arith.subf %99, %102 : vector<2x8x8xf32>
    %104 = math.exp %103 : vector<2x8x8xf32>
    %cst_40 = arith.constant dense<0.000000e+00> : vector<2x8xf32>
    %105 = vector.multi_reduction <add>, %104, %cst_40 [2] : vector<2x8x8xf32> to vector<2x8xf32>
    %106 = vector.shape_cast %105 : vector<2x8xf32> to vector<2x8x1xf32>
    %107 = tpu.reciprocal %106 {approx = true} : vector<2x8x1xf32> -> vector<2x8x1xf32>
    %108 = vector.broadcast %107 : vector<2x8x1xf32> to vector<2x8x8xf32>
    %109 = arith.mulf %104, %108 : vector<2x8x8xf32>
    %110 = arith.truncf %109 : vector<2x8x8xf32> to vector<2x8x8xbf16>
    "tpu.trace_start"() <{level = 10 : i32, message = "bqk,bkd->bqd"}> : () -> ()
    %cst_41 = arith.constant dense<0.000000e+00> : vector<2x8x8xf32>
    %111 = tpu.matmul %110, %96, %cst_41 {dimension_numbers = #tpu.dot_dimension_numbers<[2], [1], [1], [2], [0, 0, 0, 1, 1, 2], [0], [0]>} : vector<2x8x8xbf16>, vector<2x8x8xbf16>, vector<2x8x8xf32> -> vector<2x8x8xf32>
    "tpu.trace_stop"() : () -> ()
    %112 = arith.truncf %111 : vector<2x8x8xf32> to vector<2x8x8xbf16>
    %c0_42 = arith.constant 0 : index
    %c0_43 = arith.constant 0 : index
    %c24 = arith.constant 24 : index
    %113 = vector.load %arg15[%c0_42, %c0_43, %c24] : memref<2x8x32xbf16, #tpu.memory_space<vmem>>, vector<2x8x8xbf16>
    tpu.vector_store %arg15[%c0_42, %c0_43, %c24], %112 {strides = array<i32>} : memref<2x8x32xbf16, #tpu.memory_space<vmem>>, vector<2x8x8xbf16>,
    %c0_44 = arith.constant 0 : index
    %c0_45 = arith.constant 0 : index
    %c0_46 = arith.constant 0 : index
    %114 = vector.load %arg15[%c0_44, %c0_45, %c0_46] : memref<2x8x32xbf16, #tpu.memory_space<vmem>>, vector<2x8x32xbf16>
    %115 = vector.shape_cast %114 : vector<2x8x32xbf16> to vector<16x32xbf16>
    %c0_47 = arith.constant 0 : index
    %c0_48 = arith.constant 0 : index
    %116 = vector.load %arg6[%c0_47, %c0_48] : memref<32x32xbf16, #tpu.memory_space<vmem>>, vector<32x32xbf16>
    %cst_49 = arith.constant dense<0.000000e+00> : vector<16x32xf32>
    %117 = tpu.matmul %115, %116, %cst_49 {dimension_numbers = #tpu.dot_dimension_numbers<[1], [1], [0], [0], [0, 0, 1, 0], [], []>} : vector<16x32xbf16>, vector<32x32xbf16>, vector<16x32xf32> -> vector<16x32xf32>
    %c0_50 = arith.constant 0 : index
    %c0_51 = arith.constant 0 : index
    %118 = vector.load %arg7[%c0_50, %c0_51] : memref<1x32xf32, #tpu.memory_space<vmem>>, vector<1x32xf32>
    %119 = vector.broadcast %118 : vector<1x32xf32> to vector<16x32xf32>
    %120 = arith.addf %117, %119 : vector<16x32xf32>
    %121 = arith.addf %1, %120 : vector<16x32xf32>
    %c0_52 = arith.constant 0 : index
    %c0_53 = arith.constant 0 : index
    %122 = vector.load %arg8[%c0_52, %c0_53] : memref<1x32xf32, #tpu.memory_space<vmem>>, vector<1x32xf32>
    %c0_54 = arith.constant 0 : index
    %c0_55 = arith.constant 0 : index
    %123 = vector.load %arg9[%c0_54, %c0_55] : memref<1x32xf32, #tpu.memory_space<vmem>>, vector<1x32xf32>
    %cst_56 = arith.constant dense<0.000000e+00> : vector<16xf32>
    %124 = vector.multi_reduction <add>, %121, %cst_56 [1] : vector<16x32xf32> to vector<16xf32>
    %125 = vector.shape_cast %124 : vector<16xf32> to vector<16x1xf32>
    %cst_57 = arith.constant 3.200000e+01 : f32
    %126 = vector.broadcast %cst_57 : f32 to vector<16x1xf32>
    %127 = arith.divf %125, %126 : vector<16x1xf32>
    %128 = vector.broadcast %127 : vector<16x1xf32> to vector<16x32xf32>
    %129 = arith.subf %121, %128 : vector<16x32xf32>
    %130 = arith.mulf %129, %129 : vector<16x32xf32>
    %cst_58 = arith.constant dense<0.000000e+00> : vector<16xf32>
    %131 = vector.multi_reduction <add>, %130, %cst_58 [1] : vector<16x32xf32> to vector<16xf32>
    %132 = vector.shape_cast %131 : vector<16xf32> to vector<16x1xf32>
    %cst_59 = arith.constant 3.200000e+01 : f32
    %133 = vector.broadcast %cst_59 : f32 to vector<16x1xf32>
    %134 = arith.divf %132, %133 : vector<16x1xf32>
    %cst_60 = arith.constant 9.99999974E-6 : f32
    %135 = vector.broadcast %cst_60 : f32 to vector<16x1xf32>
    %136 = arith.addf %134, %135 : vector<16x1xf32>
    %137 = math.rsqrt %136 : vector<16x1xf32>
    %138 = vector.broadcast %127 : vector<16x1xf32> to vector<16x32xf32>
    %139 = arith.subf %121, %138 : vector<16x32xf32>
    %140 = vector.broadcast %137 : vector<16x1xf32> to vector<16x32xf32>
    %141 = arith.mulf %139, %140 : vector<16x32xf32>
    %142 = vector.broadcast %122 : vector<1x32xf32> to vector<16x32xf32>
    %143 = arith.mulf %141, %142 : vector<16x32xf32>
    %144 = vector.broadcast %123 : vector<1x32xf32> to vector<16x32xf32>
    %145 = arith.addf %143, %144 : vector<16x32xf32>
    %146 = arith.truncf %145 : vector<16x32xf32> to vector<16x32xbf16>
    %c0_61 = arith.constant 0 : index
    %c0_62 = arith.constant 0 : index
    %147 = vector.load %arg10[%c0_61, %c0_62] : memref<128x32xbf16, #tpu.memory_space<vmem>>, vector<128x32xbf16>
    %cst_63 = arith.constant dense<0.000000e+00> : vector<16x128xf32>
    %148 = tpu.matmul %146, %147, %cst_63 {dimension_numbers = #tpu.dot_dimension_numbers<[1], [1], [0], [0], [0, 0, 1, 0], [], []>} : vector<16x32xbf16>, vector<128x32xbf16>, vector<16x128xf32> -> vector<16x128xf32>
    %c0_64 = arith.constant 0 : index
    %c0_65 = arith.constant 0 : index
    %149 = vector.load %arg11[%c0_64, %c0_65] : memref<1x128xf32, #tpu.memory_space<vmem>>, vector<1x128xf32>
    %150 = vector.broadcast %149 : vector<1x128xf32> to vector<16x128xf32>
    %151 = arith.addf %148, %150 : vector<16x128xf32>
    %cst_66 = arith.constant 1.702000e+00 : f32
    %152 = vector.broadcast %cst_66 : f32 to vector<16x128xf32>
    %153 = arith.mulf %152, %151 : vector<16x128xf32>
    %154 = arith.negf %153 : vector<16x128xf32>
    %155 = math.exp %154 : vector<16x128xf32>
    %cst_67 = arith.constant 1.000000e+00 : f32
    %156 = vector.broadcast %cst_67 : f32 to vector<16x128xf32>
    %157 = arith.addf %156, %155 : vector<16x128xf32>
    %158 = arith.divf %156, %157 : vector<16x128xf32>
    %159 = arith.mulf %151, %158 : vector<16x128xf32>
    %160 = arith.truncf %159 : vector<16x128xf32> to vector<16x128xbf16>
    %c0_68 = arith.constant 0 : index
    %c0_69 = arith.constant 0 : index
    %161 = vector.load %arg12[%c0_68, %c0_69] : memref<32x128xbf16, #tpu.memory_space<vmem>>, vector<32x128xbf16>
    %cst_70 = arith.constant dense<0.000000e+00> : vector<16x32xf32>
    %162 = tpu.matmul %160, %161, %cst_70 {dimension_numbers = #tpu.dot_dimension_numbers<[1], [1], [0], [0], [0, 0, 1, 0], [], []>} : vector<16x128xbf16>, vector<32x128xbf16>, vector<16x32xf32> -> vector<16x32xf32>
    %c0_71 = arith.constant 0 : index
    %c0_72 = arith.constant 0 : index
    %163 = vector.load %arg13[%c0_71, %c0_72] : memref<1x32xf32, #tpu.memory_space<vmem>>, vector<1x32xf32>
    %164 = vector.broadcast %163 : vector<1x32xf32> to vector<16x32xf32>
    %165 = arith.addf %162, %164 : vector<16x32xf32>
    %166 = arith.addf %121, %165 : vector<16x32xf32>
    %167 = vector.shape_cast %166 : vector<16x32xf32> to vector<2x8x32xf32>
    %c0_73 = arith.constant 0 : index
    %c0_74 = arith.constant 0 : index
    %c0_75 = arith.constant 0 : index
    %168 = vector.load %arg14[%c0_73, %c0_74, %c0_75] : memref<2x8x32xf32, #tpu.memory_space<vmem>>, vector<2x8x32xf32>
    tpu.vector_store %arg14[%c0_73, %c0_74, %c0_75], %167 {strides = array<i32>} : memref<2x8x32xf32, #tpu.memory_space<vmem>>, vector<2x8x32xf32>,
    return
  }
  func.func @transform_0(%arg0: i32) -> (i32, i32, i32) {
    %c0_i32 = arith.constant 0 : i32
    %c0_i32_0 = arith.constant 0 : i32
    %c0_i32_1 = arith.constant 0 : i32
    return %arg0, %c0_i32, %c0_i32_0 : i32, i32, i32
  }
  func.func @transform_1(%arg0: i32) -> (i32, i32) {
    %c0_i32 = arith.constant 0 : i32
    %c0_i32_0 = arith.constant 0 : i32
    %c0_i32_1 = arith.constant 0 : i32
    return %c0_i32, %c0_i32_0 : i32, i32
  }
  func.func @transform_2(%arg0: i32) -> (i32, i32) {
    %c0_i32 = arith.constant 0 : i32
    %c0_i32_0 = arith.constant 0 : i32
    %c0_i32_1 = arith.constant 0 : i32
    return %c0_i32, %c0_i32_0 : i32, i32
  }
  func.func @transform_3(%arg0: i32) -> (i32, i32) {
    %c0_i32 = arith.constant 0 : i32
    %c0_i32_0 = arith.constant 0 : i32
    %c0_i32_1 = arith.constant 0 : i32
    return %c0_i32, %c0_i32_0 : i32, i32
  }
  func.func @transform_4(%arg0: i32) -> (i32, i32) {
    %c0_i32 = arith.constant 0 : i32
    %c0_i32_0 = arith.constant 0 : i32
    %c0_i32_1 = arith.constant 0 : i32
    return %c0_i32, %c0_i32_0 : i32, i32
  }
  func.func @transform_5(%arg0: i32) -> (i32, i32) {
    %c0_i32 = arith.constant 0 : i32
    %c0_i32_0 = arith.constant 0 : i32
    %c0_i32_1 = arith.constant 0 : i32
    return %c0_i32, %c0_i32_0 : i32, i32
  }
  func.func @transform_6(%arg0: i32) -> (i32, i32) {
    %c0_i32 = arith.constant 0 : i32
    %c0_i32_0 = arith.constant 0 : i32
    %c0_i32_1 = arith.constant 0 : i32
    return %c0_i32, %c0_i32_0 : i32, i32
  }
  func.func @transform_7(%arg0: i32) -> (i32, i32) {
    %c0_i32 = arith.constant 0 : i32
    %c0_i32_0 = arith.constant 0 : i32
    %c0_i32_1 = arith.constant 0 : i32
    return %c0_i32, %c0_i32_0 : i32, i32
  }
  func.func @transform_8(%arg0: i32) -> (i32, i32) {
    %c0_i32 = arith.constant 0 : i32
    %c0_i32_0 = arith.constant 0 : i32
    %c0_i32_1 = arith.constant 0 : i32
    return %c0_i32, %c0_i32_0 : i32, i32
  }
  func.func @transform_9(%arg0: i32) -> (i32, i32) {
    %c0_i32 = arith.constant 0 : i32
    %c0_i32_0 = arith.constant 0 : i32
    %c0_i32_1 = arith.constant 0 : i32
    return %c0_i32, %c0_i32_0 : i32, i32
  }
  func.func @transform_10(%arg0: i32) -> (i32, i32) {
    %c0_i32 = arith.constant 0 : i32
    %c0_i32_0 = arith.constant 0 : i32
    %c0_i32_1 = arith.constant 0 : i32
    return %c0_i32, %c0_i32_0 : i32, i32
  }
  func.func @transform_11(%arg0: i32) -> (i32, i32) {
    %c0_i32 = arith.constant 0 : i32
    %c0_i32_0 = arith.constant 0 : i32
    %c0_i32_1 = arith.constant 0 : i32
    return %c0_i32, %c0_i32_0 : i32, i32
  }
  func.func @transform_12(%arg0: i32) -> (i32, i32) {
    %c0_i32 = arith.constant 0 : i32
    %c0_i32_0 = arith.constant 0 : i32
    %c0_i32_1 = arith.constant 0 : i32
    return %c0_i32, %c0_i32_0 : i32, i32
  }
  func.func @transform_13(%arg0: i32) -> (i32, i32, i32) {
    %c0_i32 = arith.constant 0 : i32
    %c0_i32_0 = arith.constant 0 : i32
    %c0_i32_1 = arith.constant 0 : i32
    return %arg0, %c0_i32, %c0_i32_0 : i32, i32, i32
  }
}

module attributes {stable_mosaic.version = 11 : i64} {
  func.func @_block_kernel(%arg0: i32, %arg1: memref<2x8x32xf32, #tpu.memory_space<vmem>>, %arg2: memref<1x32xf32, #tpu.memory_space<vmem>>, %arg3: memref<1x32xf32, #tpu.memory_space<vmem>>, %arg4: memref<96x32xbf16, #tpu.memory_space<vmem>>, %arg5: memref<1x96xf32, #tpu.memory_space<vmem>>, %arg6: memref<32x32xbf16, #tpu.memory_space<vmem>>, %arg7: memref<1x32xf32, #tpu.memory_space<vmem>>, %arg8: memref<1x32xf32, #tpu.memory_space<vmem>>, %arg9: memref<1x32xf32, #tpu.memory_space<vmem>>, %arg10: memref<128x32xbf16, #tpu.memory_space<vmem>>, %arg11: memref<1x128xf32, #tpu.memory_space<vmem>>, %arg12: memref<32x128xbf16, #tpu.memory_space<vmem>>, %arg13: memref<1x32xf32, #tpu.memory_space<vmem>>, %arg14: memref<2x8x32xf32, #tpu.memory_space<vmem>>, %arg15: memref<2x8x32xbf16, #tpu.memory_space<vmem>>) attributes {dimension_semantics = [#tpu.dimension_semantics<parallel>], iteration_bounds = array<i64: 1>, scalar_prefetch = 0 : i64, scratch_operands = 1 : i64, tpu.core_type = #tpu.core_type<tc>, window_params = [{transform_indices = @transform_0, window_bounds = array<i64: 2, 8, 32>}, {pipeline_mode = #tpu.pipeline_mode<synchronous>, transform_indices = @transform_1, window_bounds = array<i64: 1, 32>}, {pipeline_mode = #tpu.pipeline_mode<synchronous>, transform_indices = @transform_2, window_bounds = array<i64: 1, 32>}, {pipeline_mode = #tpu.pipeline_mode<synchronous>, transform_indices = @transform_3, window_bounds = array<i64: 96, 32>}, {pipeline_mode = #tpu.pipeline_mode<synchronous>, transform_indices = @transform_4, window_bounds = array<i64: 1, 96>}, {pipeline_mode = #tpu.pipeline_mode<synchronous>, transform_indices = @transform_5, window_bounds = array<i64: 32, 32>}, {pipeline_mode = #tpu.pipeline_mode<synchronous>, transform_indices = @transform_6, window_bounds = array<i64: 1, 32>}, {pipeline_mode = #tpu.pipeline_mode<synchronous>, transform_indices = @transform_7, window_bounds = array<i64: 1, 32>}, {pipeline_mode = #tpu.pipeline_mode<synchronous>, transform_indices = @transform_8, window_bounds = array<i64: 1, 32>}, {pipeline_mode = #tpu.pipeline_mode<synchronous>, transform_indices = @transform_9, window_bounds = array<i64: 128, 32>}, {pipeline_mode = #tpu.pipeline_mode<synchronous>, transform_indices = @transform_10, window_bounds = array<i64: 1, 128>}, {pipeline_mode = #tpu.pipeline_mode<synchronous>, transform_indices = @transform_11, window_bounds = array<i64: 32, 128>}, {pipeline_mode = #tpu.pipeline_mode<synchronous>, transform_indices = @transform_12, window_bounds = array<i64: 1, 32>}, {transform_indices = @transform_13, window_bounds = array<i64: 2, 8, 32>}]} {
    %c0 = arith.constant 0 : index
    %c0_0 = arith.constant 0 : index
    %c0_1 = arith.constant 0 : index
    %0 = vector.load %arg1[%c0, %c0_0, %c0_1] : memref<2x8x32xf32, #tpu.memory_space<vmem>>, vector<2x8x32xf32>
    %1 = vector.shape_cast %0 : vector<2x8x32xf32> to vector<16x32xf32>
    %c0_2 = arith.constant 0 : index
    %c0_3 = arith.constant 0 : index
    %2 = vector.load %arg2[%c0_2, %c0_3] : memref<1x32xf32, #tpu.memory_space<vmem>>, vector<1x32xf32>
    %c0_4 = arith.constant 0 : index
    %c0_5 = arith.constant 0 : index
    %3 = vector.load %arg3[%c0_4, %c0_5] : memref<1x32xf32, #tpu.memory_space<vmem>>, vector<1x32xf32>
    %cst = arith.constant dense<0.000000e+00> : vector<16xf32>
    %4 = vector.multi_reduction <add>, %1, %cst [1] : vector<16x32xf32> to vector<16xf32>
    %5 = vector.shape_cast %4 : vector<16xf32> to vector<16x1xf32>
    %cst_6 = arith.constant 3.200000e+01 : f32
    %6 = vector.broadcast %cst_6 : f32 to vector<16x1xf32>
    %7 = arith.divf %5, %6 : vector<16x1xf32>
    %8 = vector.broadcast %7 : vector<16x1xf32> to vector<16x32xf32>
    %9 = arith.subf %1, %8 : vector<16x32xf32>
    %10 = arith.mulf %9, %9 : vector<16x32xf32>
    %cst_7 = arith.constant dense<0.000000e+00> : vector<16xf32>
    %11 = vector.multi_reduction <add>, %10, %cst_7 [1] : vector<16x32xf32> to vector<16xf32>
    %12 = vector.shape_cast %11 : vector<16xf32> to vector<16x1xf32>
    %cst_8 = arith.constant 3.200000e+01 : f32
    %13 = vector.broadcast %cst_8 : f32 to vector<16x1xf32>
    %14 = arith.divf %12, %13 : vector<16x1xf32>
    %cst_9 = arith.constant 9.99999974E-6 : f32
    %15 = vector.broadcast %cst_9 : f32 to vector<16x1xf32>
    %16 = arith.addf %14, %15 : vector<16x1xf32>
    %17 = math.rsqrt %16 : vector<16x1xf32>
    %18 = vector.broadcast %7 : vector<16x1xf32> to vector<16x32xf32>
    %19 = arith.subf %1, %18 : vector<16x32xf32>
    %20 = vector.broadcast %17 : vector<16x1xf32> to vector<16x32xf32>
    %21 = arith.mulf %19, %20 : vector<16x32xf32>
    %22 = vector.broadcast %2 : vector<1x32xf32> to vector<16x32xf32>
    %23 = arith.mulf %21, %22 : vector<16x32xf32>
    %24 = vector.broadcast %3 : vector<1x32xf32> to vector<16x32xf32>
    %25 = arith.addf %23, %24 : vector<16x32xf32>
    %26 = arith.truncf %25 : vector<16x32xf32> to vector<16x32xbf16>
    %c0_10 = arith.constant 0 : index
    %c0_11 = arith.constant 0 : index
    %27 = vector.load %arg4[%c0_10, %c0_11] : memref<96x32xbf16, #tpu.memory_space<vmem>>, vector<96x32xbf16>
    %cst_12 = arith.constant dense<0.000000e+00> : vector<16x96xf32>
    %28 = tpu.matmul %26, %27, %cst_12 {dimension_numbers = #tpu.dot_dimension_numbers<[1], [1], [0], [0], [0, 0, 1, 0], [], []>} : vector<16x32xbf16>, vector<96x32xbf16>, vector<16x96xf32> -> vector<16x96xf32>
    %c0_13 = arith.constant 0 : index
    %c0_14 = arith.constant 0 : index
    %29 = vector.load %arg5[%c0_13, %c0_14] : memref<1x96xf32, #tpu.memory_space<vmem>>, vector<1x96xf32>
    %30 = vector.broadcast %29 : vector<1x96xf32> to vector<16x96xf32>
    %31 = arith.addf %28, %30 : vector<16x96xf32>
    %32 = arith.truncf %31 : vector<16x96xf32> to vector<16x96xbf16>
    %33 = vector.shape_cast %32 : vector<16x96xbf16> to vector<2x8x96xbf16>
    %34 = vector.extract_strided_slice %33 {offsets = [0, 0, 0], sizes = [2, 8, 8], strides = [1, 1, 1]} : vector<2x8x96xbf16> to vector<2x8x8xbf16>
    %35 = vector.extract_strided_slice %33 {offsets = [0, 0, 32], sizes = [2, 8, 8], strides = [1, 1, 1]} : vector<2x8x96xbf16> to vector<2x8x8xbf16>
    %36 = vector.extract_strided_slice %33 {offsets = [0, 0, 64], sizes = [2, 8, 8], strides = [1, 1, 1]} : vector<2x8x96xbf16> to vector<2x8x8xbf16>
    "tpu.trace_start"() <{level = 10 : i32, message = "bqd,bkd->bqk"}> : () -> ()
    %cst_15 = arith.constant dense<0.000000e+00> : vector<2x8x8xf32>
    %37 = tpu.matmul %34, %35, %cst_15 {dimension_numbers = #tpu.dot_dimension_numbers<[2], [2], [1], [1], [0, 0, 0, 1, 1, 1], [0], [0]>} : vector<2x8x8xbf16>, vector<2x8x8xbf16>, vector<2x8x8xf32> -> vector<2x8x8xf32>
    "tpu.trace_stop"() : () -> ()
    %cst_16 = arith.constant 0.353553385 : f32
    %38 = vector.broadcast %cst_16 : f32 to vector<2x8x8xf32>
    %39 = arith.mulf %37, %38 : vector<2x8x8xf32>
    %cst_17 = arith.constant dense<0xFF800000> : vector<2x8xf32>
    %40 = vector.multi_reduction <maximumf>, %39, %cst_17 [2] : vector<2x8x8xf32> to vector<2x8xf32>
    %41 = vector.shape_cast %40 : vector<2x8xf32> to vector<2x8x1xf32>
    %42 = vector.broadcast %41 : vector<2x8x1xf32> to vector<2x8x8xf32>
    %43 = arith.subf %39, %42 : vector<2x8x8xf32>
    %44 = math.exp %43 : vector<2x8x8xf32>
    %cst_18 = arith.constant dense<0.000000e+00> : vector<2x8xf32>
    %45 = vector.multi_reduction <add>, %44, %cst_18 [2] : vector<2x8x8xf32> to vector<2x8xf32>
    %46 = vector.shape_cast %45 : vector<2x8xf32> to vector<2x8x1xf32>
    %47 = tpu.reciprocal %46 {approx = true} : vector<2x8x1xf32> -> vector<2x8x1xf32>
    %48 = vector.broadcast %47 : vector<2x8x1xf32> to vector<2x8x8xf32>
    %49 = arith.mulf %44, %48 : vector<2x8x8xf32>
    %50 = arith.truncf %49 : vector<2x8x8xf32> to vector<2x8x8xbf16>
    "tpu.trace_start"() <{level = 10 : i32, message = "bqk,bkd->bqd"}> : () -> ()
    %cst_19 = arith.constant dense<0.000000e+00> : vector<2x8x8xf32>
    %51 = tpu.matmul %50, %36, %cst_19 {dimension_numbers = #tpu.dot_dimension_numbers<[2], [1], [1], [2], [0, 0, 0, 1, 1, 2], [0], [0]>} : vector<2x8x8xbf16>, vector<2x8x8xbf16>, vector<2x8x8xf32> -> vector<2x8x8xf32>
    "tpu.trace_stop"() : () -> ()
    %52 = arith.truncf %51 : vector<2x8x8xf32> to vector<2x8x8xbf16>
    %c0_20 = arith.constant 0 : index
    %c0_21 = arith.constant 0 : index
    %c0_22 = arith.constant 0 : index
    %53 = vector.load %arg15[%c0_20, %c0_21, %c0_22] : memref<2x8x32xbf16, #tpu.memory_space<vmem>>, vector<2x8x8xbf16>
    tpu.vector_store %arg15[%c0_20, %c0_21, %c0_22], %52 {strides = array<i32>} : memref<2x8x32xbf16, #tpu.memory_space<vmem>>, vector<2x8x8xbf16>,
    %54 = vector.extract_strided_slice %33 {offsets = [0, 0, 8], sizes = [2, 8, 8], strides = [1, 1, 1]} : vector<2x8x96xbf16> to vector<2x8x8xbf16>
    %55 = vector.extract_strided_slice %33 {offsets = [0, 0, 40], sizes = [2, 8, 8], strides = [1, 1, 1]} : vector<2x8x96xbf16> to vector<2x8x8xbf16>
    %56 = vector.extract_strided_slice %33 {offsets = [0, 0, 72], sizes = [2, 8, 8], strides = [1, 1, 1]} : vector<2x8x96xbf16> to vector<2x8x8xbf16>
    "tpu.trace_start"() <{level = 10 : i32, message = "bqd,bkd->bqk"}> : () -> ()
    %cst_23 = arith.constant dense<0.000000e+00> : vector<2x8x8xf32>
    %57 = tpu.matmul %54, %55, %cst_23 {dimension_numbers = #tpu.dot_dimension_numbers<[2], [2], [1], [1], [0, 0, 0, 1, 1, 1], [0], [0]>} : vector<2x8x8xbf16>, vector<2x8x8xbf16>, vector<2x8x8xf32> -> vector<2x8x8xf32>
    "tpu.trace_stop"() : () -> ()
    %cst_24 = arith.constant 0.353553385 : f32
    %58 = vector.broadcast %cst_24 : f32 to vector<2x8x8xf32>
    %59 = arith.mulf %57, %58 : vector<2x8x8xf32>
    %cst_25 = arith.constant dense<0xFF800000> : vector<2x8xf32>
    %60 = vector.multi_reduction <maximumf>, %59, %cst_25 [2] : vector<2x8x8xf32> to vector<2x8xf32>
    %61 = vector.shape_cast %60 : vector<2x8xf32> to vector<2x8x1xf32>
    %62 = vector.broadcast %61 : vector<2x8x1xf32> to vector<2x8x8xf32>
    %63 = arith.subf %59, %62 : vector<2x8x8xf32>
    %64 = math.exp %63 : vector<2x8x8xf32>
    %cst_26 = arith.constant dense<0.000000e+00> : vector<2x8xf32>
    %65 = vector.multi_reduction <add>, %64, %cst_26 [2] : vector<2x8x8xf32> to vector<2x8xf32>
    %66 = vector.shape_cast %65 : vector<2x8xf32> to vector<2x8x1xf32>
    %67 = tpu.reciprocal %66 {approx = true} : vector<2x8x1xf32> -> vector<2x8x1xf32>
    %68 = vector.broadcast %67 : vector<2x8x1xf32> to vector<2x8x8xf32>
    %69 = arith.mulf %64, %68 : vector<2x8x8xf32>
    %70 = arith.truncf %69 : vector<2x8x8xf32> to vector<2x8x8xbf16>
    "tpu.trace_start"() <{level = 10 : i32, message = "bqk,bkd->bqd"}> : () -> ()
    %cst_27 = arith.constant dense<0.000000e+00> : vector<2x8x8xf32>
    %71 = tpu.matmul %70, %56, %cst_27 {dimension_numbers = #tpu.dot_dimension_numbers<[2], [1], [1], [2], [0, 0, 0, 1, 1, 2], [0], [0]>} : vector<2x8x8xbf16>, vector<2x8x8xbf16>, vector<2x8x8xf32> -> vector<2x8x8xf32>
    "tpu.trace_stop"() : () -> ()
    %72 = arith.truncf %71 : vector<2x8x8xf32> to vector<2x8x8xbf16>
    %c0_28 = arith.constant 0 : index
    %c0_29 = arith.constant 0 : index
    %c8 = arith.constant 8 : index
    %73 = vector.load %arg15[%c0_28, %c0_29, %c8] : memref<2x8x32xbf16, #tpu.memory_space<vmem>>, vector<2x8x8xbf16>
    tpu.vector_store %arg15[%c0_28, %c0_29, %c8], %72 {strides = array<i32>} : memref<2x8x32xbf16, #tpu.memory_space<vmem>>, vector<2x8x8xbf16>,
    %74 = vector.extract_strided_slice %33 {offsets = [0, 0, 16], sizes = [2, 8, 8], strides = [1, 1, 1]} : vector<2x8x96xbf16> to vector<2x8x8xbf16>
    %75 = vector.extract_strided_slice %33 {offsets = [0, 0, 48], sizes = [2, 8, 8], strides = [1, 1, 1]} : vector<2x8x96xbf16> to vector<2x8x8xbf16>
    %76 = vector.extract_strided_slice %33 {offsets = [0, 0, 80], sizes = [2, 8, 8], strides = [1, 1, 1]} : vector<2x8x96xbf16> to vector<2x8x8xbf16>
    "tpu.trace_start"() <{level = 10 : i32, message = "bqd,bkd->bqk"}> : () -> ()
    %cst_30 = arith.constant dense<0.000000e+00> : vector<2x8x8xf32>
    %77 = tpu.matmul %74, %75, %cst_30 {dimension_numbers = #tpu.dot_dimension_numbers<[2], [2], [1], [1], [0, 0, 0, 1, 1, 1], [0], [0]>} : vector<2x8x8xbf16>, vector<2x8x8xbf16>, vector<2x8x8xf32> -> vector<2x8x8xf32>
    "tpu.trace_stop"() : () -> ()
    %cst_31 = arith.constant 0.353553385 : f32
    %78 = vector.broadcast %cst_31 : f32 to vector<2x8x8xf32>
    %79 = arith.mulf %77, %78 : vector<2x8x8xf32>
    %cst_32 = arith.constant dense<0xFF800000> : vector<2x8xf32>
    %80 = vector.multi_reduction <maximumf>, %79, %cst_32 [2] : vector<2x8x8xf32> to vector<2x8xf32>
    %81 = vector.shape_cast %80 : vector<2x8xf32> to vector<2x8x1xf32>
    %82 = vector.broadcast %81 : vector<2x8x1xf32> to vector<2x8x8xf32>
    %83 = arith.subf %79, %82 : vector<2x8x8xf32>
    %84 = math.exp %83 : vector<2x8x8xf32>
    %cst_33 = arith.constant dense<0.000000e+00> : vector<2x8xf32>
    %85 = vector.multi_reduction <add>, %84, %cst_33 [2] : vector<2x8x8xf32> to vector<2x8xf32>
    %86 = vector.shape_cast %85 : vector<2x8xf32> to vector<2x8x1xf32>
    %87 = tpu.reciprocal %86 {approx = true} : vector<2x8x1xf32> -> vector<2x8x1xf32>
    %88 = vector.broadcast %87 : vector<2x8x1xf32> to vector<2x8x8xf32>
    %89 = arith.mulf %84, %88 : vector<2x8x8xf32>
    %90 = arith.truncf %89 : vector<2x8x8xf32> to vector<2x8x8xbf16>
    "tpu.trace_start"() <{level = 10 : i32, message = "bqk,bkd->bqd"}> : () -> ()
    %cst_34 = arith.constant dense<0.000000e+00> : vector<2x8x8xf32>
    %91 = tpu.matmul %90, %76, %cst_34 {dimension_numbers = #tpu.dot_dimension_numbers<[2], [1], [1], [2], [0, 0, 0, 1, 1, 2], [0], [0]>} : vector<2x8x8xbf16>, vector<2x8x8xbf16>, vector<2x8x8xf32> -> vector<2x8x8xf32>
    "tpu.trace_stop"() : () -> ()
    %92 = arith.truncf %91 : vector<2x8x8xf32> to vector<2x8x8xbf16>
    %c0_35 = arith.constant 0 : index
    %c0_36 = arith.constant 0 : index
    %c16 = arith.constant 16 : index
    %93 = vector.load %arg15[%c0_35, %c0_36, %c16] : memref<2x8x32xbf16, #tpu.memory_space<vmem>>, vector<2x8x8xbf16>
    tpu.vector_store %arg15[%c0_35, %c0_36, %c16], %92 {strides = array<i32>} : memref<2x8x32xbf16, #tpu.memory_space<vmem>>, vector<2x8x8xbf16>,
    %94 = vector.extract_strided_slice %33 {offsets = [0, 0, 24], sizes = [2, 8, 8], strides = [1, 1, 1]} : vector<2x8x96xbf16> to vector<2x8x8xbf16>
    %95 = vector.extract_strided_slice %33 {offsets = [0, 0, 56], sizes = [2, 8, 8], strides = [1, 1, 1]} : vector<2x8x96xbf16> to vector<2x8x8xbf16>
    %96 = vector.extract_strided_slice %33 {offsets = [0, 0, 88], sizes = [2, 8, 8], strides = [1, 1, 1]} : vector<2x8x96xbf16> to vector<2x8x8xbf16>
    "tpu.trace_start"() <{level = 10 : i32, message = "bqd,bkd->bqk"}> : () -> ()
    %cst_37 = arith.constant dense<0.000000e+00> : vector<2x8x8xf32>
    %97 = tpu.matmul %94, %95, %cst_37 {dimension_numbers = #tpu.dot_dimension_numbers<[2], [2], [1], [1], [0, 0, 0, 1, 1, 1], [0], [0]>} : vector<2x8x8xbf16>, vector<2x8x8xbf16>, vector<2x8x8xf32> -> vector<2x8x8xf32>
    "tpu.trace_stop"() : () -> ()
    %cst_38 = arith.constant 0.353553385 : f32
    %98 = vector.broadcast %cst_38 : f32 to vector<2x8x8xf32>
    %99 = arith.mulf %97, %98 : vector<2x8x8xf32>
    %cst_39 = arith.constant dense<0xFF800000> : vector<2x8xf32>
    %100 = vector.multi_reduction <maximumf>, %99, %cst_39 [2] : vector<2x8x8xf32> to vector<2x8xf32>
    %101 = vector.shape_cast %100 : vector<2x8xf32> to vector<2x8x1xf32>
    %102 = vector.broadcast %101 : vector<2x8x1xf32> to vector<2x8x8xf32>
    %103 = arith.subf %99, %102 : vector<2x8x8xf32>
    %104 = math.exp %103 : vector<2x8x8xf32>
    %cst_40 = arith.constant dense<0.000000e+00> : vector<2x8xf32>
    %105 = vector.multi_reduction <add>, %104, %cst_40 [2] : vector<2x8x8xf32> to vector<2x8xf32>
    %106 = vector.shape_cast %105 : vector<2x8xf32> to vector<2x8x1xf32>
    %107 = tpu.reciprocal %106 {approx = true} : vector<2x8x1xf32> -> vector<2x8x1xf32>
    %108 = vector.broadcast %107 : vector<2x8x1xf32> to vector<2x8x8xf32>
    %109 = arith.mulf %104, %108 : vector<2x8x8xf32>
    %110 = arith.truncf %109 : vector<2x8x8xf32> to vector<2x8x8xbf16>
    "tpu.trace_start"() <{level = 10 : i32, message = "bqk,bkd->bqd"}> : () -> ()
    %cst_41 = arith.constant dense<0.000000e+00> : vector<2x8x8xf32>
    %111 = tpu.matmul %110, %96, %cst_41 {dimension_numbers = #tpu.dot_dimension_numbers<[2], [1], [1], [2], [0, 0, 0, 1, 1, 2], [0], [0]>} : vector<2x8x8xbf16>, vector<2x8x8xbf16>, vector<2x8x8xf32> -> vector<2x8x8xf32>
    "tpu.trace_stop"() : () -> ()
    %112 = arith.truncf %111 : vector<2x8x8xf32> to vector<2x8x8xbf16>
    %c0_42 = arith.constant 0 : index
    %c0_43 = arith.constant 0 : index
    %c24 = arith.constant 24 : index
    %113 = vector.load %arg15[%c0_42, %c0_43, %c24] : memref<2x8x32xbf16, #tpu.memory_space<vmem>>, vector<2x8x8xbf16>
    tpu.vector_store %arg15[%c0_42, %c0_43, %c24], %112 {strides = array<i32>} : memref<2x8x32xbf16, #tpu.memory_space<vmem>>, vector<2x8x8xbf16>,
    %c0_44 = arith.constant 0 : index
    %c0_45 = arith.constant 0 : index
    %c0_46 = arith.constant 0 : index
    %114 = vector.load %arg15[%c0_44, %c0_45, %c0_46] : memref<2x8x32xbf16, #tpu.memory_space<vmem>>, vector<2x8x32xbf16>
    %115 = vector.shape_cast %114 : vector<2x8x32xbf16> to vector<16x32xbf16>
    %c0_47 = arith.constant 0 : index
    %c0_48 = arith.constant 0 : index
    %116 = vector.load %arg6[%c0_47, %c0_48] : memref<32x32xbf16, #tpu.memory_space<vmem>>, vector<32x32xbf16>
    %cst_49 = arith.constant dense<0.000000e+00> : vector<16x32xf32>
    %117 = tpu.matmul %115, %116, %cst_49 {dimension_numbers = #tpu.dot_dimension_numbers<[1], [1], [0], [0], [0, 0, 1, 0], [], []>} : vector<16x32xbf16>, vector<32x32xbf16>, vector<16x32xf32> -> vector<16x32xf32>
    %c0_50 = arith.constant 0 : index
    %c0_51 = arith.constant 0 : index
    %118 = vector.load %arg7[%c0_50, %c0_51] : memref<1x32xf32, #tpu.memory_space<vmem>>, vector<1x32xf32>
    %119 = vector.broadcast %118 : vector<1x32xf32> to vector<16x32xf32>
    %120 = arith.addf %117, %119 : vector<16x32xf32>
    %121 = arith.addf %1, %120 : vector<16x32xf32>
    %c0_52 = arith.constant 0 : index
    %c0_53 = arith.constant 0 : index
    %122 = vector.load %arg8[%c0_52, %c0_53] : memref<1x32xf32, #tpu.memory_space<vmem>>, vector<1x32xf32>
    %c0_54 = arith.constant 0 : index
    %c0_55 = arith.constant 0 : index
    %123 = vector.load %arg9[%c0_54, %c0_55] : memref<1x32xf32, #tpu.memory_space<vmem>>, vector<1x32xf32>
    %cst_56 = arith.constant dense<0.000000e+00> : vector<16xf32>
    %124 = vector.multi_reduction <add>, %121, %cst_56 [1] : vector<16x32xf32> to vector<16xf32>
    %125 = vector.shape_cast %124 : vector<16xf32> to vector<16x1xf32>
    %cst_57 = arith.constant 3.200000e+01 : f32
    %126 = vector.broadcast %cst_57 : f32 to vector<16x1xf32>
    %127 = arith.divf %125, %126 : vector<16x1xf32>
    %128 = vector.broadcast %127 : vector<16x1xf32> to vector<16x32xf32>
    %129 = arith.subf %121, %128 : vector<16x32xf32>
    %130 = arith.mulf %129, %129 : vector<16x32xf32>
    %cst_58 = arith.constant dense<0.000000e+00> : vector<16xf32>
    %131 = vector.multi_reduction <add>, %130, %cst_58 [1] : vector<16x32xf32> to vector<16xf32>
    %132 = vector.shape_cast %131 : vector<16xf32> to vector<16x1xf32>
    %cst_59 = arith.constant 3.200000e+01 : f32
    %133 = vector.broadcast %cst_59 : f32 to vector<16x1xf32>
    %134 = arith.divf %132, %133 : vector<16x1xf32>
    %cst_60 = arith.constant 9.99999974E-6 : f32
    %135 = vector.broadcast %cst_60 : f32 to vector<16x1xf32>
    %136 = arith.addf %134, %135 : vector<16x1xf32>
    %137 = math.rsqrt %136 : vector<16x1xf32>
    %138 = vector.broadcast %127 : vector<16x1xf32> to vector<16x32xf32>
    %139 = arith.subf %121, %138 : vector<16x32xf32>
    %140 = vector.broadcast %137 : vector<16x1xf32> to vector<16x32xf32>
    %141 = arith.mulf %139, %140 : vector<16x32xf32>
    %142 = vector.broadcast %122 : vector<1x32xf32> to vector<16x32xf32>
    %143 = arith.mulf %141, %142 : vector<16x32xf32>
    %144 = vector.broadcast %123 : vector<1x32xf32> to vector<16x32xf32>
    %145 = arith.addf %143, %144 : vector<16x32xf32>
    %146 = arith.truncf %145 : vector<16x32xf32> to vector<16x32xbf16>
    %c0_61 = arith.constant 0 : index
    %c0_62 = arith.constant 0 : index
    %147 = vector.load %arg10[%c0_61, %c0_62] : memref<128x32xbf16, #tpu.memory_space<vmem>>, vector<128x32xbf16>
    %cst_63 = arith.constant dense<0.000000e+00> : vector<16x128xf32>
    %148 = tpu.matmul %146, %147, %cst_63 {dimension_numbers = #tpu.dot_dimension_numbers<[1], [1], [0], [0], [0, 0, 1, 0], [], []>} : vector<16x32xbf16>, vector<128x32xbf16>, vector<16x128xf32> -> vector<16x128xf32>
    %c0_64 = arith.constant 0 : index
    %c0_65 = arith.constant 0 : index
    %149 = vector.load %arg11[%c0_64, %c0_65] : memref<1x128xf32, #tpu.memory_space<vmem>>, vector<1x128xf32>
    %150 = vector.broadcast %149 : vector<1x128xf32> to vector<16x128xf32>
    %151 = arith.addf %148, %150 : vector<16x128xf32>
    %cst_66 = arith.constant 1.702000e+00 : f32
    %152 = vector.broadcast %cst_66 : f32 to vector<16x128xf32>
    %153 = arith.mulf %152, %151 : vector<16x128xf32>
    %154 = arith.negf %153 : vector<16x128xf32>
    %155 = math.exp %154 : vector<16x128xf32>
    %cst_67 = arith.constant 1.000000e+00 : f32
    %156 = vector.broadcast %cst_67 : f32 to vector<16x128xf32>
    %157 = arith.addf %156, %155 : vector<16x128xf32>
    %158 = arith.divf %156, %157 : vector<16x128xf32>
    %159 = arith.mulf %151, %158 : vector<16x128xf32>
    %160 = arith.truncf %159 : vector<16x128xf32> to vector<16x128xbf16>
    %c0_68 = arith.constant 0 : index
    %c0_69 = arith.constant 0 : index
    %161 = vector.load %arg12[%c0_68, %c0_69] : memref<32x128xbf16, #tpu.memory_space<vmem>>, vector<32x128xbf16>
    %cst_70 = arith.constant dense<0.000000e+00> : vector<16x32xf32>
    %162 = tpu.matmul %160, %161, %cst_70 {dimension_numbers = #tpu.dot_dimension_numbers<[1], [1], [0], [0], [0, 0, 1, 0], [], []>} : vector<16x128xbf16>, vector<32x128xbf16>, vector<16x32xf32> -> vector<16x32xf32>
    %c0_71 = arith.constant 0 : index
    %c0_72 = arith.constant 0 : index
    %163 = vector.load %arg13[%c0_71, %c0_72] : memref<1x32xf32, #tpu.memory_space<vmem>>, vector<1x32xf32>
    %164 = vector.broadcast %163 : vector<1x32xf32> to vector<16x32xf32>
    %165 = arith.addf %162, %164 : vector<16x32xf32>
    %166 = arith.addf %121, %165 : vector<16x32xf32>
    %167 = vector.shape_cast %166 : vector<16x32xf32> to vector<2x8x32xf32>
    %c0_73 = arith.constant 0 : index
    %c0_74 = arith.constant 0 : index
    %c0_75 = arith.constant 0 : index
    %168 = vector.load %arg14[%c0_73, %c0_74, %c0_75] : memref<2x8x32xf32, #tpu.memory_space<vmem>>, vector<2x8x32xf32>
    tpu.vector_store %arg14[%c0_73, %c0_74, %c0_75], %167 {strides = array<i32>} : memref<2x8x32xf32, #tpu.memory_space<vmem>>, vector<2x8x32xf32>,
    return
  }
  func.func @transform_0(%arg0: i32) -> (i32, i32, i32) {
    %c0_i32 = arith.constant 0 : i32
    %c0_i32_0 = arith.constant 0 : i32
    %c0_i32_1 = arith.constant 0 : i32
    return %arg0, %c0_i32, %c0_i32_0 : i32, i32, i32
  }
  func.func @transform_1(%arg0: i32) -> (i32, i32) {
    %c0_i32 = arith.constant 0 : i32
    %c0_i32_0 = arith.constant 0 : i32
    %c0_i32_1 = arith.constant 0 : i32
    return %c0_i32, %c0_i32_0 : i32, i32
  }
  func.func @transform_2(%arg0: i32) -> (i32, i32) {
    %c0_i32 = arith.constant 0 : i32
    %c0_i32_0 = arith.constant 0 : i32
    %c0_i32_1 = arith.constant 0 : i32
    return %c0_i32, %c0_i32_0 : i32, i32
  }
  func.func @transform_3(%arg0: i32) -> (i32, i32) {
    %c0_i32 = arith.constant 0 : i32
    %c0_i32_0 = arith.constant 0 : i32
    %c0_i32_1 = arith.constant 0 : i32
    return %c0_i32, %c0_i32_0 : i32, i32
  }
  func.func @transform_4(%arg0: i32) -> (i32, i32) {
    %c0_i32 = arith.constant 0 : i32
    %c0_i32_0 = arith.constant 0 : i32
    %c0_i32_1 = arith.constant 0 : i32
    return %c0_i32, %c0_i32_0 : i32, i32
  }
  func.func @transform_5(%arg0: i32) -> (i32, i32) {
    %c0_i32 = arith.constant 0 : i32
    %c0_i32_0 = arith.constant 0 : i32
    %c0_i32_1 = arith.constant 0 : i32
    return %c0_i32, %c0_i32_0 : i32, i32
  }
  func.func @transform_6(%arg0: i32) -> (i32, i32) {
    %c0_i32 = arith.constant 0 : i32
    %c0_i32_0 = arith.constant 0 : i32
    %c0_i32_1 = arith.constant 0 : i32
    return %c0_i32, %c0_i32_0 : i32, i32
  }
  func.func @transform_7(%arg0: i32) -> (i32, i32) {
    %c0_i32 = arith.constant 0 : i32
    %c0_i32_0 = arith.constant 0 : i32
    %c0_i32_1 = arith.constant 0 : i32
    return %c0_i32, %c0_i32_0 : i32, i32
  }
  func.func @transform_8(%arg0: i32) -> (i32, i32) {
    %c0_i32 = arith.constant 0 : i32
    %c0_i32_0 = arith.constant 0 : i32
    %c0_i32_1 = arith.constant 0 : i32
    return %c0_i32, %c0_i32_0 : i32, i32
  }
  func.func @transform_9(%arg0: i32) -> (i32, i32) {
    %c0_i32 = arith.constant 0 : i32
    %c0_i32_0 = arith.constant 0 : i32
    %c0_i32_1 = arith.constant 0 : i32
    return %c0_i32, %c0_i32_0 : i32, i32
  }
  func.func @transform_10(%arg0: i32) -> (i32, i32) {
    %c0_i32 = arith.constant 0 : i32
    %c0_i32_0 = arith.constant 0 : i32
    %c0_i32_1 = arith.constant 0 : i32
    return %c0_i32, %c0_i32_0 : i32, i32
  }
  func.func @transform_11(%arg0: i32) -> (i32, i32) {
    %c0_i32 = arith.constant 0 : i32
    %c0_i32_0 = arith.constant 0 : i32
    %c0_i32_1 = arith.constant 0 : i32
    return %c0_i32, %c0_i32_0 : i32, i32
  }
  func.func @transform_12(%arg0: i32) -> (i32, i32) {
    %c0_i32 = arith.constant 0 : i32
    %c0_i32_0 = arith.constant 0 : i32
    %c0_i32_1 = arith.constant 0 : i32
    return %c0_i32, %c0_i32_0 : i32, i32
  }
  func.func @transform_13(%arg0: i32) -> (i32, i32, i32) {
    %c0_i32 = arith.constant 0 : i32
    %c0_i32_0 = arith.constant 0 : i32
    %c0_i32_1 = arith.constant 0 : i32
    return %arg0, %c0_i32, %c0_i32_0 : i32, i32, i32
  }
}

</mosaic_0001>

<llo_original>
// kernel: tpu_custom_call.1
$region0: #{tpu_custom_call.1}
  #allocation0 [shape = 'u32[]', space=smem, size = 0x4, offset = 0x4, fixed_abs, tag = 'smem constant byte address 0x4 - core index']
  #allocation1 [shape = 'u32[144,128]{1,0:T(1,128)}', space=vmem, size = 0x12000, scoped, tag = 'internal scratch']
  #allocation2 [shape = 'bf16[2,8,32]{2,1,0:T(8,128)(2,1)}', space=vmem, size = 0x1000, scoped, tag = 'scratch operand']
  %s0 = inlined_call_operand.vmem [shape: f32[2,8,32], index: 0, kind: input, shape index: {}]
  %s1 = inlined_call_operand.vmem [shape: f32[1,32], index: 1, kind: input, shape index: {}]
  %s2 = inlined_call_operand.vmem [shape: f32[1,32], index: 2, kind: input, shape index: {}]
  %s3 = inlined_call_operand.vmem [shape: bf16[96,32], index: 3, kind: input, shape index: {}]
  %s4 = inlined_call_operand.vmem [shape: f32[1,96], index: 4, kind: input, shape index: {}]
  %s5 = inlined_call_operand.vmem [shape: bf16[32,32], index: 5, kind: input, shape index: {}]
  %s6 = inlined_call_operand.vmem [shape: f32[1,32], index: 6, kind: input, shape index: {}]
  %s7 = inlined_call_operand.vmem [shape: f32[1,32], index: 7, kind: input, shape index: {}]
  %s8 = inlined_call_operand.vmem [shape: f32[1,32], index: 8, kind: input, shape index: {}]
  %s9 = inlined_call_operand.vmem [shape: bf16[128,32], index: 9, kind: input, shape index: {}]
  %s10 = inlined_call_operand.vmem [shape: f32[1,128], index: 10, kind: input, shape index: {}]
  %s11 = inlined_call_operand.vmem [shape: bf16[32,128], index: 11, kind: input, shape index: {}]
  %s12 = inlined_call_operand.vmem [shape: f32[1,32], index: 12, kind: input, shape index: {}]
  %s13 = inlined_call_operand.hbm [shape: f32[2,8,32], index: 13, kind: output, shape index: {}]
  %s14 = sld [smem:[#allocation0]]
  $region62: #{tpu_custom_call.1} parent=0
    _
  %s16 = ssub.s32 1, %s14
  %s17 = scalar_select 0, %s16, %s14
  $region1: #{tpu_custom_call.1} parent=0
    #allocation3 [shape = 'u8[8192]{0}', space=vmem, size = 0x2000, scoped, tag = 'output window, operand 0, single buffered']
    #allocation4 [shape = 's32[1]{0}', space=sflag, size = 0x4, scoped, tag = 'scoped memory for tpu_custom_call.1']
    %18 = vsyncpa [#allocation4], 0
    // Predicated region
    $region2: #{tpu_custom_call.1} parent=1 // pred_check
      _
    $region3: #{tpu_custom_call.1} parent=1 // pred_check_branch
      %20 = sbr.rel (0) target = $region5
    $region4: #{tpu_custom_call.1} parent=1 // pred_region
      _
    $region5: #{tpu_custom_call.1} parent=1 // pred_fallthru
      _
    // Predicated region
    $region6: #{tpu_custom_call.1} parent=1 // pred_check
      _
    $region7: #{tpu_custom_call.1} parent=1 // pred_check_branch
      %22 = sbr.rel (0) target = $region9
    $region8: #{tpu_custom_call.1} parent=1 // pred_region
      _
    $region9: #{tpu_custom_call.1} parent=1 // pred_fallthru
      _
    // Predicated region
    $region10: #{tpu_custom_call.1} parent=1 // pred_check
      _
    $region11: #{tpu_custom_call.1} parent=1 // pred_check_branch
      %24 = sbr.rel (0) target = $region13
    $region12: #{tpu_custom_call.1} parent=1 // pred_region
      _
    $region13: #{tpu_custom_call.1} parent=1 // pred_fallthru
      _
    // Predicated region
    $region14: #{tpu_custom_call.1} parent=1 // pred_check
      _
    $region15: #{tpu_custom_call.1} parent=1 // pred_check_branch
      %26 = sbr.rel (0) target = $region17
    $region16: #{tpu_custom_call.1} parent=1 // pred_region
      _
    $region17: #{tpu_custom_call.1} parent=1 // pred_fallthru
      _
    // Predicated region
    $region18: #{tpu_custom_call.1} parent=1 // pred_check
      _
    $region19: #{tpu_custom_call.1} parent=1 // pred_check_branch
      %28 = sbr.rel (0) target = $region21
    $region20: #{tpu_custom_call.1} parent=1 // pred_region
      _
    $region21: #{tpu_custom_call.1} parent=1 // pred_fallthru
      _
    // Predicated region
    $region22: #{tpu_custom_call.1} parent=1 // pred_check
      _
    $region23: #{tpu_custom_call.1} parent=1 // pred_check_branch
      %30 = sbr.rel (0) target = $region25
    $region24: #{tpu_custom_call.1} parent=1 // pred_region
      _
    $region25: #{tpu_custom_call.1} parent=1 // pred_fallthru
      _
    // Predicated region
    $region26: #{tpu_custom_call.1} parent=1 // pred_check
      _
    $region27: #{tpu_custom_call.1} parent=1 // pred_check_branch
      %32 = sbr.rel (0) target = $region29
    $region28: #{tpu_custom_call.1} parent=1 // pred_region
      _
    $region29: #{tpu_custom_call.1} parent=1 // pred_fallthru
      _
    // Predicated region
    $region30: #{tpu_custom_call.1} parent=1 // pred_check
      _
    $region31: #{tpu_custom_call.1} parent=1 // pred_check_branch
      %34 = sbr.rel (0) target = $region33
    $region32: #{tpu_custom_call.1} parent=1 // pred_region
      _
    $region33: #{tpu_custom_call.1} parent=1 // pred_fallthru
      _
    // Predicated region
    $region34: #{tpu_custom_call.1} parent=1 // pred_check
      _
    $region35: #{tpu_custom_call.1} parent=1 // pred_check_branch
      %36 = sbr.rel (0) target = $region37
    $region36: #{tpu_custom_call.1} parent=1 // pred_region
      _
    $region37: #{tpu_custom_call.1} parent=1 // pred_fallthru
      _
    // Predicated region
    $region38: #{tpu_custom_call.1} parent=1 // pred_check
      _
    $region39: #{tpu_custom_call.1} parent=1 // pred_check_branch
      %38 = sbr.rel (0) target = $region41
    $region40: #{tpu_custom_call.1} parent=1 // pred_region
      _
    $region41: #{tpu_custom_call.1} parent=1 // pred_fallthru
      _
    // Predicated region
    $region42: #{tpu_custom_call.1} parent=1 // pred_check
      _
    $region43: #{tpu_custom_call.1} parent=1 // pred_check_branch
      %40 = sbr.rel (0) target = $region45
    $region44: #{tpu_custom_call.1} parent=1 // pred_region
      _
    $region45: #{tpu_custom_call.1} parent=1 // pred_fallthru
      _
    // Predicated region
    $region46: #{tpu_custom_call.1} parent=1 // pred_check
      _
    $region47: #{tpu_custom_call.1} parent=1 // pred_check_branch
      %42 = sbr.rel (0) target = $region49
    $region48: #{tpu_custom_call.1} parent=1 // pred_region
      _
    $region49: #{tpu_custom_call.1} parent=1 // pred_fallthru
      _
    // Predicated region
    $region50: #{tpu_custom_call.1} parent=1 // pred_check
      _
    $region51: #{tpu_custom_call.1} parent=1 // pred_check_branch
      %44 = sbr.rel (0) target = $region53
    $region52: #{tpu_custom_call.1} parent=1 // pred_region
      _
    $region53: #{tpu_custom_call.1} parent=1 // pred_fallthru
      _
    %v46 = vld [vmem:[%s0] sm:$0xff]
    %v47 = vld [vmem:[%s0 + $0x8] sm:$0xff]
    %v48 = vld [vmem:[%s1] sm:$0x1]
    %v49 = vld [vmem:[%s2] sm:$0x1]
    %vm50 = vcmask 261120
    %v51 = vsel %vm50, %v46, 0.0
    %52 = vadd.xlane.f32.xlu0 %v51
    %v53 = vpop.xlane.xlu0 %52
    %v54 = vsel %vm50, %v47, 0.0
    %55 = vadd.xlane.f32.xlu0 %v54
    %v56 = vpop.xlane.xlu0 %55
    %v57 = vrcp.pop 32.0
    %v58 = vmul.f32 %v53, %v57
    %v59 = vmul.f32 %v56, %v57
    %v60 = vsub.f32 %v46, %v58
    %v61 = vsub.f32 %v47, %v59
    %v62 = vmul.f32 %v60, %v60
    %v63 = vmul.f32 %v61, %v61
    %v64 = vsel %vm50, %v62, 0.0
    %65 = vadd.xlane.f32.xlu0 %v64
    %v66 = vpop.xlane.xlu0 %65
    %v67 = vsel %vm50, %v63, 0.0
    %68 = vadd.xlane.f32.xlu0 %v67
    %v69 = vpop.xlane.xlu0 %68
    %v70 = vmul.f32 %v66, %v57
    %v71 = vmul.f32 %v69, %v57
    %v72 = vadd.f32 %v70, 1e-05
    %v73 = vadd.f32 %v71, 1e-05
    %v74 = vrsqrt.pop %v72
    %v75 = vrsqrt.pop %v73
    %v76 = vmul.f32 %v60, %v74
    %v77 = vmul.f32 %v61, %v75
    %v79 = vlaneseq
    %v80 = vshrl.u32 %v79, 7
    %v81 = vsub.s32 0, %v80
    %v82 = vrot.slane %v48, %v81
    %v84 = vmul.f32 %v76, %v82
    %v85 = vmul.f32 %v77, %v82
    %v87 = vlaneseq
    %v88 = vshrl.u32 %v87, 7
    %v89 = vsub.s32 0, %v88
    %v90 = vrot.slane %v49, %v89
    %v92 = vadd.f32 %v84, %v90
    %v93 = vadd.f32 %v85, %v90
    %v94 = vpack.c.bf16 %v93, %v92
    %v95 = vld [vmem:[%s3] sm:$0xf]
    %v96 = vld [vmem:[%s3 + $0x4] sm:$0xf]
    %v97 = vld [vmem:[%s3 + $0x8] sm:$0xf]
    %v98 = vld [vmem:[%s3 + $0xc] sm:$0xf]
    %v99 = vld [vmem:[%s3 + $0x10] sm:$0xf]
    %v100 = vld [vmem:[%s3 + $0x14] sm:$0xf]
    %v101 = vld [vmem:[%s3 + $0x18] sm:$0xf]
    %v102 = vld [vmem:[%s3 + $0x1c] sm:$0xf]
    %v103 = vld [vmem:[%s3 + $0x20] sm:$0xf]
    %v104 = vld [vmem:[%s3 + $0x24] sm:$0xf]
    %v105 = vld [vmem:[%s3 + $0x28] sm:$0xf]
    %v106 = vld [vmem:[%s3 + $0x2c] sm:$0xf]
    %v107 = vld [vmem:[%s4] sm:$0x1]
    %v109 = vlaneseq
    %v110 = vshrl.u32 %v109, 7
    %v111 = vsub.s32 0, %v110
    %v112 = vrot.slane %v107, %v111
    %v126 = vunpack.c.l.b16 %v95
    %v127 = vunpack.c.l.b16 %v96
    %v128 = vunpack.c.l.b16 %v97
    %v129 = vunpack.c.l.b16 %v98
    %v130 = vunpack.c.l.b16 %v99
    %v131 = vunpack.c.l.b16 %v100
    %v132 = vunpack.c.l.b16 %v101
    %v133 = vunpack.c.l.b16 %v102
    %v134 = vunpack.c.l.b16 %v103
    %v135 = vunpack.c.l.b16 %v104
    %v136 = vunpack.c.l.b16 %v105
    %v137 = vunpack.c.l.b16 %v106
    %v138 = vpack.c.b16 %v127, %v126
    %v139 = vpack.c.b16 %v129, %v128
    %v140 = vpack.c.b16 %v131, %v130
    %v141 = vpack.c.b16 %v133, %v132
    %v142 = vpack.c.b16 %v135, %v134
    %v143 = vpack.c.b16 %v137, %v136
    %v145 = vsel %vm50, %v94, 0
    %v148 = vsel %vm50, %v138, 0
    %v151 = vsel %vm50, %v139, 0
    %v154 = vsel %vm50, %v140, 0
    %v157 = vsel %vm50, %v141, 0
    %v160 = vsel %vm50, %v142, 0
    %v163 = vsel %vm50, %v143, 0
    %165 = vmatprep.subr.bf16.mxu0 0
    %166 = vmatpush1.bf16.xpose.msra.mxu0 %v148
    %167 = vmatprep.subr.bf16.mxu0 0
    %168 = vmatpush1.bf16.xpose.msra.mxu0 %v151
    %169 = vmatprep.subr.bf16.mxu0 0
    %170 = vmatpush1.bf16.xpose.msra.mxu0 %v154
    %171 = vmatprep.subr.bf16.mxu0 0
    %172 = vmatpush1.bf16.xpose.msra.mxu0 %v157
    %173 = vmatprep.subr.bf16.mxu0 0
    %174 = vmatpush1.bf16.xpose.msra.mxu0 %v160
    %175 = vmatprep.subr.bf16.mxu0 0
    %176 = vmatpush1.bf16.xpose.msra.mxu0 %v163
    %177 = vmatprep.subr.bf16.mxu0 0
    %178 = vmatpush1.bf16.xpose.msra.mxu0 0
    %179 = vmatprep.subr.bf16.mxu0 0
    %180 = vmatpush1.bf16.xpose.msra.mxu0 0
    %181 = vmatprep.subr.bf16.mxu0 0
    %182 = vmatpush1.bf16.xpose.msra.mxu0 0
    %183 = vmatprep.subr.bf16.mxu0 0
    %184 = vmatpush1.bf16.xpose.msra.mxu0 0
    %185 = vmatprep.subr.bf16.mxu0 0
    %186 = vmatpush1.bf16.xpose.msra.mxu0 0
    %187 = vmatprep.subr.bf16.mxu0 0
    %188 = vmatpush1.bf16.xpose.msra.mxu0 0
    %189 = vmatprep.subr.bf16.mxu0 0
    %190 = vmatpush1.bf16.xpose.msra.mxu0 0
    %191 = vmatprep.subr.bf16.mxu0 0
    %192 = vmatpush1.bf16.xpose.msra.mxu0 0
    %193 = vmatprep.subr.bf16.mxu0 0
    %194 = vmatpush1.bf16.xpose.msra.mxu0 0
    %195 = vmatprep.subr.bf16.mxu0 0
    %196 = vmatpush1.bf16.xpose.msra.mxu0 0
    %197 = vmatprep.mubr.bf16.mxu0 0
    %198 = vmatmul.mubr.bf16.gmra.mrb[0].mxu0 %v145
    %v199 = vpop.f32.mrb[0].mxu0
    %v200 = vadd.f32 %v112, %v199
    %v201 = vpop.f32.mrb[0].mxu0
    %v202 = vpop.f32.mrb[0].mxu0
    %v203 = vadd.f32 %v112, %v202
    %v204 = vpop.f32.mrb[0].mxu0
    %205 = vdwg.mxu0
    %v206 = vpack.c.bf16 %v203, %v200
    %v208 = vunpack.c.l.b16 %v206
    %v209 = vunpack.c.h.b16 %v206
    %v210 = vpack.c.b16 %v208, %v208
    %v211 = vpack.c.b16 %v209, %v209
    %212 = vrot.lane.b32.xlu0 %v210, 96
    %v213 = vpop.permute.xlu0 %212
    %vm214 = vcmask 64512
    %v216 = vsel %vm214, %v210, 0
    %v219 = vsel %vm214, %v213, 0
    %221 = vmatprep.subr.bf16.mxu0 0
    %222 = vmatpush1.bf16.xpose.msra.mxu0 %v219
    %223 = vmatprep.subr.bf16.mxu0 0
    %224 = vmatpush1.bf16.xpose.msra.mxu0 0
    %225 = vmatprep.subr.bf16.mxu0 0
    %226 = vmatpush1.bf16.xpose.msra.mxu0 0
    %227 = vmatprep.subr.bf16.mxu0 0
    %228 = vmatpush1.bf16.xpose.msra.mxu0 0
    %229 = vmatprep.subr.bf16.mxu0 0
    %230 = vmatpush1.bf16.xpose.msra.mxu0 0
    %231 = vmatprep.subr.bf16.mxu0 0
    %232 = vmatpush1.bf16.xpose.msra.mxu0 0
    %233 = vmatprep.subr.bf16.mxu0 0
    %234 = vmatpush1.bf16.xpose.msra.mxu0 0
    %235 = vmatprep.subr.bf16.mxu0 0
    %236 = vmatpush1.bf16.xpose.msra.mxu0 0
    %237 = vmatprep.subr.bf16.mxu0 0
    %238 = vmatpush1.bf16.xpose.msra.mxu0 0
    %239 = vmatprep.subr.bf16.mxu0 0
    %240 = vmatpush1.bf16.xpose.msra.mxu0 0
    %241 = vmatprep.subr.bf16.mxu0 0
    %242 = vmatpush1.bf16.xpose.msra.mxu0 0
    %243 = vmatprep.subr.bf16.mxu0 0
    %244 = vmatpush1.bf16.xpose.msra.mxu0 0
    %245 = vmatprep.subr.bf16.mxu0 0
    %246 = vmatpush1.bf16.xpose.msra.mxu0 0
    %247 = vmatprep.subr.bf16.mxu0 0
    %248 = vmatpush1.bf16.xpose.msra.mxu0 0
    %249 = vmatprep.subr.bf16.mxu0 0
    %250 = vmatpush1.bf16.xpose.msra.mxu0 0
    %251 = vmatprep.subr.bf16.mxu0 0
    %252 = vmatpush1.bf16.xpose.msra.mxu0 0
    %253 = vmatprep.mubr.bf16.mxu0 0
    %254 = vmatmul.mubr.bf16.gmra.mrb[0].mxu0 %v216
    %v255 = vpop.f32.mrb[0].mxu0
    %v256 = vadd.f32 0.0, %v255
    %v257 = vpop.f32.mrb[0].mxu0
    %v258 = vpop.f32.mrb[0].mxu0
    %v259 = vpop.f32.mrb[0].mxu0
    %260 = vdwg.mxu0
    %261 = vrot.lane.b32.xlu0 %v211, 96
    %v262 = vpop.permute.xlu0 %261
    %v264 = vsel %vm214, %v211, 0
    %v267 = vsel %vm214, %v262, 0
    %269 = vmatprep.subr.bf16.mxu0 0
    %270 = vmatpush1.bf16.xpose.msra.mxu0 %v267
    %271 = vmatprep.subr.bf16.mxu0 0
    %272 = vmatpush1.bf16.xpose.msra.mxu0 0
    %273 = vmatprep.subr.bf16.mxu0 0
    %274 = vmatpush1.bf16.xpose.msra.mxu0 0
    %275 = vmatprep.subr.bf16.mxu0 0
    %276 = vmatpush1.bf16.xpose.msra.mxu0 0
    %277 = vmatprep.subr.bf16.mxu0 0
    %278 = vmatpush1.bf16.xpose.msra.mxu0 0
    %279 = vmatprep.subr.bf16.mxu0 0
    %280 = vmatpush1.bf16.xpose.msra.mxu0 0
    %281 = vmatprep.subr.bf16.mxu0 0
    %282 = vmatpush1.bf16.xpose.msra.mxu0 0
    %283 = vmatprep.subr.bf16.mxu0 0
    %284 = vmatpush1.bf16.xpose.msra.mxu0 0
    %285 = vmatprep.subr.bf16.mxu0 0
    %286 = vmatpush1.bf16.xpose.msra.mxu0 0
    %287 = vmatprep.subr.bf16.mxu0 0
    %288 = vmatpush1.bf16.xpose.msra.mxu0 0
    %289 = vmatprep.subr.bf16.mxu0 0
    %290 = vmatpush1.bf16.xpose.msra.mxu0 0
    %291 = vmatprep.subr.bf16.mxu0 0
    %292 = vmatpush1.bf16.xpose.msra.mxu0 0
    %293 = vmatprep.subr.bf16.mxu0 0
    %294 = vmatpush1.bf16.xpose.msra.mxu0 0
    %295 = vmatprep.subr.bf16.mxu0 0
    %296 = vmatpush1.bf16.xpose.msra.mxu0 0
    %297 = vmatprep.subr.bf16.mxu0 0
    %298 = vmatpush1.bf16.xpose.msra.mxu0 0
    %299 = vmatprep.subr.bf16.mxu0 0
    %300 = vmatpush1.bf16.xpose.msra.mxu0 0
    %301 = vmatprep.mubr.bf16.mxu0 0
    %302 = vmatmul.mubr.bf16.gmra.mrb[0].mxu0 %v264
    %v303 = vpop.f32.mrb[0].mxu0
    %v304 = vadd.f32 0.0, %v303
    %v305 = vpop.f32.mrb[0].mxu0
    %v306 = vpop.f32.mrb[0].mxu0
    %v307 = vpop.f32.mrb[0].mxu0
    %308 = vdwg.mxu0
    %v309 = vmul.f32 %v256, 0.35355338
    %v310 = vmul.f32 %v304, 0.35355338
    %v311 = vsel %vm214, %v309, -inf
    %312 = vmax.xlane.f32.xlu0 %v311
    %v313 = vpop.xlane.xlu0 %312
    %v314 = vsel %vm214, %v310, -inf
    %315 = vmax.xlane.f32.xlu0 %v314
    %v316 = vpop.xlane.xlu0 %315
    %v317 = vsub.f32 %v309, %v313
    %v318 = vsub.f32 %v310, %v316
    %v319 = vmul.f32 %v317, 1.442695
    %v320 = vpow.pop %v319
    %v321 = vmul.f32 %v318, 1.442695
    %v322 = vpow.pop %v321
    %v323 = vsel %vm214, %v320, 0.0
    %324 = vadd.xlane.f32.xlu0 %v323
    %v325 = vpop.xlane.xlu0 %324
    %v326 = vsel %vm214, %v322, 0.0
    %327 = vadd.xlane.f32.xlu0 %v326
    %v328 = vpop.xlane.xlu0 %327
    %v329 = vrcp.pop %v325
    %v330 = vrcp.pop %v328
    %v331 = vmul.f32 %v320, %v329
    %v332 = vmul.f32 %v322, %v330
    %v333 = vpack.c.bf16 %v331, %v331
    %v334 = vpack.c.bf16 %v332, %v332
    %335 = vrot.lane.b32.xlu0 %v210, 64
    %v336 = vpop.permute.xlu0 %335
    %v338 = vsel %vm214, %v333, 0
    %vm340 = vcmask 1043456
    %v342 = vsel %vm340, %v336, 0
    %344 = vmatprep.subr.bf16.mxu0 0
    %345 = vmatpush1.bf16.msra.mxu0 %v342
    %346 = vmatprep.subr.bf16.mxu0 0
    %347 = vmatpush1.bf16.msra.mxu0 0
    %348 = vmatprep.subr.bf16.mxu0 0
    %349 = vmatpush1.bf16.msra.mxu0 0
    %350 = vmatprep.subr.bf16.mxu0 0
    %351 = vmatpush1.bf16.msra.mxu0 0
    %352 = vmatprep.subr.bf16.mxu0 0
    %353 = vmatpush1.bf16.msra.mxu0 0
    %354 = vmatprep.subr.bf16.mxu0 0
    %355 = vmatpush1.bf16.msra.mxu0 0
    %356 = vmatprep.subr.bf16.mxu0 0
    %357 = vmatpush1.bf16.msra.mxu0 0
    %358 = vmatprep.subr.bf16.mxu0 0
    %359 = vmatpush1.bf16.msra.mxu0 0
    %360 = vmatprep.subr.bf16.mxu0 0
    %361 = vmatpush1.bf16.msra.mxu0 0
    %362 = vmatprep.subr.bf16.mxu0 0
    %363 = vmatpush1.bf16.msra.mxu0 0
    %364 = vmatprep.subr.bf16.mxu0 0
    %365 = vmatpush1.bf16.msra.mxu0 0
    %366 = vmatprep.subr.bf16.mxu0 0
    %367 = vmatpush1.bf16.msra.mxu0 0
    %368 = vmatprep.subr.bf16.mxu0 0
    %369 = vmatpush1.bf16.msra.mxu0 0
    %370 = vmatprep.subr.bf16.mxu0 0
    %371 = vmatpush1.bf16.msra.mxu0 0
    %372 = vmatprep.subr.bf16.mxu0 0
    %373 = vmatpush1.bf16.msra.mxu0 0
    %374 = vmatprep.subr.bf16.mxu0 0
    %375 = vmatpush1.bf16.msra.mxu0 0
    %376 = vmatprep.mubr.bf16.mxu0 0
    %377 = vmatmul.mubr.bf16.gmra.mrb[0].mxu0 %v338
    %v378 = vpop.f32.mrb[0].mxu0
    %v379 = vadd.f32 0.0, %v378
    %v380 = vpop.f32.mrb[0].mxu0
    %v381 = vpop.f32.mrb[0].mxu0
    %v382 = vpop.f32.mrb[0].mxu0
    %383 = vdwg.mxu0
    %384 = vrot.lane.b32.xlu0 %v211, 64
    %v385 = vpop.permute.xlu0 %384
    %v387 = vsel %vm214, %v334, 0
    %v390 = vsel %vm340, %v385, 0
    %392 = vmatprep.subr.bf16.mxu0 0
    %393 = vmatpush1.bf16.msra.mxu0 %v390
    %394 = vmatprep.subr.bf16.mxu0 0
    %395 = vmatpush1.bf16.msra.mxu0 0
    %396 = vmatprep.subr.bf16.mxu0 0
    %397 = vmatpush1.bf16.msra.mxu0 0
    %398 = vmatprep.subr.bf16.mxu0 0
    %399 = vmatpush1.bf16.msra.mxu0 0
    %400 = vmatprep.subr.bf16.mxu0 0
    %401 = vmatpush1.bf16.msra.mxu0 0
    %402 = vmatprep.subr.bf16.mxu0 0
    %403 = vmatpush1.bf16.msra.mxu0 0
    %404 = vmatprep.subr.bf16.mxu0 0
    %405 = vmatpush1.bf16.msra.mxu0 0
    %406 = vmatprep.subr.bf16.mxu0 0
    %407 = vmatpush1.bf16.msra.mxu0 0
    %408 = vmatprep.subr.bf16.mxu0 0
    %409 = vmatpush1.bf16.msra.mxu0 0
    %410 = vmatprep.subr.bf16.mxu0 0
    %411 = vmatpush1.bf16.msra.mxu0 0
    %412 = vmatprep.subr.bf16.mxu0 0
    %413 = vmatpush1.bf16.msra.mxu0 0
    %414 = vmatprep.subr.bf16.mxu0 0
    %415 = vmatpush1.bf16.msra.mxu0 0
    %416 = vmatprep.subr.bf16.mxu0 0
    %417 = vmatpush1.bf16.msra.mxu0 0
    %418 = vmatprep.subr.bf16.mxu0 0
    %419 = vmatpush1.bf16.msra.mxu0 0
    %420 = vmatprep.subr.bf16.mxu0 0
    %421 = vmatpush1.bf16.msra.mxu0 0
    %422 = vmatprep.subr.bf16.mxu0 0
    %423 = vmatpush1.bf16.msra.mxu0 0
    %424 = vmatprep.mubr.bf16.mxu0 0
    %425 = vmatmul.mubr.bf16.gmra.mrb[0].mxu0 %v387
    %v426 = vpop.f32.mrb[0].mxu0
    %v427 = vadd.f32 0.0, %v426
    %v428 = vpop.f32.mrb[0].mxu0
    %v429 = vpop.f32.mrb[0].mxu0
    %v430 = vpop.f32.mrb[0].mxu0
    %431 = vdwg.mxu0
    %v432 = vpack.c.bf16 %v379, %v379
    %v433 = vpack.c.bf16 %v427, %v427
    %vm434 = vcmask 60416
    %435 = vst.msk [vmem:[#allocation2] sm:$0xf] %vm434, %v432
    %436 = vst.msk [vmem:[#allocation2 + $0x4] sm:$0xf] %vm434, %v433
    %437 = vrot.lane.b32.xlu0 %v210, 120
    %v438 = vpop.permute.xlu0 %437
    %439 = vrot.lane.b32.xlu0 %v210, 88
    %v440 = vpop.permute.xlu0 %439
    %v442 = vsel %vm214, %v438, 0
    %v445 = vsel %vm214, %v440, 0
    %447 = vmatprep.subr.bf16.mxu0 0
    %448 = vmatpush1.bf16.xpose.msra.mxu0 %v445
    %449 = vmatprep.subr.bf16.mxu0 0
    %450 = vmatpush1.bf16.xpose.msra.mxu0 0
    %451 = vmatprep.subr.bf16.mxu0 0
    %452 = vmatpush1.bf16.xpose.msra.mxu0 0
    %453 = vmatprep.subr.bf16.mxu0 0
    %454 = vmatpush1.bf16.xpose.msra.mxu0 0
    %455 = vmatprep.subr.bf16.mxu0 0
    %456 = vmatpush1.bf16.xpose.msra.mxu0 0
    %457 = vmatprep.subr.bf16.mxu0 0
    %458 = vmatpush1.bf16.xpose.msra.mxu0 0
    %459 = vmatprep.subr.bf16.mxu0 0
    %460 = vmatpush1.bf16.xpose.msra.mxu0 0
    %461 = vmatprep.subr.bf16.mxu0 0
    %462 = vmatpush1.bf16.xpose.msra.mxu0 0
    %463 = vmatprep.subr.bf16.mxu0 0
    %464 = vmatpush1.bf16.xpose.msra.mxu0 0
    %465 = vmatprep.subr.bf16.mxu0 0
    %466 = vmatpush1.bf16.xpose.msra.mxu0 0
    %467 = vmatprep.subr.bf16.mxu0 0
    %468 = vmatpush1.bf16.xpose.msra.mxu0 0
    %469 = vmatprep.subr.bf16.mxu0 0
    %470 = vmatpush1.bf16.xpose.msra.mxu0 0
    %471 = vmatprep.subr.bf16.mxu0 0
    %472 = vmatpush1.bf16.xpose.msra.mxu0 0
    %473 = vmatprep.subr.bf16.mxu0 0
    %474 = vmatpush1.bf16.xpose.msra.mxu0 0
    %475 = vmatprep.subr.bf16.mxu0 0
    %476 = vmatpush1.bf16.xpose.msra.mxu0 0
    %477 = vmatprep.subr.bf16.mxu0 0
    %478 = vmatpush1.bf16.xpose.msra.mxu0 0
    %479 = vmatprep.mubr.bf16.mxu0 0
    %480 = vmatmul.mubr.bf16.gmra.mrb[0].mxu0 %v442
    %v481 = vpop.f32.mrb[0].mxu0
    %v482 = vadd.f32 0.0, %v481
    %v483 = vpop.f32.mrb[0].mxu0
    %v484 = vpop.f32.mrb[0].mxu0
    %v485 = vpop.f32.mrb[0].mxu0
    %486 = vdwg.mxu0
    %487 = vrot.lane.b32.xlu0 %v211, 120
    %v488 = vpop.permute.xlu0 %487
    %489 = vrot.lane.b32.xlu0 %v211, 88
    %v490 = vpop.permute.xlu0 %489
    %v492 = vsel %vm214, %v488, 0
    %v495 = vsel %vm214, %v490, 0
    %497 = vmatprep.subr.bf16.mxu0 0
    %498 = vmatpush1.bf16.xpose.msra.mxu0 %v495
    %499 = vmatprep.subr.bf16.mxu0 0
    %500 = vmatpush1.bf16.xpose.msra.mxu0 0
    %501 = vmatprep.subr.bf16.mxu0 0
    %502 = vmatpush1.bf16.xpose.msra.mxu0 0
    %503 = vmatprep.subr.bf16.mxu0 0
    %504 = vmatpush1.bf16.xpose.msra.mxu0 0
    %505 = vmatprep.subr.bf16.mxu0 0
    %506 = vmatpush1.bf16.xpose.msra.mxu0 0
    %507 = vmatprep.subr.bf16.mxu0 0
    %508 = vmatpush1.bf16.xpose.msra.mxu0 0
    %509 = vmatprep.subr.bf16.mxu0 0
    %510 = vmatpush1.bf16.xpose.msra.mxu0 0
    %511 = vmatprep.subr.bf16.mxu0 0
    %512 = vmatpush1.bf16.xpose.msra.mxu0 0
    %513 = vmatprep.subr.bf16.mxu0 0
    %514 = vmatpush1.bf16.xpose.msra.mxu0 0
    %515 = vmatprep.subr.bf16.mxu0 0
    %516 = vmatpush1.bf16.xpose.msra.mxu0 0
    %517 = vmatprep.subr.bf16.mxu0 0
    %518 = vmatpush1.bf16.xpose.msra.mxu0 0
    %519 = vmatprep.subr.bf16.mxu0 0
    %520 = vmatpush1.bf16.xpose.msra.mxu0 0
    %521 = vmatprep.subr.bf16.mxu0 0
    %522 = vmatpush1.bf16.xpose.msra.mxu0 0
    %523 = vmatprep.subr.bf16.mxu0 0
    %524 = vmatpush1.bf16.xpose.msra.mxu0 0
    %525 = vmatprep.subr.bf16.mxu0 0
    %526 = vmatpush1.bf16.xpose.msra.mxu0 0
    %527 = vmatprep.subr.bf16.mxu0 0
    %528 = vmatpush1.bf16.xpose.msra.mxu0 0
    %529 = vmatprep.mubr.bf16.mxu0 0
    %530 = vmatmul.mubr.bf16.gmra.mrb[0].mxu0 %v492
    %v531 = vpop.f32.mrb[0].mxu0
    %v532 = vadd.f32 0.0, %v531
    %v533 = vpop.f32.mrb[0].mxu0
    %v534 = vpop.f32.mrb[0].mxu0
    %v535 = vpop.f32.mrb[0].mxu0
    %536 = vdwg.mxu0
    %v537 = vmul.f32 %v482, 0.35355338
    %v538 = vmul.f32 %v532, 0.35355338
    %v539 = vsel %vm214, %v537, -inf
    %540 = vmax.xlane.f32.xlu0 %v539
    %v541 = vpop.xlane.xlu0 %540
    %v542 = vsel %vm214, %v538, -inf
    %543 = vmax.xlane.f32.xlu0 %v542
    %v544 = vpop.xlane.xlu0 %543
    %v545 = vsub.f32 %v537, %v541
    %v546 = vsub.f32 %v538, %v544
    %v547 = vmul.f32 %v545, 1.442695
    %v548 = vpow.pop %v547
    %v549 = vmul.f32 %v546, 1.442695
    %v550 = vpow.pop %v549
    %v551 = vsel %vm214, %v548, 0.0
    %552 = vadd.xlane.f32.xlu0 %v551
    %v553 = vpop.xlane.xlu0 %552
    %v554 = vsel %vm214, %v550, 0.0
    %555 = vadd.xlane.f32.xlu0 %v554
    %v556 = vpop.xlane.xlu0 %555
    %v557 = vrcp.pop %v553
    %v558 = vrcp.pop %v556
    %v559 = vmul.f32 %v548, %v557
    %v560 = vmul.f32 %v550, %v558
    %v561 = vpack.c.bf16 %v559, %v559
    %v562 = vpack.c.bf16 %v560, %v560
    %563 = vrot.lane.b32.xlu0 %v210, 56
    %v564 = vpop.permute.xlu0 %563
    %v566 = vsel %vm214, %v561, 0
    %v569 = vsel %vm340, %v564, 0
    %571 = vmatprep.subr.bf16.mxu0 0
    %572 = vmatpush1.bf16.msra.mxu0 %v569
    %573 = vmatprep.subr.bf16.mxu0 0
    %574 = vmatpush1.bf16.msra.mxu0 0
    %575 = vmatprep.subr.bf16.mxu0 0
    %576 = vmatpush1.bf16.msra.mxu0 0
    %577 = vmatprep.subr.bf16.mxu0 0
    %578 = vmatpush1.bf16.msra.mxu0 0
    %579 = vmatprep.subr.bf16.mxu0 0
    %580 = vmatpush1.bf16.msra.mxu0 0
    %581 = vmatprep.subr.bf16.mxu0 0
    %582 = vmatpush1.bf16.msra.mxu0 0
    %583 = vmatprep.subr.bf16.mxu0 0
    %584 = vmatpush1.bf16.msra.mxu0 0
    %585 = vmatprep.subr.bf16.mxu0 0
    %586 = vmatpush1.bf16.msra.mxu0 0
    %587 = vmatprep.subr.bf16.mxu0 0
    %588 = vmatpush1.bf16.msra.mxu0 0
    %589 = vmatprep.subr.bf16.mxu0 0
    %590 = vmatpush1.bf16.msra.mxu0 0
    %591 = vmatprep.subr.bf16.mxu0 0
    %592 = vmatpush1.bf16.msra.mxu0 0
    %593 = vmatprep.subr.bf16.mxu0 0
    %594 = vmatpush1.bf16.msra.mxu0 0
    %595 = vmatprep.subr.bf16.mxu0 0
    %596 = vmatpush1.bf16.msra.mxu0 0
    %597 = vmatprep.subr.bf16.mxu0 0
    %598 = vmatpush1.bf16.msra.mxu0 0
    %599 = vmatprep.subr.bf16.mxu0 0
    %600 = vmatpush1.bf16.msra.mxu0 0
    %601 = vmatprep.subr.bf16.mxu0 0
    %602 = vmatpush1.bf16.msra.mxu0 0
    %603 = vmatprep.mubr.bf16.mxu0 0
    %604 = vmatmul.mubr.bf16.gmra.mrb[0].mxu0 %v566
    %v605 = vpop.f32.mrb[0].mxu0
    %v606 = vadd.f32 0.0, %v605
    %v607 = vpop.f32.mrb[0].mxu0
    %v608 = vpop.f32.mrb[0].mxu0
    %v609 = vpop.f32.mrb[0].mxu0
    %610 = vdwg.mxu0
    %611 = vrot.lane.b32.xlu0 %v211, 56
    %v612 = vpop.permute.xlu0 %611
    %v614 = vsel %vm214, %v562, 0
    %v617 = vsel %vm340, %v612, 0
    %619 = vmatprep.subr.bf16.mxu0 0
    %620 = vmatpush1.bf16.msra.mxu0 %v617
    %621 = vmatprep.subr.bf16.mxu0 0
    %622 = vmatpush1.bf16.msra.mxu0 0
    %623 = vmatprep.subr.bf16.mxu0 0
    %624 = vmatpush1.bf16.msra.mxu0 0
    %625 = vmatprep.subr.bf16.mxu0 0
    %626 = vmatpush1.bf16.msra.mxu0 0
    %627 = vmatprep.subr.bf16.mxu0 0
    %628 = vmatpush1.bf16.msra.mxu0 0
    %629 = vmatprep.subr.bf16.mxu0 0
    %630 = vmatpush1.bf16.msra.mxu0 0
    %631 = vmatprep.subr.bf16.mxu0 0
    %632 = vmatpush1.bf16.msra.mxu0 0
    %633 = vmatprep.subr.bf16.mxu0 0
    %634 = vmatpush1.bf16.msra.mxu0 0
    %635 = vmatprep.subr.bf16.mxu0 0
    %636 = vmatpush1.bf16.msra.mxu0 0
    %637 = vmatprep.subr.bf16.mxu0 0
    %638 = vmatpush1.bf16.msra.mxu0 0
    %639 = vmatprep.subr.bf16.mxu0 0
    %640 = vmatpush1.bf16.msra.mxu0 0
    %641 = vmatprep.subr.bf16.mxu0 0
    %642 = vmatpush1.bf16.msra.mxu0 0
    %643 = vmatprep.subr.bf16.mxu0 0
    %644 = vmatpush1.bf16.msra.mxu0 0
    %645 = vmatprep.subr.bf16.mxu0 0
    %646 = vmatpush1.bf16.msra.mxu0 0
    %647 = vmatprep.subr.bf16.mxu0 0
    %648 = vmatpush1.bf16.msra.mxu0 0
    %649 = vmatprep.subr.bf16.mxu0 0
    %650 = vmatpush1.bf16.msra.mxu0 0
    %651 = vmatprep.mubr.bf16.mxu0 0
    %652 = vmatmul.mubr.bf16.gmra.mrb[0].mxu0 %v614
    %v653 = vpop.f32.mrb[0].mxu0
    %v654 = vadd.f32 0.0, %v653
    %v655 = vpop.f32.mrb[0].mxu0
    %v656 = vpop.f32.mrb[0].mxu0
    %v657 = vpop.f32.mrb[0].mxu0
    %658 = vdwg.mxu0
    %v659 = vpack.c.bf16 %v606, %v606
    %v660 = vpack.c.bf16 %v654, %v654
    %v663 = vunpack.c.l.b16 %v659
    %v664 = vunpack.c.l.b16 %v660
    %v665 = vpack.c.b16 %v663, %v663
    %v666 = vpack.c.b16 %v664, %v664
    %667 = vrot.lane.b32.xlu0 %v665, 8
    %v668 = vpop.permute.xlu0 %667
    %669 = vrot.lane.b32.xlu0 %v666, 8
    %v670 = vpop.permute.xlu0 %669
    %vm673 = vcmask 126016
    %674 = vst.msk [vmem:[#allocation2] sm:$0xf] %vm673, %v668
    %675 = vst.msk [vmem:[#allocation2 + $0x4] sm:$0xf] %vm673, %v670
    %676 = vrot.lane.b32.xlu0 %v210, 112
    %v677 = vpop.permute.xlu0 %676
    %678 = vrot.lane.b32.xlu0 %v210, 80
    %v679 = vpop.permute.xlu0 %678
    %v681 = vsel %vm214, %v677, 0
    %v684 = vsel %vm214, %v679, 0
    %686 = vmatprep.subr.bf16.mxu0 0
    %687 = vmatpush1.bf16.xpose.msra.mxu0 %v684
    %688 = vmatprep.subr.bf16.mxu0 0
    %689 = vmatpush1.bf16.xpose.msra.mxu0 0
    %690 = vmatprep.subr.bf16.mxu0 0
    %691 = vmatpush1.bf16.xpose.msra.mxu0 0
    %692 = vmatprep.subr.bf16.mxu0 0
    %693 = vmatpush1.bf16.xpose.msra.mxu0 0
    %694 = vmatprep.subr.bf16.mxu0 0
    %695 = vmatpush1.bf16.xpose.msra.mxu0 0
    %696 = vmatprep.subr.bf16.mxu0 0
    %697 = vmatpush1.bf16.xpose.msra.mxu0 0
    %698 = vmatprep.subr.bf16.mxu0 0
    %699 = vmatpush1.bf16.xpose.msra.mxu0 0
    %700 = vmatprep.subr.bf16.mxu0 0
    %701 = vmatpush1.bf16.xpose.msra.mxu0 0
    %702 = vmatprep.subr.bf16.mxu0 0
    %703 = vmatpush1.bf16.xpose.msra.mxu0 0
    %704 = vmatprep.subr.bf16.mxu0 0
    %705 = vmatpush1.bf16.xpose.msra.mxu0 0
    %706 = vmatprep.subr.bf16.mxu0 0
    %707 = vmatpush1.bf16.xpose.msra.mxu0 0
    %708 = vmatprep.subr.bf16.mxu0 0
    %709 = vmatpush1.bf16.xpose.msra.mxu0 0
    %710 = vmatprep.subr.bf16.mxu0 0
    %711 = vmatpush1.bf16.xpose.msra.mxu0 0
    %712 = vmatprep.subr.bf16.mxu0 0
    %713 = vmatpush1.bf16.xpose.msra.mxu0 0
    %714 = vmatprep.subr.bf16.mxu0 0
    %715 = vmatpush1.bf16.xpose.msra.mxu0 0
    %716 = vmatprep.subr.bf16.mxu0 0
    %717 = vmatpush1.bf16.xpose.msra.mxu0 0
    %718 = vmatprep.mubr.bf16.mxu0 0
    %719 = vmatmul.mubr.bf16.gmra.mrb[0].mxu0 %v681
    %v720 = vpop.f32.mrb[0].mxu0
    %v721 = vadd.f32 0.0, %v720
    %v722 = vpop.f32.mrb[0].mxu0
    %v723 = vpop.f32.mrb[0].mxu0
    %v724 = vpop.f32.mrb[0].mxu0
    %725 = vdwg.mxu0
    %726 = vrot.lane.b32.xlu0 %v211, 112
    %v727 = vpop.permute.xlu0 %726
    %728 = vrot.lane.b32.xlu0 %v211, 80
    %v729 = vpop.permute.xlu0 %728
    %v731 = vsel %vm214, %v727, 0
    %v734 = vsel %vm214, %v729, 0
    %736 = vmatprep.subr.bf16.mxu0 0
    %737 = vmatpush1.bf16.xpose.msra.mxu0 %v734
    %738 = vmatprep.subr.bf16.mxu0 0
    %739 = vmatpush1.bf16.xpose.msra.mxu0 0
    %740 = vmatprep.subr.bf16.mxu0 0
    %741 = vmatpush1.bf16.xpose.msra.mxu0 0
    %742 = vmatprep.subr.bf16.mxu0 0
    %743 = vmatpush1.bf16.xpose.msra.mxu0 0
    %744 = vmatprep.subr.bf16.mxu0 0
    %745 = vmatpush1.bf16.xpose.msra.mxu0 0
    %746 = vmatprep.subr.bf16.mxu0 0
    %747 = vmatpush1.bf16.xpose.msra.mxu0 0
    %748 = vmatprep.subr.bf16.mxu0 0
    %749 = vmatpush1.bf16.xpose.msra.mxu0 0
    %750 = vmatprep.subr.bf16.mxu0 0
    %751 = vmatpush1.bf16.xpose.msra.mxu0 0
    %752 = vmatprep.subr.bf16.mxu0 0
    %753 = vmatpush1.bf16.xpose.msra.mxu0 0
    %754 = vmatprep.subr.bf16.mxu0 0
    %755 = vmatpush1.bf16.xpose.msra.mxu0 0
    %756 = vmatprep.subr.bf16.mxu0 0
    %757 = vmatpush1.bf16.xpose.msra.mxu0 0
    %758 = vmatprep.subr.bf16.mxu0 0
    %759 = vmatpush1.bf16.xpose.msra.mxu0 0
    %760 = vmatprep.subr.bf16.mxu0 0
    %761 = vmatpush1.bf16.xpose.msra.mxu0 0
    %762 = vmatprep.subr.bf16.mxu0 0
    %763 = vmatpush1.bf16.xpose.msra.mxu0 0
    %764 = vmatprep.subr.bf16.mxu0 0
    %765 = vmatpush1.bf16.xpose.msra.mxu0 0
    %766 = vmatprep.subr.bf16.mxu0 0
    %767 = vmatpush1.bf16.xpose.msra.mxu0 0
    %768 = vmatprep.mubr.bf16.mxu0 0
    %769 = vmatmul.mubr.bf16.gmra.mrb[0].mxu0 %v731
    %v770 = vpop.f32.mrb[0].mxu0
    %v771 = vadd.f32 0.0, %v770
    %v772 = vpop.f32.mrb[0].mxu0
    %v773 = vpop.f32.mrb[0].mxu0
    %v774 = vpop.f32.mrb[0].mxu0
    %775 = vdwg.mxu0
    %v776 = vmul.f32 %v721, 0.35355338
    %v777 = vmul.f32 %v771, 0.35355338
    %v778 = vsel %vm214, %v776, -inf
    %779 = vmax.xlane.f32.xlu0 %v778
    %v780 = vpop.xlane.xlu0 %779
    %v781 = vsel %vm214, %v777, -inf
    %782 = vmax.xlane.f32.xlu0 %v781
    %v783 = vpop.xlane.xlu0 %782
    %v784 = vsub.f32 %v776, %v780
    %v785 = vsub.f32 %v777, %v783
    %v786 = vmul.f32 %v784, 1.442695
    %v787 = vpow.pop %v786
    %v788 = vmul.f32 %v785, 1.442695
    %v789 = vpow.pop %v788
    %v790 = vsel %vm214, %v787, 0.0
    %791 = vadd.xlane.f32.xlu0 %v790
    %v792 = vpop.xlane.xlu0 %791
    %v793 = vsel %vm214, %v789, 0.0
    %794 = vadd.xlane.f32.xlu0 %v793
    %v795 = vpop.xlane.xlu0 %794
    %v796 = vrcp.pop %v792
    %v797 = vrcp.pop %v795
    %v798 = vmul.f32 %v787, %v796
    %v799 = vmul.f32 %v789, %v797
    %v800 = vpack.c.bf16 %v798, %v798
    %v801 = vpack.c.bf16 %v799, %v799
    %802 = vrot.lane.b32.xlu0 %v210, 48
    %v803 = vpop.permute.xlu0 %802
    %v805 = vsel %vm214, %v800, 0
    %v808 = vsel %vm340, %v803, 0
    %810 = vmatprep.subr.bf16.mxu0 0
    %811 = vmatpush1.bf16.msra.mxu0 %v808
    %812 = vmatprep.subr.bf16.mxu0 0
    %813 = vmatpush1.bf16.msra.mxu0 0
    %814 = vmatprep.subr.bf16.mxu0 0
    %815 = vmatpush1.bf16.msra.mxu0 0
    %816 = vmatprep.subr.bf16.mxu0 0
    %817 = vmatpush1.bf16.msra.mxu0 0
    %818 = vmatprep.subr.bf16.mxu0 0
    %819 = vmatpush1.bf16.msra.mxu0 0
    %820 = vmatprep.subr.bf16.mxu0 0
    %821 = vmatpush1.bf16.msra.mxu0 0
    %822 = vmatprep.subr.bf16.mxu0 0
    %823 = vmatpush1.bf16.msra.mxu0 0
    %824 = vmatprep.subr.bf16.mxu0 0
    %825 = vmatpush1.bf16.msra.mxu0 0
    %826 = vmatprep.subr.bf16.mxu0 0
    %827 = vmatpush1.bf16.msra.mxu0 0
    %828 = vmatprep.subr.bf16.mxu0 0
    %829 = vmatpush1.bf16.msra.mxu0 0
    %830 = vmatprep.subr.bf16.mxu0 0
    %831 = vmatpush1.bf16.msra.mxu0 0
    %832 = vmatprep.subr.bf16.mxu0 0
    %833 = vmatpush1.bf16.msra.mxu0 0
    %834 = vmatprep.subr.bf16.mxu0 0
    %835 = vmatpush1.bf16.msra.mxu0 0
    %836 = vmatprep.subr.bf16.mxu0 0
    %837 = vmatpush1.bf16.msra.mxu0 0
    %838 = vmatprep.subr.bf16.mxu0 0
    %839 = vmatpush1.bf16.msra.mxu0 0
    %840 = vmatprep.subr.bf16.mxu0 0
    %841 = vmatpush1.bf16.msra.mxu0 0
    %842 = vmatprep.mubr.bf16.mxu0 0
    %843 = vmatmul.mubr.bf16.gmra.mrb[0].mxu0 %v805
    %v844 = vpop.f32.mrb[0].mxu0
    %v845 = vadd.f32 0.0, %v844
    %v846 = vpop.f32.mrb[0].mxu0
    %v847 = vpop.f32.mrb[0].mxu0
    %v848 = vpop.f32.mrb[0].mxu0
    %849 = vdwg.mxu0
    %850 = vrot.lane.b32.xlu0 %v211, 48
    %v851 = vpop.permute.xlu0 %850
    %v853 = vsel %vm214, %v801, 0
    %v856 = vsel %vm340, %v851, 0
    %858 = vmatprep.subr.bf16.mxu0 0
    %859 = vmatpush1.bf16.msra.mxu0 %v856
    %860 = vmatprep.subr.bf16.mxu0 0
    %861 = vmatpush1.bf16.msra.mxu0 0
    %862 = vmatprep.subr.bf16.mxu0 0
    %863 = vmatpush1.bf16.msra.mxu0 0
    %864 = vmatprep.subr.bf16.mxu0 0
    %865 = vmatpush1.bf16.msra.mxu0 0
    %866 = vmatprep.subr.bf16.mxu0 0
    %867 = vmatpush1.bf16.msra.mxu0 0
    %868 = vmatprep.subr.bf16.mxu0 0
    %869 = vmatpush1.bf16.msra.mxu0 0
    %870 = vmatprep.subr.bf16.mxu0 0
    %871 = vmatpush1.bf16.msra.mxu0 0
    %872 = vmatprep.subr.bf16.mxu0 0
    %873 = vmatpush1.bf16.msra.mxu0 0
    %874 = vmatprep.subr.bf16.mxu0 0
    %875 = vmatpush1.bf16.msra.mxu0 0
    %876 = vmatprep.subr.bf16.mxu0 0
    %877 = vmatpush1.bf16.msra.mxu0 0
    %878 = vmatprep.subr.bf16.mxu0 0
    %879 = vmatpush1.bf16.msra.mxu0 0
    %880 = vmatprep.subr.bf16.mxu0 0
    %881 = vmatpush1.bf16.msra.mxu0 0
    %882 = vmatprep.subr.bf16.mxu0 0
    %883 = vmatpush1.bf16.msra.mxu0 0
    %884 = vmatprep.subr.bf16.mxu0 0
    %885 = vmatpush1.bf16.msra.mxu0 0
    %886 = vmatprep.subr.bf16.mxu0 0
    %887 = vmatpush1.bf16.msra.mxu0 0
    %888 = vmatprep.subr.bf16.mxu0 0
    %889 = vmatpush1.bf16.msra.mxu0 0
    %890 = vmatprep.mubr.bf16.mxu0 0
    %891 = vmatmul.mubr.bf16.gmra.mrb[0].mxu0 %v853
    %v892 = vpop.f32.mrb[0].mxu0
    %v893 = vadd.f32 0.0, %v892
    %v894 = vpop.f32.mrb[0].mxu0
    %v895 = vpop.f32.mrb[0].mxu0
    %v896 = vpop.f32.mrb[0].mxu0
    %897 = vdwg.mxu0
    %v898 = vpack.c.bf16 %v845, %v845
    %v899 = vpack.c.bf16 %v893, %v893
    %v902 = vunpack.c.l.b16 %v898
    %v903 = vunpack.c.l.b16 %v899
    %v904 = vpack.c.b16 %v902, %v902
    %v905 = vpack.c.b16 %v903, %v903
    %906 = vrot.lane.b32.xlu0 %v904, 16
    %v907 = vpop.permute.xlu0 %906
    %908 = vrot.lane.b32.xlu0 %v905, 16
    %v909 = vpop.permute.xlu0 %908
    %vm912 = vcmask 191616
    %913 = vst.msk [vmem:[#allocation2] sm:$0xf] %vm912, %v907
    %914 = vst.msk [vmem:[#allocation2 + $0x4] sm:$0xf] %vm912, %v909
    %915 = vrot.lane.b32.xlu0 %v210, 104
    %v916 = vpop.permute.xlu0 %915
    %917 = vrot.lane.b32.xlu0 %v210, 72
    %v918 = vpop.permute.xlu0 %917
    %v920 = vsel %vm214, %v916, 0
    %v923 = vsel %vm214, %v918, 0
    %925 = vmatprep.subr.bf16.mxu0 0
    %926 = vmatpush1.bf16.xpose.msra.mxu0 %v923
    %927 = vmatprep.subr.bf16.mxu0 0
    %928 = vmatpush1.bf16.xpose.msra.mxu0 0
    %929 = vmatprep.subr.bf16.mxu0 0
    %930 = vmatpush1.bf16.xpose.msra.mxu0 0
    %931 = vmatprep.subr.bf16.mxu0 0
    %932 = vmatpush1.bf16.xpose.msra.mxu0 0
    %933 = vmatprep.subr.bf16.mxu0 0
    %934 = vmatpush1.bf16.xpose.msra.mxu0 0
    %935 = vmatprep.subr.bf16.mxu0 0
    %936 = vmatpush1.bf16.xpose.msra.mxu0 0
    %937 = vmatprep.subr.bf16.mxu0 0
    %938 = vmatpush1.bf16.xpose.msra.mxu0 0
    %939 = vmatprep.subr.bf16.mxu0 0
    %940 = vmatpush1.bf16.xpose.msra.mxu0 0
    %941 = vmatprep.subr.bf16.mxu0 0
    %942 = vmatpush1.bf16.xpose.msra.mxu0 0
    %943 = vmatprep.subr.bf16.mxu0 0
    %944 = vmatpush1.bf16.xpose.msra.mxu0 0
    %945 = vmatprep.subr.bf16.mxu0 0
    %946 = vmatpush1.bf16.xpose.msra.mxu0 0
    %947 = vmatprep.subr.bf16.mxu0 0
    %948 = vmatpush1.bf16.xpose.msra.mxu0 0
    %949 = vmatprep.subr.bf16.mxu0 0
    %950 = vmatpush1.bf16.xpose.msra.mxu0 0
    %951 = vmatprep.subr.bf16.mxu0 0
    %952 = vmatpush1.bf16.xpose.msra.mxu0 0
    %953 = vmatprep.subr.bf16.mxu0 0
    %954 = vmatpush1.bf16.xpose.msra.mxu0 0
    %955 = vmatprep.subr.bf16.mxu0 0
    %956 = vmatpush1.bf16.xpose.msra.mxu0 0
    %957 = vmatprep.mubr.bf16.mxu0 0
    %958 = vmatmul.mubr.bf16.gmra.mrb[0].mxu0 %v920
    %v959 = vpop.f32.mrb[0].mxu0
    %v960 = vadd.f32 0.0, %v959
    %v961 = vpop.f32.mrb[0].mxu0
    %v962 = vpop.f32.mrb[0].mxu0
    %v963 = vpop.f32.mrb[0].mxu0
    %964 = vdwg.mxu0
    %965 = vrot.lane.b32.xlu0 %v211, 104
    %v966 = vpop.permute.xlu0 %965
    %967 = vrot.lane.b32.xlu0 %v211, 72
    %v968 = vpop.permute.xlu0 %967
    %v970 = vsel %vm214, %v966, 0
    %v973 = vsel %vm214, %v968, 0
    %975 = vmatprep.subr.bf16.mxu0 0
    %976 = vmatpush1.bf16.xpose.msra.mxu0 %v973
    %977 = vmatprep.subr.bf16.mxu0 0
    %978 = vmatpush1.bf16.xpose.msra.mxu0 0
    %979 = vmatprep.subr.bf16.mxu0 0
    %980 = vmatpush1.bf16.xpose.msra.mxu0 0
    %981 = vmatprep.subr.bf16.mxu0 0
    %982 = vmatpush1.bf16.xpose.msra.mxu0 0
    %983 = vmatprep.subr.bf16.mxu0 0
    %984 = vmatpush1.bf16.xpose.msra.mxu0 0
    %985 = vmatprep.subr.bf16.mxu0 0
    %986 = vmatpush1.bf16.xpose.msra.mxu0 0
    %987 = vmatprep.subr.bf16.mxu0 0
    %988 = vmatpush1.bf16.xpose.msra.mxu0 0
    %989 = vmatprep.subr.bf16.mxu0 0
    %990 = vmatpush1.bf16.xpose.msra.mxu0 0
    %991 = vmatprep.subr.bf16.mxu0 0
    %992 = vmatpush1.bf16.xpose.msra.mxu0 0
    %993 = vmatprep.subr.bf16.mxu0 0
    %994 = vmatpush1.bf16.xpose.msra.mxu0 0
    %995 = vmatprep.subr.bf16.mxu0 0
    %996 = vmatpush1.bf16.xpose.msra.mxu0 0
    %997 = vmatprep.subr.bf16.mxu0 0
    %998 = vmatpush1.bf16.xpose.msra.mxu0 0
    %999 = vmatprep.subr.bf16.mxu0 0
    %1000 = vmatpush1.bf16.xpose.msra.mxu0 0
    %1001 = vmatprep.subr.bf16.mxu0 0
    %1002 = vmatpush1.bf16.xpose.msra.mxu0 0
    %1003 = vmatprep.subr.bf16.mxu0 0
    %1004 = vmatpush1.bf16.xpose.msra.mxu0 0
    %1005 = vmatprep.subr.bf16.mxu0 0
    %1006 = vmatpush1.bf16.xpose.msra.mxu0 0
    %1007 = vmatprep.mubr.bf16.mxu0 0
    %1008 = vmatmul.mubr.bf16.gmra.mrb[0].mxu0 %v970
    %v1009 = vpop.f32.mrb[0].mxu0
    %v1010 = vadd.f32 0.0, %v1009
    %v1011 = vpop.f32.mrb[0].mxu0
    %v1012 = vpop.f32.mrb[0].mxu0
    %v1013 = vpop.f32.mrb[0].mxu0
    %1014 = vdwg.mxu0
    %v1015 = vmul.f32 %v960, 0.35355338
    %v1016 = vmul.f32 %v1010, 0.35355338
    %v1017 = vsel %vm214, %v1015, -inf
    %1018 = vmax.xlane.f32.xlu0 %v1017
    %v1019 = vpop.xlane.xlu0 %1018
    %v1020 = vsel %vm214, %v1016, -inf
    %1021 = vmax.xlane.f32.xlu0 %v1020
    %v1022 = vpop.xlane.xlu0 %1021
    %v1023 = vsub.f32 %v1015, %v1019
    %v1024 = vsub.f32 %v1016, %v1022
    %v1025 = vmul.f32 %v1023, 1.442695
    %v1026 = vpow.pop %v1025
    %v1027 = vmul.f32 %v1024, 1.442695
    %v1028 = vpow.pop %v1027
    %v1029 = vsel %vm214, %v1026, 0.0
    %1030 = vadd.xlane.f32.xlu0 %v1029
    %v1031 = vpop.xlane.xlu0 %1030
    %v1032 = vsel %vm214, %v1028, 0.0
    %1033 = vadd.xlane.f32.xlu0 %v1032
    %v1034 = vpop.xlane.xlu0 %1033
    %v1035 = vrcp.pop %v1031
    %v1036 = vrcp.pop %v1034
    %v1037 = vmul.f32 %v1026, %v1035
    %v1038 = vmul.f32 %v1028, %v1036
    %v1039 = vpack.c.bf16 %v1037, %v1037
    %v1040 = vpack.c.bf16 %v1038, %v1038
    %1041 = vrot.lane.b32.xlu0 %v210, 40
    %v1042 = vpop.permute.xlu0 %1041
    %v1044 = vsel %vm214, %v1039, 0
    %v1047 = vsel %vm340, %v1042, 0
    %1049 = vmatprep.subr.bf16.mxu0 0
    %1050 = vmatpush1.bf16.msra.mxu0 %v1047
    %1051 = vmatprep.subr.bf16.mxu0 0
    %1052 = vmatpush1.bf16.msra.mxu0 0
    %1053 = vmatprep.subr.bf16.mxu0 0
    %1054 = vmatpush1.bf16.msra.mxu0 0
    %1055 = vmatprep.subr.bf16.mxu0 0
    %1056 = vmatpush1.bf16.msra.mxu0 0
    %1057 = vmatprep.subr.bf16.mxu0 0
    %1058 = vmatpush1.bf16.msra.mxu0 0
    %1059 = vmatprep.subr.bf16.mxu0 0
    %1060 = vmatpush1.bf16.msra.mxu0 0
    %1061 = vmatprep.subr.bf16.mxu0 0
    %1062 = vmatpush1.bf16.msra.mxu0 0
    %1063 = vmatprep.subr.bf16.mxu0 0
    %1064 = vmatpush1.bf16.msra.mxu0 0
    %1065 = vmatprep.subr.bf16.mxu0 0
    %1066 = vmatpush1.bf16.msra.mxu0 0
    %1067 = vmatprep.subr.bf16.mxu0 0
    %1068 = vmatpush1.bf16.msra.mxu0 0
    %1069 = vmatprep.subr.bf16.mxu0 0
    %1070 = vmatpush1.bf16.msra.mxu0 0
    %1071 = vmatprep.subr.bf16.mxu0 0
    %1072 = vmatpush1.bf16.msra.mxu0 0
    %1073 = vmatprep.subr.bf16.mxu0 0
    %1074 = vmatpush1.bf16.msra.mxu0 0
    %1075 = vmatprep.subr.bf16.mxu0 0
    %1076 = vmatpush1.bf16.msra.mxu0 0
    %1077 = vmatprep.subr.bf16.mxu0 0
    %1078 = vmatpush1.bf16.msra.mxu0 0
    %1079 = vmatprep.subr.bf16.mxu0 0
    %1080 = vmatpush1.bf16.msra.mxu0 0
    %1081 = vmatprep.mubr.bf16.mxu0 0
    %1082 = vmatmul.mubr.bf16.gmra.mrb[0].mxu0 %v1044
    %v1083 = vpop.f32.mrb[0].mxu0
    %v1084 = vadd.f32 0.0, %v1083
    %v1085 = vpop.f32.mrb[0].mxu0
    %v1086 = vpop.f32.mrb[0].mxu0
    %v1087 = vpop.f32.mrb[0].mxu0
    %1088 = vdwg.mxu0
    %1089 = vrot.lane.b32.xlu0 %v211, 40
    %v1090 = vpop.permute.xlu0 %1089
    %v1092 = vsel %vm214, %v1040, 0
    %v1095 = vsel %vm340, %v1090, 0
    %1097 = vmatprep.subr.bf16.mxu0 0
    %1098 = vmatpush1.bf16.msra.mxu0 %v1095
    %1099 = vmatprep.subr.bf16.mxu0 0
    %1100 = vmatpush1.bf16.msra.mxu0 0
    %1101 = vmatprep.subr.bf16.mxu0 0
    %1102 = vmatpush1.bf16.msra.mxu0 0
    %1103 = vmatprep.subr.bf16.mxu0 0
    %1104 = vmatpush1.bf16.msra.mxu0 0
    %1105 = vmatprep.subr.bf16.mxu0 0
    %1106 = vmatpush1.bf16.msra.mxu0 0
    %1107 = vmatprep.subr.bf16.mxu0 0
    %1108 = vmatpush1.bf16.msra.mxu0 0
    %1109 = vmatprep.subr.bf16.mxu0 0
    %1110 = vmatpush1.bf16.msra.mxu0 0
    %1111 = vmatprep.subr.bf16.mxu0 0
    %1112 = vmatpush1.bf16.msra.mxu0 0
    %1113 = vmatprep.subr.bf16.mxu0 0
    %1114 = vmatpush1.bf16.msra.mxu0 0
    %1115 = vmatprep.subr.bf16.mxu0 0
    %1116 = vmatpush1.bf16.msra.mxu0 0
    %1117 = vmatprep.subr.bf16.mxu0 0
    %1118 = vmatpush1.bf16.msra.mxu0 0
    %1119 = vmatprep.subr.bf16.mxu0 0
    %1120 = vmatpush1.bf16.msra.mxu0 0
    %1121 = vmatprep.subr.bf16.mxu0 0
    %1122 = vmatpush1.bf16.msra.mxu0 0
    %1123 = vmatprep.subr.bf16.mxu0 0
    %1124 = vmatpush1.bf16.msra.mxu0 0
    %1125 = vmatprep.subr.bf16.mxu0 0
    %1126 = vmatpush1.bf16.msra.mxu0 0
    %1127 = vmatprep.subr.bf16.mxu0 0
    %1128 = vmatpush1.bf16.msra.mxu0 0
    %1129 = vmatprep.mubr.bf16.mxu0 0
    %1130 = vmatmul.mubr.bf16.gmra.mrb[0].mxu0 %v1092
    %v1131 = vpop.f32.mrb[0].mxu0
    %v1132 = vadd.f32 0.0, %v1131
    %v1133 = vpop.f32.mrb[0].mxu0
    %v1134 = vpop.f32.mrb[0].mxu0
    %v1135 = vpop.f32.mrb[0].mxu0
    %1136 = vdwg.mxu0
    %v1137 = vpack.c.bf16 %v1084, %v1084
    %v1138 = vpack.c.bf16 %v1132, %v1132
    %v1141 = vunpack.c.l.b16 %v1137
    %v1142 = vunpack.c.l.b16 %v1138
    %v1143 = vpack.c.b16 %v1141, %v1141
    %v1144 = vpack.c.b16 %v1142, %v1142
    %1145 = vrot.lane.b32.xlu0 %v1143, 24
    %v1146 = vpop.permute.xlu0 %1145
    %1147 = vrot.lane.b32.xlu0 %v1144, 24
    %v1148 = vpop.permute.xlu0 %1147
    %vm1151 = vcmask 257216
    %1152 = vst.msk [vmem:[#allocation2] sm:$0xf] %vm1151, %v1146
    %1153 = vst.msk [vmem:[#allocation2 + $0x4] sm:$0xf] %vm1151, %v1148
    %v1154 = vld [vmem:[#allocation2] sm:$0xf]
    %v1155 = vld [vmem:[#allocation2 + $0x4] sm:$0xf]
    %v1156 = vld [vmem:[%s5] sm:$0xf]
    %v1157 = vld [vmem:[%s5 + $0x4] sm:$0xf]
    %v1158 = vld [vmem:[%s5 + $0x8] sm:$0xf]
    %v1159 = vld [vmem:[%s5 + $0xc] sm:$0xf]
    %v1160 = vld [vmem:[%s6] sm:$0x1]
    %v1162 = vlaneseq
    %v1163 = vshrl.u32 %v1162, 7
    %v1164 = vsub.s32 0, %v1163
    %v1165 = vrot.slane %v1160, %v1164
    %v1169 = vunpack.c.l.b16 %v1154
    %v1170 = vunpack.c.l.b16 %v1155
    %v1171 = vpack.c.b16 %v1170, %v1169
    %v1176 = vunpack.c.l.b16 %v1156
    %v1177 = vunpack.c.l.b16 %v1157
    %v1178 = vunpack.c.l.b16 %v1158
    %v1179 = vunpack.c.l.b16 %v1159
    %v1180 = vpack.c.b16 %v1177, %v1176
    %v1181 = vpack.c.b16 %v1179, %v1178
    %v1183 = vsel %vm50, %v1171, 0
    %v1186 = vsel %vm50, %v1180, 0
    %v1189 = vsel %vm50, %v1181, 0
    %1191 = vmatprep.subr.bf16.mxu0 0
    %1192 = vmatpush1.bf16.xpose.msra.mxu0 %v1186
    %1193 = vmatprep.subr.bf16.mxu0 0
    %1194 = vmatpush1.bf16.xpose.msra.mxu0 %v1189
    %1195 = vmatprep.subr.bf16.mxu0 0
    %1196 = vmatpush1.bf16.xpose.msra.mxu0 0
    %1197 = vmatprep.subr.bf16.mxu0 0
    %1198 = vmatpush1.bf16.xpose.msra.mxu0 0
    %1199 = vmatprep.subr.bf16.mxu0 0
    %1200 = vmatpush1.bf16.xpose.msra.mxu0 0
    %1201 = vmatprep.subr.bf16.mxu0 0
    %1202 = vmatpush1.bf16.xpose.msra.mxu0 0
    %1203 = vmatprep.subr.bf16.mxu0 0
    %1204 = vmatpush1.bf16.xpose.msra.mxu0 0
    %1205 = vmatprep.subr.bf16.mxu0 0
    %1206 = vmatpush1.bf16.xpose.msra.mxu0 0
    %1207 = vmatprep.subr.bf16.mxu0 0
    %1208 = vmatpush1.bf16.xpose.msra.mxu0 0
    %1209 = vmatprep.subr.bf16.mxu0 0
    %1210 = vmatpush1.bf16.xpose.msra.mxu0 0
    %1211 = vmatprep.subr.bf16.mxu0 0
    %1212 = vmatpush1.bf16.xpose.msra.mxu0 0
    %1213 = vmatprep.subr.bf16.mxu0 0
    %1214 = vmatpush1.bf16.xpose.msra.mxu0 0
    %1215 = vmatprep.subr.bf16.mxu0 0
    %1216 = vmatpush1.bf16.xpose.msra.mxu0 0
    %1217 = vmatprep.subr.bf16.mxu0 0
    %1218 = vmatpush1.bf16.xpose.msra.mxu0 0
    %1219 = vmatprep.subr.bf16.mxu0 0
    %1220 = vmatpush1.bf16.xpose.msra.mxu0 0
    %1221 = vmatprep.subr.bf16.mxu0 0
    %1222 = vmatpush1.bf16.xpose.msra.mxu0 0
    %1223 = vmatprep.mubr.bf16.mxu0 0
    %1224 = vmatmul.mubr.bf16.gmra.mrb[0].mxu0 %v1183
    %v1225 = vpop.f32.mrb[0].mxu0
    %v1226 = vadd.f32 %v1165, %v1225
    %v1227 = vpop.f32.mrb[0].mxu0
    %v1228 = vpop.f32.mrb[0].mxu0
    %v1229 = vadd.f32 %v1165, %v1228
    %v1230 = vpop.f32.mrb[0].mxu0
    %1231 = vdwg.mxu0
    %v1232 = vadd.f32 %v46, %v1226
    %v1233 = vadd.f32 %v47, %v1229
    %v1234 = vld [vmem:[%s7] sm:$0x1]
    %v1235 = vld [vmem:[%s8] sm:$0x1]
    %v1236 = vsel %vm50, %v1232, 0.0
    %1237 = vadd.xlane.f32.xlu0 %v1236
    %v1238 = vpop.xlane.xlu0 %1237
    %v1239 = vsel %vm50, %v1233, 0.0
    %1240 = vadd.xlane.f32.xlu0 %v1239
    %v1241 = vpop.xlane.xlu0 %1240
    %v1242 = vmul.f32 %v1238, %v57
    %v1243 = vmul.f32 %v1241, %v57
    %v1244 = vsub.f32 %v1232, %v1242
    %v1245 = vsub.f32 %v1233, %v1243
    %v1246 = vmul.f32 %v1244, %v1244
    %v1247 = vmul.f32 %v1245, %v1245
    %v1248 = vsel %vm50, %v1246, 0.0
    %1249 = vadd.xlane.f32.xlu0 %v1248
    %v1250 = vpop.xlane.xlu0 %1249
    %v1251 = vsel %vm50, %v1247, 0.0
    %1252 = vadd.xlane.f32.xlu0 %v1251
    %v1253 = vpop.xlane.xlu0 %1252
    %v1254 = vmul.f32 %v1250, %v57
    %v1255 = vmul.f32 %v1253, %v57
    %v1256 = vadd.f32 %v1254, 1e-05
    %v1257 = vadd.f32 %v1255, 1e-05
    %v1258 = vrsqrt.pop %v1256
    %v1259 = vrsqrt.pop %v1257
    %v1260 = vmul.f32 %v1244, %v1258
    %v1261 = vmul.f32 %v1245, %v1259
    %v1263 = vlaneseq
    %v1264 = vshrl.u32 %v1263, 7
    %v1265 = vsub.s32 0, %v1264
    %v1266 = vrot.slane %v1234, %v1265
    %v1268 = vmul.f32 %v1260, %v1266
    %v1269 = vmul.f32 %v1261, %v1266
    %v1271 = vlaneseq
    %v1272 = vshrl.u32 %v1271, 7
    %v1273 = vsub.s32 0, %v1272
    %v1274 = vrot.slane %v1235, %v1273
    %v1276 = vadd.f32 %v1268, %v1274
    %v1277 = vadd.f32 %v1269, %v1274
    %v1278 = vpack.c.bf16 %v1277, %v1276
    %v1279 = vld [vmem:[%s9] sm:$0xf]
    %v1280 = vld [vmem:[%s9 + $0x4] sm:$0xf]
    %v1281 = vld [vmem:[%s9 + $0x8] sm:$0xf]
    %v1282 = vld [vmem:[%s9 + $0xc] sm:$0xf]
    %v1283 = vld [vmem:[%s9 + $0x10] sm:$0xf]
    %v1284 = vld [vmem:[%s9 + $0x14] sm:$0xf]
    %v1285 = vld [vmem:[%s9 + $0x18] sm:$0xf]
    %v1286 = vld [vmem:[%s9 + $0x1c] sm:$0xf]
    %v1287 = vld [vmem:[%s9 + $0x20] sm:$0xf]
    %v1288 = vld [vmem:[%s9 + $0x24] sm:$0xf]
    %v1289 = vld [vmem:[%s9 + $0x28] sm:$0xf]
    %v1290 = vld [vmem:[%s9 + $0x2c] sm:$0xf]
    %v1291 = vld [vmem:[%s9 + $0x30] sm:$0xf]
    %v1292 = vld [vmem:[%s9 + $0x34] sm:$0xf]
    %v1293 = vld [vmem:[%s9 + $0x38] sm:$0xf]
    %v1294 = vld [vmem:[%s9 + $0x3c] sm:$0xf]
    %v1295 = vld [vmem:[%s10] sm:$0x1]
    %v1297 = vlaneseq
    %v1298 = vshrl.u32 %v1297, 7
    %v1299 = vsub.s32 0, %v1298
    %v1300 = vrot.slane %v1295, %v1299
    %v1318 = vunpack.c.l.b16 %v1279
    %v1319 = vunpack.c.l.b16 %v1280
    %v1320 = vunpack.c.l.b16 %v1281
    %v1321 = vunpack.c.l.b16 %v1282
    %v1322 = vunpack.c.l.b16 %v1283
    %v1323 = vunpack.c.l.b16 %v1284
    %v1324 = vunpack.c.l.b16 %v1285
    %v1325 = vunpack.c.l.b16 %v1286
    %v1326 = vunpack.c.l.b16 %v1287
    %v1327 = vunpack.c.l.b16 %v1288
    %v1328 = vunpack.c.l.b16 %v1289
    %v1329 = vunpack.c.l.b16 %v1290
    %v1330 = vunpack.c.l.b16 %v1291
    %v1331 = vunpack.c.l.b16 %v1292
    %v1332 = vunpack.c.l.b16 %v1293
    %v1333 = vunpack.c.l.b16 %v1294
    %v1334 = vpack.c.b16 %v1319, %v1318
    %v1335 = vpack.c.b16 %v1321, %v1320
    %v1336 = vpack.c.b16 %v1323, %v1322
    %v1337 = vpack.c.b16 %v1325, %v1324
    %v1338 = vpack.c.b16 %v1327, %v1326
    %v1339 = vpack.c.b16 %v1329, %v1328
    %v1340 = vpack.c.b16 %v1331, %v1330
    %v1341 = vpack.c.b16 %v1333, %v1332
    %v1343 = vsel %vm50, %v1278, 0
    %v1346 = vsel %vm50, %v1334, 0
    %v1349 = vsel %vm50, %v1335, 0
    %v1352 = vsel %vm50, %v1336, 0
    %v1355 = vsel %vm50, %v1337, 0
    %v1358 = vsel %vm50, %v1338, 0
    %v1361 = vsel %vm50, %v1339, 0
    %v1364 = vsel %vm50, %v1340, 0
    %v1367 = vsel %vm50, %v1341, 0
    %1369 = vmatprep.subr.bf16.mxu0 0
    %1370 = vmatpush1.bf16.xpose.msra.mxu0 %v1346
    %1371 = vmatprep.subr.bf16.mxu0 0
    %1372 = vmatpush1.bf16.xpose.msra.mxu0 %v1349
    %1373 = vmatprep.subr.bf16.mxu0 0
    %1374 = vmatpush1.bf16.xpose.msra.mxu0 %v1352
    %1375 = vmatprep.subr.bf16.mxu0 0
    %1376 = vmatpush1.bf16.xpose.msra.mxu0 %v1355
    %1377 = vmatprep.subr.bf16.mxu0 0
    %1378 = vmatpush1.bf16.xpose.msra.mxu0 %v1358
    %1379 = vmatprep.subr.bf16.mxu0 0
    %1380 = vmatpush1.bf16.xpose.msra.mxu0 %v1361
    %1381 = vmatprep.subr.bf16.mxu0 0
    %1382 = vmatpush1.bf16.xpose.msra.mxu0 %v1364
    %1383 = vmatprep.subr.bf16.mxu0 0
    %1384 = vmatpush1.bf16.xpose.msra.mxu0 %v1367
    %1385 = vmatprep.subr.bf16.mxu0 0
    %1386 = vmatpush1.bf16.xpose.msra.mxu0 0
    %1387 = vmatprep.subr.bf16.mxu0 0
    %1388 = vmatpush1.bf16.xpose.msra.mxu0 0
    %1389 = vmatprep.subr.bf16.mxu0 0
    %1390 = vmatpush1.bf16.xpose.msra.mxu0 0
    %1391 = vmatprep.subr.bf16.mxu0 0
    %1392 = vmatpush1.bf16.xpose.msra.mxu0 0
    %1393 = vmatprep.subr.bf16.mxu0 0
    %1394 = vmatpush1.bf16.xpose.msra.mxu0 0
    %1395 = vmatprep.subr.bf16.mxu0 0
    %1396 = vmatpush1.bf16.xpose.msra.mxu0 0
    %1397 = vmatprep.subr.bf16.mxu0 0
    %1398 = vmatpush1.bf16.xpose.msra.mxu0 0
    %1399 = vmatprep.subr.bf16.mxu0 0
    %1400 = vmatpush1.bf16.xpose.msra.mxu0 0
    %1401 = vmatprep.mubr.bf16.mxu0 0
    %1402 = vmatmul.mubr.bf16.gmra.mrb[0].mxu0 %v1343
    %v1403 = vpop.f32.mrb[0].mxu0
    %v1404 = vadd.f32 %v1300, %v1403
    %v1405 = vpop.f32.mrb[0].mxu0
    %v1406 = vpop.f32.mrb[0].mxu0
    %v1407 = vadd.f32 %v1300, %v1406
    %v1408 = vpop.f32.mrb[0].mxu0
    %1409 = vdwg.mxu0
    %v1410 = vmul.f32 %v1404, 1.702
    %v1411 = vmul.f32 %v1407, 1.702
    %v1412 = vxor.u32 %v1410, 2147483648
    %v1413 = vxor.u32 %v1411, 2147483648
    %v1414 = vmul.f32 %v1412, 1.442695
    %v1415 = vpow.pop %v1414
    %v1416 = vmul.f32 %v1413, 1.442695
    %v1417 = vpow.pop %v1416
    %v1418 = vadd.f32 %v1415, 1.0
    %v1419 = vadd.f32 %v1417, 1.0
    %v1420 = vrcp.pop %v1418
    %v1421 = vmul.f32 1.0, %v1420
    %v1422 = vrcp.pop %v1419
    %v1423 = vmul.f32 1.0, %v1422
    %v1424 = vmul.f32 %v1404, %v1421
    %v1425 = vmul.f32 %v1407, %v1423
    %v1426 = vpack.c.bf16 %v1425, %v1424
    %v1427 = vld [vmem:[%s11] sm:$0xf]
    %v1428 = vld [vmem:[%s11 + $0x4] sm:$0xf]
    %v1429 = vld [vmem:[%s11 + $0x8] sm:$0xf]
    %v1430 = vld [vmem:[%s11 + $0xc] sm:$0xf]
    %v1431 = vld [vmem:[%s12] sm:$0x1]
    %v1433 = vlaneseq
    %v1434 = vshrl.u32 %v1433, 7
    %v1435 = vsub.s32 0, %v1434
    %v1436 = vrot.slane %v1431, %v1435
    %v1442 = vunpack.c.l.b16 %v1427
    %v1443 = vunpack.c.l.b16 %v1428
    %v1444 = vunpack.c.l.b16 %v1429
    %v1445 = vunpack.c.l.b16 %v1430
    %v1446 = vpack.c.b16 %v1443, %v1442
    %v1447 = vpack.c.b16 %v1445, %v1444
    %1450 = vmatprep.subr.bf16.mxu0 0
    %1451 = vmatpush1.bf16.xpose.msra.mxu0 %v1446
    %1452 = vmatprep.subr.bf16.mxu0 0
    %1453 = vmatpush1.bf16.xpose.msra.mxu0 %v1447
    %1454 = vmatprep.subr.bf16.mxu0 0
    %1455 = vmatpush1.bf16.xpose.msra.mxu0 0
    %1456 = vmatprep.subr.bf16.mxu0 0
    %1457 = vmatpush1.bf16.xpose.msra.mxu0 0
    %1458 = vmatprep.subr.bf16.mxu0 0
    %1459 = vmatpush1.bf16.xpose.msra.mxu0 0
    %1460 = vmatprep.subr.bf16.mxu0 0
    %1461 = vmatpush1.bf16.xpose.msra.mxu0 0
    %1462 = vmatprep.subr.bf16.mxu0 0
    %1463 = vmatpush1.bf16.xpose.msra.mxu0 0
    %1464 = vmatprep.subr.bf16.mxu0 0
    %1465 = vmatpush1.bf16.xpose.msra.mxu0 0
    %1466 = vmatprep.subr.bf16.mxu0 0
    %1467 = vmatpush1.bf16.xpose.msra.mxu0 0
    %1468 = vmatprep.subr.bf16.mxu0 0
    %1469 = vmatpush1.bf16.xpose.msra.mxu0 0
    %1470 = vmatprep.subr.bf16.mxu0 0
    %1471 = vmatpush1.bf16.xpose.msra.mxu0 0
    %1472 = vmatprep.subr.bf16.mxu0 0
    %1473 = vmatpush1.bf16.xpose.msra.mxu0 0
    %1474 = vmatprep.subr.bf16.mxu0 0
    %1475 = vmatpush1.bf16.xpose.msra.mxu0 0
    %1476 = vmatprep.subr.bf16.mxu0 0
    %1477 = vmatpush1.bf16.xpose.msra.mxu0 0
    %1478 = vmatprep.subr.bf16.mxu0 0
    %1479 = vmatpush1.bf16.xpose.msra.mxu0 0
    %1480 = vmatprep.subr.bf16.mxu0 0
    %1481 = vmatpush1.bf16.xpose.msra.mxu0 0
    %1482 = vmatprep.mubr.bf16.mxu0 0
    %1483 = vmatmul.mubr.bf16.gmra.mrb[0].mxu0 %v1426
    %v1484 = vpop.f32.mrb[0].mxu0
    %v1485 = vadd.f32 %v1436, %v1484
    %v1486 = vpop.f32.mrb[0].mxu0
    %v1487 = vpop.f32.mrb[0].mxu0
    %v1488 = vadd.f32 %v1436, %v1487
    %v1489 = vpop.f32.mrb[0].mxu0
    %1490 = vdwg.mxu0
    %v1491 = vadd.f32 %v1232, %v1485
    %v1492 = vadd.f32 %v1233, %v1488
    %1493 = vst.msk [vmem:[#allocation3] sm:$0xff] %vm50, %v1491
    %1494 = vst.msk [vmem:[#allocation3 + $0x8] sm:$0xff] %vm50, %v1492
    // Predicated region
    $region54: #{tpu_custom_call.1} parent=1 // pred_check
      _
    $region55: #{tpu_custom_call.1} parent=1 // pred_check_branch
      %1496 = sbr.rel (0) target = $region57
    $region56: #{tpu_custom_call.1} parent=1 // pred_region
      %s1498 = ssub.s32 256, 256
      %1499 = vsyncadd [#allocation4], %s1498
      %s1500 = sshll.u32 [#allocation3], 4
      %s1501 = int_to_ptr.vmem [resolvable:$true] %s1500
      %1506 = dma.vmem_to_hbm [thread:$0]  %s1501, 256, %s13, [#allocation4], 128, 128, 8
    $region57: #{tpu_custom_call.1} parent=1 // pred_fallthru
      _
    // Predicated region
    $region58: #{tpu_custom_call.1} parent=1 // pred_check
      _
    $region59: #{tpu_custom_call.1} parent=1 // pred_check_branch
      %1508 = sbr.rel (0) target = $region61
    $region60: #{tpu_custom_call.1} parent=1 // pred_region
      %1509 = dma.done [#allocation4], 256
    $region61: #{tpu_custom_call.1} parent=1 // pred_fallthru
      _
    %1510 = vsyncpa [#allocation4], 1

// kernel: tpu_custom_call.1
$region0: #{tpu_custom_call.1}
  #allocation0 [shape = 'u32[]', space=smem, size = 0x4, offset = 0x4, fixed_abs, tag = 'smem constant byte address 0x4 - core index']
  #allocation1 [shape = 'u32[144,128]{1,0:T(1,128)}', space=vmem, size = 0x12000, scoped, tag = 'internal scratch']
  #allocation2 [shape = 'bf16[2,8,32]{2,1,0:T(8,128)(2,1)}', space=vmem, size = 0x1000, scoped, tag = 'scratch operand']
  %s0 = inlined_call_operand.vmem [shape: f32[2,8,32], index: 0, kind: input, shape index: {}]
  %s1 = inlined_call_operand.vmem [shape: f32[1,32], index: 1, kind: input, shape index: {}]
  %s2 = inlined_call_operand.vmem [shape: f32[1,32], index: 2, kind: input, shape index: {}]
  %s3 = inlined_call_operand.vmem [shape: bf16[96,32], index: 3, kind: input, shape index: {}]
  %s4 = inlined_call_operand.vmem [shape: f32[1,96], index: 4, kind: input, shape index: {}]
  %s5 = inlined_call_operand.vmem [shape: bf16[32,32], index: 5, kind: input, shape index: {}]
  %s6 = inlined_call_operand.vmem [shape: f32[1,32], index: 6, kind: input, shape index: {}]
  %s7 = inlined_call_operand.vmem [shape: f32[1,32], index: 7, kind: input, shape index: {}]
  %s8 = inlined_call_operand.vmem [shape: f32[1,32], index: 8, kind: input, shape index: {}]
  %s9 = inlined_call_operand.vmem [shape: bf16[128,32], index: 9, kind: input, shape index: {}]
  %s10 = inlined_call_operand.vmem [shape: f32[1,128], index: 10, kind: input, shape index: {}]
  %s11 = inlined_call_operand.vmem [shape: bf16[32,128], index: 11, kind: input, shape index: {}]
  %s12 = inlined_call_operand.vmem [shape: f32[1,32], index: 12, kind: input, shape index: {}]
  %s13 = inlined_call_operand.hbm [shape: f32[2,8,32], index: 13, kind: output, shape index: {}]
  %s14 = sld [smem:[#allocation0]]
  $region62: #{tpu_custom_call.1} parent=0
    _
  %s16 = ssub.s32 1, %s14
  %s17 = scalar_select 0, %s16, %s14
  $region1: #{tpu_custom_call.1} parent=0
    #allocation3 [shape = 'u8[8192]{0}', space=vmem, size = 0x2000, scoped, tag = 'output window, operand 0, single buffered']
    #allocation4 [shape = 's32[1]{0}', space=sflag, size = 0x4, scoped, tag = 'scoped memory for tpu_custom_call.1']
    %18 = vsyncpa [#allocation4], 0
    // Predicated region
    $region2: #{tpu_custom_call.1} parent=1 // pred_check
      _
    $region3: #{tpu_custom_call.1} parent=1 // pred_check_branch
      %20 = sbr.rel (0) target = $region5
    $region4: #{tpu_custom_call.1} parent=1 // pred_region
      _
    $region5: #{tpu_custom_call.1} parent=1 // pred_fallthru
      _
    // Predicated region
    $region6: #{tpu_custom_call.1} parent=1 // pred_check
      _
    $region7: #{tpu_custom_call.1} parent=1 // pred_check_branch
      %22 = sbr.rel (0) target = $region9
    $region8: #{tpu_custom_call.1} parent=1 // pred_region
      _
    $region9: #{tpu_custom_call.1} parent=1 // pred_fallthru
      _
    // Predicated region
    $region10: #{tpu_custom_call.1} parent=1 // pred_check
      _
    $region11: #{tpu_custom_call.1} parent=1 // pred_check_branch
      %24 = sbr.rel (0) target = $region13
    $region12: #{tpu_custom_call.1} parent=1 // pred_region
      _
    $region13: #{tpu_custom_call.1} parent=1 // pred_fallthru
      _
    // Predicated region
    $region14: #{tpu_custom_call.1} parent=1 // pred_check
      _
    $region15: #{tpu_custom_call.1} parent=1 // pred_check_branch
      %26 = sbr.rel (0) target = $region17
    $region16: #{tpu_custom_call.1} parent=1 // pred_region
      _
    $region17: #{tpu_custom_call.1} parent=1 // pred_fallthru
      _
    // Predicated region
    $region18: #{tpu_custom_call.1} parent=1 // pred_check
      _
    $region19: #{tpu_custom_call.1} parent=1 // pred_check_branch
      %28 = sbr.rel (0) target = $region21
    $region20: #{tpu_custom_call.1} parent=1 // pred_region
      _
    $region21: #{tpu_custom_call.1} parent=1 // pred_fallthru
      _
    // Predicated region
    $region22: #{tpu_custom_call.1} parent=1 // pred_check
      _
    $region23: #{tpu_custom_call.1} parent=1 // pred_check_branch
      %30 = sbr.rel (0) target = $region25
    $region24: #{tpu_custom_call.1} parent=1 // pred_region
      _
    $region25: #{tpu_custom_call.1} parent=1 // pred_fallthru
      _
    // Predicated region
    $region26: #{tpu_custom_call.1} parent=1 // pred_check
      _
    $region27: #{tpu_custom_call.1} parent=1 // pred_check_branch
      %32 = sbr.rel (0) target = $region29
    $region28: #{tpu_custom_call.1} parent=1 // pred_region
      _
    $region29: #{tpu_custom_call.1} parent=1 // pred_fallthru
      _
    // Predicated region
    $region30: #{tpu_custom_call.1} parent=1 // pred_check
      _
    $region31: #{tpu_custom_call.1} parent=1 // pred_check_branch
      %34 = sbr.rel (0) target = $region33
    $region32: #{tpu_custom_call.1} parent=1 // pred_region
      _
    $region33: #{tpu_custom_call.1} parent=1 // pred_fallthru
      _
    // Predicated region
    $region34: #{tpu_custom_call.1} parent=1 // pred_check
      _
    $region35: #{tpu_custom_call.1} parent=1 // pred_check_branch
      %36 = sbr.rel (0) target = $region37
    $region36: #{tpu_custom_call.1} parent=1 // pred_region
      _
    $region37: #{tpu_custom_call.1} parent=1 // pred_fallthru
      _
    // Predicated region
    $region38: #{tpu_custom_call.1} parent=1 // pred_check
      _
    $region39: #{tpu_custom_call.1} parent=1 // pred_check_branch
      %38 = sbr.rel (0) target = $region41
    $region40: #{tpu_custom_call.1} parent=1 // pred_region
      _
    $region41: #{tpu_custom_call.1} parent=1 // pred_fallthru
      _
    // Predicated region
    $region42: #{tpu_custom_call.1} parent=1 // pred_check
      _
    $region43: #{tpu_custom_call.1} parent=1 // pred_check_branch
      %40 = sbr.rel (0) target = $region45
    $region44: #{tpu_custom_call.1} parent=1 // pred_region
      _
    $region45: #{tpu_custom_call.1} parent=1 // pred_fallthru
      _
    // Predicated region
    $region46: #{tpu_custom_call.1} parent=1 // pred_check
      _
    $region47: #{tpu_custom_call.1} parent=1 // pred_check_branch
      %42 = sbr.rel (0) target = $region49
    $region48: #{tpu_custom_call.1} parent=1 // pred_region
      _
    $region49: #{tpu_custom_call.1} parent=1 // pred_fallthru
      _
    // Predicated region
    $region50: #{tpu_custom_call.1} parent=1 // pred_check
      _
    $region51: #{tpu_custom_call.1} parent=1 // pred_check_branch
      %44 = sbr.rel (0) target = $region53
    $region52: #{tpu_custom_call.1} parent=1 // pred_region
      _
    $region53: #{tpu_custom_call.1} parent=1 // pred_fallthru
      _
    %v46 = vld [vmem:[%s0] sm:$0xff]
    %v47 = vld [vmem:[%s0 + $0x8] sm:$0xff]
    %v48 = vld [vmem:[%s1] sm:$0x1]
    %v49 = vld [vmem:[%s2] sm:$0x1]
    %vm50 = vcmask 261120
    %v51 = vsel %vm50, %v46, 0.0
    %52 = vadd.xlane.f32.xlu0 %v51
    %v53 = vpop.xlane.xlu0 %52
    %v54 = vsel %vm50, %v47, 0.0
    %55 = vadd.xlane.f32.xlu0 %v54
    %v56 = vpop.xlane.xlu0 %55
    %v57 = vrcp.pop 32.0
    %v58 = vmul.f32 %v53, %v57
    %v59 = vmul.f32 %v56, %v57
    %v60 = vsub.f32 %v46, %v58
    %v61 = vsub.f32 %v47, %v59
    %v62 = vmul.f32 %v60, %v60
    %v63 = vmul.f32 %v61, %v61
    %v64 = vsel %vm50, %v62, 0.0
    %65 = vadd.xlane.f32.xlu0 %v64
    %v66 = vpop.xlane.xlu0 %65
    %v67 = vsel %vm50, %v63, 0.0
    %68 = vadd.xlane.f32.xlu0 %v67
    %v69 = vpop.xlane.xlu0 %68
    %v70 = vmul.f32 %v66, %v57
    %v71 = vmul.f32 %v69, %v57
    %v72 = vadd.f32 %v70, 1e-05
    %v73 = vadd.f32 %v71, 1e-05
    %v74 = vrsqrt.pop %v72
    %v75 = vrsqrt.pop %v73
    %v76 = vmul.f32 %v60, %v74
    %v77 = vmul.f32 %v61, %v75
    %v79 = vlaneseq
    %v80 = vshrl.u32 %v79, 7
    %v81 = vsub.s32 0, %v80
    %v82 = vrot.slane %v48, %v81
    %v84 = vmul.f32 %v76, %v82
    %v85 = vmul.f32 %v77, %v82
    %v87 = vlaneseq
    %v88 = vshrl.u32 %v87, 7
    %v89 = vsub.s32 0, %v88
    %v90 = vrot.slane %v49, %v89
    %v92 = vadd.f32 %v84, %v90
    %v93 = vadd.f32 %v85, %v90
    %v94 = vpack.c.bf16 %v93, %v92
    %v95 = vld [vmem:[%s3] sm:$0xf]
    %v96 = vld [vmem:[%s3 + $0x4] sm:$0xf]
    %v97 = vld [vmem:[%s3 + $0x8] sm:$0xf]
    %v98 = vld [vmem:[%s3 + $0xc] sm:$0xf]
    %v99 = vld [vmem:[%s3 + $0x10] sm:$0xf]
    %v100 = vld [vmem:[%s3 + $0x14] sm:$0xf]
    %v101 = vld [vmem:[%s3 + $0x18] sm:$0xf]
    %v102 = vld [vmem:[%s3 + $0x1c] sm:$0xf]
    %v103 = vld [vmem:[%s3 + $0x20] sm:$0xf]
    %v104 = vld [vmem:[%s3 + $0x24] sm:$0xf]
    %v105 = vld [vmem:[%s3 + $0x28] sm:$0xf]
    %v106 = vld [vmem:[%s3 + $0x2c] sm:$0xf]
    %v107 = vld [vmem:[%s4] sm:$0x1]
    %v109 = vlaneseq
    %v110 = vshrl.u32 %v109, 7
    %v111 = vsub.s32 0, %v110
    %v112 = vrot.slane %v107, %v111
    %v126 = vunpack.c.l.b16 %v95
    %v127 = vunpack.c.l.b16 %v96
    %v128 = vunpack.c.l.b16 %v97
    %v129 = vunpack.c.l.b16 %v98
    %v130 = vunpack.c.l.b16 %v99
    %v131 = vunpack.c.l.b16 %v100
    %v132 = vunpack.c.l.b16 %v101
    %v133 = vunpack.c.l.b16 %v102
    %v134 = vunpack.c.l.b16 %v103
    %v135 = vunpack.c.l.b16 %v104
    %v136 = vunpack.c.l.b16 %v105
    %v137 = vunpack.c.l.b16 %v106
    %v138 = vpack.c.b16 %v127, %v126
    %v139 = vpack.c.b16 %v129, %v128
    %v140 = vpack.c.b16 %v131, %v130
    %v141 = vpack.c.b16 %v133, %v132
    %v142 = vpack.c.b16 %v135, %v134
    %v143 = vpack.c.b16 %v137, %v136
    %v145 = vsel %vm50, %v94, 0
    %v148 = vsel %vm50, %v138, 0
    %v151 = vsel %vm50, %v139, 0
    %v154 = vsel %vm50, %v140, 0
    %v157 = vsel %vm50, %v141, 0
    %v160 = vsel %vm50, %v142, 0
    %v163 = vsel %vm50, %v143, 0
    %165 = vmatprep.subr.bf16.mxu0 0
    %166 = vmatpush1.bf16.xpose.msra.mxu0 %v148
    %167 = vmatprep.subr.bf16.mxu0 0
    %168 = vmatpush1.bf16.xpose.msra.mxu0 %v151
    %169 = vmatprep.subr.bf16.mxu0 0
    %170 = vmatpush1.bf16.xpose.msra.mxu0 %v154
    %171 = vmatprep.subr.bf16.mxu0 0
    %172 = vmatpush1.bf16.xpose.msra.mxu0 %v157
    %173 = vmatprep.subr.bf16.mxu0 0
    %174 = vmatpush1.bf16.xpose.msra.mxu0 %v160
    %175 = vmatprep.subr.bf16.mxu0 0
    %176 = vmatpush1.bf16.xpose.msra.mxu0 %v163
    %177 = vmatprep.subr.bf16.mxu0 0
    %178 = vmatpush1.bf16.xpose.msra.mxu0 0
    %179 = vmatprep.subr.bf16.mxu0 0
    %180 = vmatpush1.bf16.xpose.msra.mxu0 0
    %181 = vmatprep.subr.bf16.mxu0 0
    %182 = vmatpush1.bf16.xpose.msra.mxu0 0
    %183 = vmatprep.subr.bf16.mxu0 0
    %184 = vmatpush1.bf16.xpose.msra.mxu0 0
    %185 = vmatprep.subr.bf16.mxu0 0
    %186 = vmatpush1.bf16.xpose.msra.mxu0 0
    %187 = vmatprep.subr.bf16.mxu0 0
    %188 = vmatpush1.bf16.xpose.msra.mxu0 0
    %189 = vmatprep.subr.bf16.mxu0 0
    %190 = vmatpush1.bf16.xpose.msra.mxu0 0
    %191 = vmatprep.subr.bf16.mxu0 0
    %192 = vmatpush1.bf16.xpose.msra.mxu0 0
    %193 = vmatprep.subr.bf16.mxu0 0
    %194 = vmatpush1.bf16.xpose.msra.mxu0 0
    %195 = vmatprep.subr.bf16.mxu0 0
    %196 = vmatpush1.bf16.xpose.msra.mxu0 0
    %197 = vmatprep.mubr.bf16.mxu0 0
    %198 = vmatmul.mubr.bf16.gmra.mrb[0].mxu0 %v145
    %v199 = vpop.f32.mrb[0].mxu0
    %v200 = vadd.f32 %v112, %v199
    %v201 = vpop.f32.mrb[0].mxu0
    %v202 = vpop.f32.mrb[0].mxu0
    %v203 = vadd.f32 %v112, %v202
    %v204 = vpop.f32.mrb[0].mxu0
    %205 = vdwg.mxu0
    %v206 = vpack.c.bf16 %v203, %v200
    %v208 = vunpack.c.l.b16 %v206
    %v209 = vunpack.c.h.b16 %v206
    %v210 = vpack.c.b16 %v208, %v208
    %v211 = vpack.c.b16 %v209, %v209
    %212 = vrot.lane.b32.xlu0 %v210, 96
    %v213 = vpop.permute.xlu0 %212
    %vm214 = vcmask 64512
    %v216 = vsel %vm214, %v210, 0
    %v219 = vsel %vm214, %v213, 0
    %221 = vmatprep.subr.bf16.mxu0 0
    %222 = vmatpush1.bf16.xpose.msra.mxu0 %v219
    %223 = vmatprep.subr.bf16.mxu0 0
    %224 = vmatpush1.bf16.xpose.msra.mxu0 0
    %225 = vmatprep.subr.bf16.mxu0 0
    %226 = vmatpush1.bf16.xpose.msra.mxu0 0
    %227 = vmatprep.subr.bf16.mxu0 0
    %228 = vmatpush1.bf16.xpose.msra.mxu0 0
    %229 = vmatprep.subr.bf16.mxu0 0
    %230 = vmatpush1.bf16.xpose.msra.mxu0 0
    %231 = vmatprep.subr.bf16.mxu0 0
    %232 = vmatpush1.bf16.xpose.msra.mxu0 0
    %233 = vmatprep.subr.bf16.mxu0 0
    %234 = vmatpush1.bf16.xpose.msra.mxu0 0
    %235 = vmatprep.subr.bf16.mxu0 0
    %236 = vmatpush1.bf16.xpose.msra.mxu0 0
    %237 = vmatprep.subr.bf16.mxu0 0
    %238 = vmatpush1.bf16.xpose.msra.mxu0 0
    %239 = vmatprep.subr.bf16.mxu0 0
    %240 = vmatpush1.bf16.xpose.msra.mxu0 0
    %241 = vmatprep.subr.bf16.mxu0 0
    %242 = vmatpush1.bf16.xpose.msra.mxu0 0
    %243 = vmatprep.subr.bf16.mxu0 0
    %244 = vmatpush1.bf16.xpose.msra.mxu0 0
    %245 = vmatprep.subr.bf16.mxu0 0
    %246 = vmatpush1.bf16.xpose.msra.mxu0 0
    %247 = vmatprep.subr.bf16.mxu0 0
    %248 = vmatpush1.bf16.xpose.msra.mxu0 0
    %249 = vmatprep.subr.bf16.mxu0 0
    %250 = vmatpush1.bf16.xpose.msra.mxu0 0
    %251 = vmatprep.subr.bf16.mxu0 0
    %252 = vmatpush1.bf16.xpose.msra.mxu0 0
    %253 = vmatprep.mubr.bf16.mxu0 0
    %254 = vmatmul.mubr.bf16.gmra.mrb[0].mxu0 %v216
    %v255 = vpop.f32.mrb[0].mxu0
    %v256 = vadd.f32 0.0, %v255
    %v257 = vpop.f32.mrb[0].mxu0
    %v258 = vpop.f32.mrb[0].mxu0
    %v259 = vpop.f32.mrb[0].mxu0
    %260 = vdwg.mxu0
    %261 = vrot.lane.b32.xlu0 %v211, 96
    %v262 = vpop.permute.xlu0 %261
    %v264 = vsel %vm214, %v211, 0
    %v267 = vsel %vm214, %v262, 0
    %269 = vmatprep.subr.bf16.mxu0 0
    %270 = vmatpush1.bf16.xpose.msra.mxu0 %v267
    %271 = vmatprep.subr.bf16.mxu0 0
    %272 = vmatpush1.bf16.xpose.msra.mxu0 0
    %273 = vmatprep.subr.bf16.mxu0 0
    %274 = vmatpush1.bf16.xpose.msra.mxu0 0
    %275 = vmatprep.subr.bf16.mxu0 0
    %276 = vmatpush1.bf16.xpose.msra.mxu0 0
    %277 = vmatprep.subr.bf16.mxu0 0
    %278 = vmatpush1.bf16.xpose.msra.mxu0 0
    %279 = vmatprep.subr.bf16.mxu0 0
    %280 = vmatpush1.bf16.xpose.msra.mxu0 0
    %281 = vmatprep.subr.bf16.mxu0 0
    %282 = vmatpush1.bf16.xpose.msra.mxu0 0
    %283 = vmatprep.subr.bf16.mxu0 0
    %284 = vmatpush1.bf16.xpose.msra.mxu0 0
    %285 = vmatprep.subr.bf16.mxu0 0
    %286 = vmatpush1.bf16.xpose.msra.mxu0 0
    %287 = vmatprep.subr.bf16.mxu0 0
    %288 = vmatpush1.bf16.xpose.msra.mxu0 0
    %289 = vmatprep.subr.bf16.mxu0 0
    %290 = vmatpush1.bf16.xpose.msra.mxu0 0
    %291 = vmatprep.subr.bf16.mxu0 0
    %292 = vmatpush1.bf16.xpose.msra.mxu0 0
    %293 = vmatprep.subr.bf16.mxu0 0
    %294 = vmatpush1.bf16.xpose.msra.mxu0 0
    %295 = vmatprep.subr.bf16.mxu0 0
    %296 = vmatpush1.bf16.xpose.msra.mxu0 0
    %297 = vmatprep.subr.bf16.mxu0 0
    %298 = vmatpush1.bf16.xpose.msra.mxu0 0
    %299 = vmatprep.subr.bf16.mxu0 0
    %300 = vmatpush1.bf16.xpose.msra.mxu0 0
    %301 = vmatprep.mubr.bf16.mxu0 0
    %302 = vmatmul.mubr.bf16.gmra.mrb[0].mxu0 %v264
    %v303 = vpop.f32.mrb[0].mxu0
    %v304 = vadd.f32 0.0, %v303
    %v305 = vpop.f32.mrb[0].mxu0
    %v306 = vpop.f32.mrb[0].mxu0
    %v307 = vpop.f32.mrb[0].mxu0
    %308 = vdwg.mxu0
    %v309 = vmul.f32 %v256, 0.35355338
    %v310 = vmul.f32 %v304, 0.35355338
    %v311 = vsel %vm214, %v309, -inf
    %312 = vmax.xlane.f32.xlu0 %v311
    %v313 = vpop.xlane.xlu0 %312
    %v314 = vsel %vm214, %v310, -inf
    %315 = vmax.xlane.f32.xlu0 %v314
    %v316 = vpop.xlane.xlu0 %315
    %v317 = vsub.f32 %v309, %v313
    %v318 = vsub.f32 %v310, %v316
    %v319 = vmul.f32 %v317, 1.442695
    %v320 = vpow.pop %v319
    %v321 = vmul.f32 %v318, 1.442695
    %v322 = vpow.pop %v321
    %v323 = vsel %vm214, %v320, 0.0
    %324 = vadd.xlane.f32.xlu0 %v323
    %v325 = vpop.xlane.xlu0 %324
    %v326 = vsel %vm214, %v322, 0.0
    %327 = vadd.xlane.f32.xlu0 %v326
    %v328 = vpop.xlane.xlu0 %327
    %v329 = vrcp.pop %v325
    %v330 = vrcp.pop %v328
    %v331 = vmul.f32 %v320, %v329
    %v332 = vmul.f32 %v322, %v330
    %v333 = vpack.c.bf16 %v331, %v331
    %v334 = vpack.c.bf16 %v332, %v332
    %335 = vrot.lane.b32.xlu0 %v210, 64
    %v336 = vpop.permute.xlu0 %335
    %v338 = vsel %vm214, %v333, 0
    %vm340 = vcmask 1043456
    %v342 = vsel %vm340, %v336, 0
    %344 = vmatprep.subr.bf16.mxu0 0
    %345 = vmatpush1.bf16.msra.mxu0 %v342
    %346 = vmatprep.subr.bf16.mxu0 0
    %347 = vmatpush1.bf16.msra.mxu0 0
    %348 = vmatprep.subr.bf16.mxu0 0
    %349 = vmatpush1.bf16.msra.mxu0 0
    %350 = vmatprep.subr.bf16.mxu0 0
    %351 = vmatpush1.bf16.msra.mxu0 0
    %352 = vmatprep.subr.bf16.mxu0 0
    %353 = vmatpush1.bf16.msra.mxu0 0
    %354 = vmatprep.subr.bf16.mxu0 0
    %355 = vmatpush1.bf16.msra.mxu0 0
    %356 = vmatprep.subr.bf16.mxu0 0
    %357 = vmatpush1.bf16.msra.mxu0 0
    %358 = vmatprep.subr.bf16.mxu0 0
    %359 = vmatpush1.bf16.msra.mxu0 0
    %360 = vmatprep.subr.bf16.mxu0 0
    %361 = vmatpush1.bf16.msra.mxu0 0
    %362 = vmatprep.subr.bf16.mxu0 0
    %363 = vmatpush1.bf16.msra.mxu0 0
    %364 = vmatprep.subr.bf16.mxu0 0
    %365 = vmatpush1.bf16.msra.mxu0 0
    %366 = vmatprep.subr.bf16.mxu0 0
    %367 = vmatpush1.bf16.msra.mxu0 0
    %368 = vmatprep.subr.bf16.mxu0 0
    %369 = vmatpush1.bf16.msra.mxu0 0
    %370 = vmatprep.subr.bf16.mxu0 0
    %371 = vmatpush1.bf16.msra.mxu0 0
    %372 = vmatprep.subr.bf16.mxu0 0
    %373 = vmatpush1.bf16.msra.mxu0 0
    %374 = vmatprep.subr.bf16.mxu0 0
    %375 = vmatpush1.bf16.msra.mxu0 0
    %376 = vmatprep.mubr.bf16.mxu0 0
    %377 = vmatmul.mubr.bf16.gmra.mrb[0].mxu0 %v338
    %v378 = vpop.f32.mrb[0].mxu0
    %v379 = vadd.f32 0.0, %v378
    %v380 = vpop.f32.mrb[0].mxu0
    %v381 = vpop.f32.mrb[0].mxu0
    %v382 = vpop.f32.mrb[0].mxu0
    %383 = vdwg.mxu0
    %384 = vrot.lane.b32.xlu0 %v211, 64
    %v385 = vpop.permute.xlu0 %384
    %v387 = vsel %vm214, %v334, 0
    %v390 = vsel %vm340, %v385, 0
    %392 = vmatprep.subr.bf16.mxu0 0
    %393 = vmatpush1.bf16.msra.mxu0 %v390
    %394 = vmatprep.subr.bf16.mxu0 0
    %395 = vmatpush1.bf16.msra.mxu0 0
    %396 = vmatprep.subr.bf16.mxu0 0
    %397 = vmatpush1.bf16.msra.mxu0 0
    %398 = vmatprep.subr.bf16.mxu0 0
    %399 = vmatpush1.bf16.msra.mxu0 0
    %400 = vmatprep.subr.bf16.mxu0 0
    %401 = vmatpush1.bf16.msra.mxu0 0
    %402 = vmatprep.subr.bf16.mxu0 0
    %403 = vmatpush1.bf16.msra.mxu0 0
    %404 = vmatprep.subr.bf16.mxu0 0
    %405 = vmatpush1.bf16.msra.mxu0 0
    %406 = vmatprep.subr.bf16.mxu0 0
    %407 = vmatpush1.bf16.msra.mxu0 0
    %408 = vmatprep.subr.bf16.mxu0 0
    %409 = vmatpush1.bf16.msra.mxu0 0
    %410 = vmatprep.subr.bf16.mxu0 0
    %411 = vmatpush1.bf16.msra.mxu0 0
    %412 = vmatprep.subr.bf16.mxu0 0
    %413 = vmatpush1.bf16.msra.mxu0 0
    %414 = vmatprep.subr.bf16.mxu0 0
    %415 = vmatpush1.bf16.msra.mxu0 0
    %416 = vmatprep.subr.bf16.mxu0 0
    %417 = vmatpush1.bf16.msra.mxu0 0
    %418 = vmatprep.subr.bf16.mxu0 0
    %419 = vmatpush1.bf16.msra.mxu0 0
    %420 = vmatprep.subr.bf16.mxu0 0
    %421 = vmatpush1.bf16.msra.mxu0 0
    %422 = vmatprep.subr.bf16.mxu0 0
    %423 = vmatpush1.bf16.msra.mxu0 0
    %424 = vmatprep.mubr.bf16.mxu0 0
    %425 = vmatmul.mubr.bf16.gmra.mrb[0].mxu0 %v387
    %v426 = vpop.f32.mrb[0].mxu0
    %v427 = vadd.f32 0.0, %v426
    %v428 = vpop.f32.mrb[0].mxu0
    %v429 = vpop.f32.mrb[0].mxu0
    %v430 = vpop.f32.mrb[0].mxu0
    %431 = vdwg.mxu0
    %v432 = vpack.c.bf16 %v379, %v379
    %v433 = vpack.c.bf16 %v427, %v427
    %vm434 = vcmask 60416
    %435 = vst.msk [vmem:[#allocation2] sm:$0xf] %vm434, %v432
    %436 = vst.msk [vmem:[#allocation2 + $0x4] sm:$0xf] %vm434, %v433
    %437 = vrot.lane.b32.xlu0 %v210, 120
    %v438 = vpop.permute.xlu0 %437
    %439 = vrot.lane.b32.xlu0 %v210, 88
    %v440 = vpop.permute.xlu0 %439
    %v442 = vsel %vm214, %v438, 0
    %v445 = vsel %vm214, %v440, 0
    %447 = vmatprep.subr.bf16.mxu0 0
    %448 = vmatpush1.bf16.xpose.msra.mxu0 %v445
    %449 = vmatprep.subr.bf16.mxu0 0
    %450 = vmatpush1.bf16.xpose.msra.mxu0 0
    %451 = vmatprep.subr.bf16.mxu0 0
    %452 = vmatpush1.bf16.xpose.msra.mxu0 0
    %453 = vmatprep.subr.bf16.mxu0 0
    %454 = vmatpush1.bf16.xpose.msra.mxu0 0
    %455 = vmatprep.subr.bf16.mxu0 0
    %456 = vmatpush1.bf16.xpose.msra.mxu0 0
    %457 = vmatprep.subr.bf16.mxu0 0
    %458 = vmatpush1.bf16.xpose.msra.mxu0 0
    %459 = vmatprep.subr.bf16.mxu0 0
    %460 = vmatpush1.bf16.xpose.msra.mxu0 0
    %461 = vmatprep.subr.bf16.mxu0 0
    %462 = vmatpush1.bf16.xpose.msra.mxu0 0
    %463 = vmatprep.subr.bf16.mxu0 0
    %464 = vmatpush1.bf16.xpose.msra.mxu0 0
    %465 = vmatprep.subr.bf16.mxu0 0
    %466 = vmatpush1.bf16.xpose.msra.mxu0 0
    %467 = vmatprep.subr.bf16.mxu0 0
    %468 = vmatpush1.bf16.xpose.msra.mxu0 0
    %469 = vmatprep.subr.bf16.mxu0 0
    %470 = vmatpush1.bf16.xpose.msra.mxu0 0
    %471 = vmatprep.subr.bf16.mxu0 0
    %472 = vmatpush1.bf16.xpose.msra.mxu0 0
    %473 = vmatprep.subr.bf16.mxu0 0
    %474 = vmatpush1.bf16.xpose.msra.mxu0 0
    %475 = vmatprep.subr.bf16.mxu0 0
    %476 = vmatpush1.bf16.xpose.msra.mxu0 0
    %477 = vmatprep.subr.bf16.mxu0 0
    %478 = vmatpush1.bf16.xpose.msra.mxu0 0
    %479 = vmatprep.mubr.bf16.mxu0 0
    %480 = vmatmul.mubr.bf16.gmra.mrb[0].mxu0 %v442
    %v481 = vpop.f32.mrb[0].mxu0
    %v482 = vadd.f32 0.0, %v481
    %v483 = vpop.f32.mrb[0].mxu0
    %v484 = vpop.f32.mrb[0].mxu0
    %v485 = vpop.f32.mrb[0].mxu0
    %486 = vdwg.mxu0
    %487 = vrot.lane.b32.xlu0 %v211, 120
    %v488 = vpop.permute.xlu0 %487
    %489 = vrot.lane.b32.xlu0 %v211, 88
    %v490 = vpop.permute.xlu0 %489
    %v492 = vsel %vm214, %v488, 0
    %v495 = vsel %vm214, %v490, 0
    %497 = vmatprep.subr.bf16.mxu0 0
    %498 = vmatpush1.bf16.xpose.msra.mxu0 %v495
    %499 = vmatprep.subr.bf16.mxu0 0
    %500 = vmatpush1.bf16.xpose.msra.mxu0 0
    %501 = vmatprep.subr.bf16.mxu0 0
    %502 = vmatpush1.bf16.xpose.msra.mxu0 0
    %503 = vmatprep.subr.bf16.mxu0 0
    %504 = vmatpush1.bf16.xpose.msra.mxu0 0
    %505 = vmatprep.subr.bf16.mxu0 0
    %506 = vmatpush1.bf16.xpose.msra.mxu0 0
    %507 = vmatprep.subr.bf16.mxu0 0
    %508 = vmatpush1.bf16.xpose.msra.mxu0 0
    %509 = vmatprep.subr.bf16.mxu0 0
    %510 = vmatpush1.bf16.xpose.msra.mxu0 0
    %511 = vmatprep.subr.bf16.mxu0 0
    %512 = vmatpush1.bf16.xpose.msra.mxu0 0
    %513 = vmatprep.subr.bf16.mxu0 0
    %514 = vmatpush1.bf16.xpose.msra.mxu0 0
    %515 = vmatprep.subr.bf16.mxu0 0
    %516 = vmatpush1.bf16.xpose.msra.mxu0 0
    %517 = vmatprep.subr.bf16.mxu0 0
    %518 = vmatpush1.bf16.xpose.msra.mxu0 0
    %519 = vmatprep.subr.bf16.mxu0 0
    %520 = vmatpush1.bf16.xpose.msra.mxu0 0
    %521 = vmatprep.subr.bf16.mxu0 0
    %522 = vmatpush1.bf16.xpose.msra.mxu0 0
    %523 = vmatprep.subr.bf16.mxu0 0
    %524 = vmatpush1.bf16.xpose.msra.mxu0 0
    %525 = vmatprep.subr.bf16.mxu0 0
    %526 = vmatpush1.bf16.xpose.msra.mxu0 0
    %527 = vmatprep.subr.bf16.mxu0 0
    %528 = vmatpush1.bf16.xpose.msra.mxu0 0
    %529 = vmatprep.mubr.bf16.mxu0 0
    %530 = vmatmul.mubr.bf16.gmra.mrb[0].mxu0 %v492
    %v531 = vpop.f32.mrb[0].mxu0
    %v532 = vadd.f32 0.0, %v531
    %v533 = vpop.f32.mrb[0].mxu0
    %v534 = vpop.f32.mrb[0].mxu0
    %v535 = vpop.f32.mrb[0].mxu0
    %536 = vdwg.mxu0
    %v537 = vmul.f32 %v482, 0.35355338
    %v538 = vmul.f32 %v532, 0.35355338
    %v539 = vsel %vm214, %v537, -inf
    %540 = vmax.xlane.f32.xlu0 %v539
    %v541 = vpop.xlane.xlu0 %540
    %v542 = vsel %vm214, %v538, -inf
    %543 = vmax.xlane.f32.xlu0 %v542
    %v544 = vpop.xlane.xlu0 %543
    %v545 = vsub.f32 %v537, %v541
    %v546 = vsub.f32 %v538, %v544
    %v547 = vmul.f32 %v545, 1.442695
    %v548 = vpow.pop %v547
    %v549 = vmul.f32 %v546, 1.442695
    %v550 = vpow.pop %v549
    %v551 = vsel %vm214, %v548, 0.0
    %552 = vadd.xlane.f32.xlu0 %v551
    %v553 = vpop.xlane.xlu0 %552
    %v554 = vsel %vm214, %v550, 0.0
    %555 = vadd.xlane.f32.xlu0 %v554
    %v556 = vpop.xlane.xlu0 %555
    %v557 = vrcp.pop %v553
    %v558 = vrcp.pop %v556
    %v559 = vmul.f32 %v548, %v557
    %v560 = vmul.f32 %v550, %v558
    %v561 = vpack.c.bf16 %v559, %v559
    %v562 = vpack.c.bf16 %v560, %v560
    %563 = vrot.lane.b32.xlu0 %v210, 56
    %v564 = vpop.permute.xlu0 %563
    %v566 = vsel %vm214, %v561, 0
    %v569 = vsel %vm340, %v564, 0
    %571 = vmatprep.subr.bf16.mxu0 0
    %572 = vmatpush1.bf16.msra.mxu0 %v569
    %573 = vmatprep.subr.bf16.mxu0 0
    %574 = vmatpush1.bf16.msra.mxu0 0
    %575 = vmatprep.subr.bf16.mxu0 0
    %576 = vmatpush1.bf16.msra.mxu0 0
    %577 = vmatprep.subr.bf16.mxu0 0
    %578 = vmatpush1.bf16.msra.mxu0 0
    %579 = vmatprep.subr.bf16.mxu0 0
    %580 = vmatpush1.bf16.msra.mxu0 0
    %581 = vmatprep.subr.bf16.mxu0 0
    %582 = vmatpush1.bf16.msra.mxu0 0
    %583 = vmatprep.subr.bf16.mxu0 0
    %584 = vmatpush1.bf16.msra.mxu0 0
    %585 = vmatprep.subr.bf16.mxu0 0
    %586 = vmatpush1.bf16.msra.mxu0 0
    %587 = vmatprep.subr.bf16.mxu0 0
    %588 = vmatpush1.bf16.msra.mxu0 0
    %589 = vmatprep.subr.bf16.mxu0 0
    %590 = vmatpush1.bf16.msra.mxu0 0
    %591 = vmatprep.subr.bf16.mxu0 0
    %592 = vmatpush1.bf16.msra.mxu0 0
    %593 = vmatprep.subr.bf16.mxu0 0
    %594 = vmatpush1.bf16.msra.mxu0 0
    %595 = vmatprep.subr.bf16.mxu0 0
    %596 = vmatpush1.bf16.msra.mxu0 0
    %597 = vmatprep.subr.bf16.mxu0 0
    %598 = vmatpush1.bf16.msra.mxu0 0
    %599 = vmatprep.subr.bf16.mxu0 0
    %600 = vmatpush1.bf16.msra.mxu0 0
    %601 = vmatprep.subr.bf16.mxu0 0
    %602 = vmatpush1.bf16.msra.mxu0 0
    %603 = vmatprep.mubr.bf16.mxu0 0
    %604 = vmatmul.mubr.bf16.gmra.mrb[0].mxu0 %v566
    %v605 = vpop.f32.mrb[0].mxu0
    %v606 = vadd.f32 0.0, %v605
    %v607 = vpop.f32.mrb[0].mxu0
    %v608 = vpop.f32.mrb[0].mxu0
    %v609 = vpop.f32.mrb[0].mxu0
    %610 = vdwg.mxu0
    %611 = vrot.lane.b32.xlu0 %v211, 56
    %v612 = vpop.permute.xlu0 %611
    %v614 = vsel %vm214, %v562, 0
    %v617 = vsel %vm340, %v612, 0
    %619 = vmatprep.subr.bf16.mxu0 0
    %620 = vmatpush1.bf16.msra.mxu0 %v617
    %621 = vmatprep.subr.bf16.mxu0 0
    %622 = vmatpush1.bf16.msra.mxu0 0
    %623 = vmatprep.subr.bf16.mxu0 0
    %624 = vmatpush1.bf16.msra.mxu0 0
    %625 = vmatprep.subr.bf16.mxu0 0
    %626 = vmatpush1.bf16.msra.mxu0 0
    %627 = vmatprep.subr.bf16.mxu0 0
    %628 = vmatpush1.bf16.msra.mxu0 0
    %629 = vmatprep.subr.bf16.mxu0 0
    %630 = vmatpush1.bf16.msra.mxu0 0
    %631 = vmatprep.subr.bf16.mxu0 0
    %632 = vmatpush1.bf16.msra.mxu0 0
    %633 = vmatprep.subr.bf16.mxu0 0
    %634 = vmatpush1.bf16.msra.mxu0 0
    %635 = vmatprep.subr.bf16.mxu0 0
    %636 = vmatpush1.bf16.msra.mxu0 0
    %637 = vmatprep.subr.bf16.mxu0 0
    %638 = vmatpush1.bf16.msra.mxu0 0
    %639 = vmatprep.subr.bf16.mxu0 0
    %640 = vmatpush1.bf16.msra.mxu0 0
    %641 = vmatprep.subr.bf16.mxu0 0
    %642 = vmatpush1.bf16.msra.mxu0 0
    %643 = vmatprep.subr.bf16.mxu0 0
    %644 = vmatpush1.bf16.msra.mxu0 0
    %645 = vmatprep.subr.bf16.mxu0 0
    %646 = vmatpush1.bf16.msra.mxu0 0
    %647 = vmatprep.subr.bf16.mxu0 0
    %648 = vmatpush1.bf16.msra.mxu0 0
    %649 = vmatprep.subr.bf16.mxu0 0
    %650 = vmatpush1.bf16.msra.mxu0 0
    %651 = vmatprep.mubr.bf16.mxu0 0
    %652 = vmatmul.mubr.bf16.gmra.mrb[0].mxu0 %v614
    %v653 = vpop.f32.mrb[0].mxu0
    %v654 = vadd.f32 0.0, %v653
    %v655 = vpop.f32.mrb[0].mxu0
    %v656 = vpop.f32.mrb[0].mxu0
    %v657 = vpop.f32.mrb[0].mxu0
    %658 = vdwg.mxu0
    %v659 = vpack.c.bf16 %v606, %v606
    %v660 = vpack.c.bf16 %v654, %v654
    %v663 = vunpack.c.l.b16 %v659
    %v664 = vunpack.c.l.b16 %v660
    %v665 = vpack.c.b16 %v663, %v663
    %v666 = vpack.c.b16 %v664, %v664
    %667 = vrot.lane.b32.xlu0 %v665, 8
    %v668 = vpop.permute.xlu0 %667
    %669 = vrot.lane.b32.xlu0 %v666, 8
    %v670 = vpop.permute.xlu0 %669
    %vm673 = vcmask 126016
    %674 = vst.msk [vmem:[#allocation2] sm:$0xf] %vm673, %v668
    %675 = vst.msk [vmem:[#allocation2 + $0x4] sm:$0xf] %vm673, %v670
    %676 = vrot.lane.b32.xlu0 %v210, 112
    %v677 = vpop.permute.xlu0 %676
    %678 = vrot.lane.b32.xlu0 %v210, 80
    %v679 = vpop.permute.xlu0 %678
    %v681 = vsel %vm214, %v677, 0
    %v684 = vsel %vm214, %v679, 0
    %686 = vmatprep.subr.bf16.mxu0 0
    %687 = vmatpush1.bf16.xpose.msra.mxu0 %v684
    %688 = vmatprep.subr.bf16.mxu0 0
    %689 = vmatpush1.bf16.xpose.msra.mxu0 0
    %690 = vmatprep.subr.bf16.mxu0 0
    %691 = vmatpush1.bf16.xpose.msra.mxu0 0
    %692 = vmatprep.subr.bf16.mxu0 0
    %693 = vmatpush1.bf16.xpose.msra.mxu0 0
    %694 = vmatprep.subr.bf16.mxu0 0
    %695 = vmatpush1.bf16.xpose.msra.mxu0 0
    %696 = vmatprep.subr.bf16.mxu0 0
    %697 = vmatpush1.bf16.xpose.msra.mxu0 0
    %698 = vmatprep.subr.bf16.mxu0 0
    %699 = vmatpush1.bf16.xpose.msra.mxu0 0
    %700 = vmatprep.subr.bf16.mxu0 0
    %701 = vmatpush1.bf16.xpose.msra.mxu0 0
    %702 = vmatprep.subr.bf16.mxu0 0
    %703 = vmatpush1.bf16.xpose.msra.mxu0 0
    %704 = vmatprep.subr.bf16.mxu0 0
    %705 = vmatpush1.bf16.xpose.msra.mxu0 0
    %706 = vmatprep.subr.bf16.mxu0 0
    %707 = vmatpush1.bf16.xpose.msra.mxu0 0
    %708 = vmatprep.subr.bf16.mxu0 0
    %709 = vmatpush1.bf16.xpose.msra.mxu0 0
    %710 = vmatprep.subr.bf16.mxu0 0
    %711 = vmatpush1.bf16.xpose.msra.mxu0 0
    %712 = vmatprep.subr.bf16.mxu0 0
    %713 = vmatpush1.bf16.xpose.msra.mxu0 0
    %714 = vmatprep.subr.bf16.mxu0 0
    %715 = vmatpush1.bf16.xpose.msra.mxu0 0
    %716 = vmatprep.subr.bf16.mxu0 0
    %717 = vmatpush1.bf16.xpose.msra.mxu0 0
    %718 = vmatprep.mubr.bf16.mxu0 0
    %719 = vmatmul.mubr.bf16.gmra.mrb[0].mxu0 %v681
    %v720 = vpop.f32.mrb[0].mxu0
    %v721 = vadd.f32 0.0, %v720
    %v722 = vpop.f32.mrb[0].mxu0
    %v723 = vpop.f32.mrb[0].mxu0
    %v724 = vpop.f32.mrb[0].mxu0
    %725 = vdwg.mxu0
    %726 = vrot.lane.b32.xlu0 %v211, 112
    %v727 = vpop.permute.xlu0 %726
    %728 = vrot.lane.b32.xlu0 %v211, 80
    %v729 = vpop.permute.xlu0 %728
    %v731 = vsel %vm214, %v727, 0
    %v734 = vsel %vm214, %v729, 0
    %736 = vmatprep.subr.bf16.mxu0 0
    %737 = vmatpush1.bf16.xpose.msra.mxu0 %v734
    %738 = vmatprep.subr.bf16.mxu0 0
    %739 = vmatpush1.bf16.xpose.msra.mxu0 0
    %740 = vmatprep.subr.bf16.mxu0 0
    %741 = vmatpush1.bf16.xpose.msra.mxu0 0
    %742 = vmatprep.subr.bf16.mxu0 0
    %743 = vmatpush1.bf16.xpose.msra.mxu0 0
    %744 = vmatprep.subr.bf16.mxu0 0
    %745 = vmatpush1.bf16.xpose.msra.mxu0 0
    %746 = vmatprep.subr.bf16.mxu0 0
    %747 = vmatpush1.bf16.xpose.msra.mxu0 0
    %748 = vmatprep.subr.bf16.mxu0 0
    %749 = vmatpush1.bf16.xpose.msra.mxu0 0
    %750 = vmatprep.subr.bf16.mxu0 0
    %751 = vmatpush1.bf16.xpose.msra.mxu0 0
    %752 = vmatprep.subr.bf16.mxu0 0
    %753 = vmatpush1.bf16.xpose.msra.mxu0 0
    %754 = vmatprep.subr.bf16.mxu0 0
    %755 = vmatpush1.bf16.xpose.msra.mxu0 0
    %756 = vmatprep.subr.bf16.mxu0 0
    %757 = vmatpush1.bf16.xpose.msra.mxu0 0
    %758 = vmatprep.subr.bf16.mxu0 0
    %759 = vmatpush1.bf16.xpose.msra.mxu0 0
    %760 = vmatprep.subr.bf16.mxu0 0
    %761 = vmatpush1.bf16.xpose.msra.mxu0 0
    %762 = vmatprep.subr.bf16.mxu0 0
    %763 = vmatpush1.bf16.xpose.msra.mxu0 0
    %764 = vmatprep.subr.bf16.mxu0 0
    %765 = vmatpush1.bf16.xpose.msra.mxu0 0
    %766 = vmatprep.subr.bf16.mxu0 0
    %767 = vmatpush1.bf16.xpose.msra.mxu0 0
    %768 = vmatprep.mubr.bf16.mxu0 0
    %769 = vmatmul.mubr.bf16.gmra.mrb[0].mxu0 %v731
    %v770 = vpop.f32.mrb[0].mxu0
    %v771 = vadd.f32 0.0, %v770
    %v772 = vpop.f32.mrb[0].mxu0
    %v773 = vpop.f32.mrb[0].mxu0
    %v774 = vpop.f32.mrb[0].mxu0
    %775 = vdwg.mxu0
    %v776 = vmul.f32 %v721, 0.35355338
    %v777 = vmul.f32 %v771, 0.35355338
    %v778 = vsel %vm214, %v776, -inf
    %779 = vmax.xlane.f32.xlu0 %v778
    %v780 = vpop.xlane.xlu0 %779
    %v781 = vsel %vm214, %v777, -inf
    %782 = vmax.xlane.f32.xlu0 %v781
    %v783 = vpop.xlane.xlu0 %782
    %v784 = vsub.f32 %v776, %v780
    %v785 = vsub.f32 %v777, %v783
    %v786 = vmul.f32 %v784, 1.442695
    %v787 = vpow.pop %v786
    %v788 = vmul.f32 %v785, 1.442695
    %v789 = vpow.pop %v788
    %v790 = vsel %vm214, %v787, 0.0
    %791 = vadd.xlane.f32.xlu0 %v790
    %v792 = vpop.xlane.xlu0 %791
    %v793 = vsel %vm214, %v789, 0.0
    %794 = vadd.xlane.f32.xlu0 %v793
    %v795 = vpop.xlane.xlu0 %794
    %v796 = vrcp.pop %v792
    %v797 = vrcp.pop %v795
    %v798 = vmul.f32 %v787, %v796
    %v799 = vmul.f32 %v789, %v797
    %v800 = vpack.c.bf16 %v798, %v798
    %v801 = vpack.c.bf16 %v799, %v799
    %802 = vrot.lane.b32.xlu0 %v210, 48
    %v803 = vpop.permute.xlu0 %802
    %v805 = vsel %vm214, %v800, 0
    %v808 = vsel %vm340, %v803, 0
    %810 = vmatprep.subr.bf16.mxu0 0
    %811 = vmatpush1.bf16.msra.mxu0 %v808
    %812 = vmatprep.subr.bf16.mxu0 0
    %813 = vmatpush1.bf16.msra.mxu0 0
    %814 = vmatprep.subr.bf16.mxu0 0
    %815 = vmatpush1.bf16.msra.mxu0 0
    %816 = vmatprep.subr.bf16.mxu0 0
    %817 = vmatpush1.bf16.msra.mxu0 0
    %818 = vmatprep.subr.bf16.mxu0 0
    %819 = vmatpush1.bf16.msra.mxu0 0
    %820 = vmatprep.subr.bf16.mxu0 0
    %821 = vmatpush1.bf16.msra.mxu0 0
    %822 = vmatprep.subr.bf16.mxu0 0
    %823 = vmatpush1.bf16.msra.mxu0 0
    %824 = vmatprep.subr.bf16.mxu0 0
    %825 = vmatpush1.bf16.msra.mxu0 0
    %826 = vmatprep.subr.bf16.mxu0 0
    %827 = vmatpush1.bf16.msra.mxu0 0
    %828 = vmatprep.subr.bf16.mxu0 0
    %829 = vmatpush1.bf16.msra.mxu0 0
    %830 = vmatprep.subr.bf16.mxu0 0
    %831 = vmatpush1.bf16.msra.mxu0 0
    %832 = vmatprep.subr.bf16.mxu0 0
    %833 = vmatpush1.bf16.msra.mxu0 0
    %834 = vmatprep.subr.bf16.mxu0 0
    %835 = vmatpush1.bf16.msra.mxu0 0
    %836 = vmatprep.subr.bf16.mxu0 0
    %837 = vmatpush1.bf16.msra.mxu0 0
    %838 = vmatprep.subr.bf16.mxu0 0
    %839 = vmatpush1.bf16.msra.mxu0 0
    %840 = vmatprep.subr.bf16.mxu0 0
    %841 = vmatpush1.bf16.msra.mxu0 0
    %842 = vmatprep.mubr.bf16.mxu0 0
    %843 = vmatmul.mubr.bf16.gmra.mrb[0].mxu0 %v805
    %v844 = vpop.f32.mrb[0].mxu0
    %v845 = vadd.f32 0.0, %v844
    %v846 = vpop.f32.mrb[0].mxu0
    %v847 = vpop.f32.mrb[0].mxu0
    %v848 = vpop.f32.mrb[0].mxu0
    %849 = vdwg.mxu0
    %850 = vrot.lane.b32.xlu0 %v211, 48
    %v851 = vpop.permute.xlu0 %850
    %v853 = vsel %vm214, %v801, 0
    %v856 = vsel %vm340, %v851, 0
    %858 = vmatprep.subr.bf16.mxu0 0
    %859 = vmatpush1.bf16.msra.mxu0 %v856
    %860 = vmatprep.subr.bf16.mxu0 0
    %861 = vmatpush1.bf16.msra.mxu0 0
    %862 = vmatprep.subr.bf16.mxu0 0
    %863 = vmatpush1.bf16.msra.mxu0 0
    %864 = vmatprep.subr.bf16.mxu0 0
    %865 = vmatpush1.bf16.msra.mxu0 0
    %866 = vmatprep.subr.bf16.mxu0 0
    %867 = vmatpush1.bf16.msra.mxu0 0
    %868 = vmatprep.subr.bf16.mxu0 0
    %869 = vmatpush1.bf16.msra.mxu0 0
    %870 = vmatprep.subr.bf16.mxu0 0
    %871 = vmatpush1.bf16.msra.mxu0 0
    %872 = vmatprep.subr.bf16.mxu0 0
    %873 = vmatpush1.bf16.msra.mxu0 0
    %874 = vmatprep.subr.bf16.mxu0 0
    %875 = vmatpush1.bf16.msra.mxu0 0
    %876 = vmatprep.subr.bf16.mxu0 0
    %877 = vmatpush1.bf16.msra.mxu0 0
    %878 = vmatprep.subr.bf16.mxu0 0
    %879 = vmatpush1.bf16.msra.mxu0 0
    %880 = vmatprep.subr.bf16.mxu0 0
    %881 = vmatpush1.bf16.msra.mxu0 0
    %882 = vmatprep.subr.bf16.mxu0 0
    %883 = vmatpush1.bf16.msra.mxu0 0
    %884 = vmatprep.subr.bf16.mxu0 0
    %885 = vmatpush1.bf16.msra.mxu0 0
    %886 = vmatprep.subr.bf16.mxu0 0
    %887 = vmatpush1.bf16.msra.mxu0 0
    %888 = vmatprep.subr.bf16.mxu0 0
    %889 = vmatpush1.bf16.msra.mxu0 0
    %890 = vmatprep.mubr.bf16.mxu0 0
    %891 = vmatmul.mubr.bf16.gmra.mrb[0].mxu0 %v853
    %v892 = vpop.f32.mrb[0].mxu0
    %v893 = vadd.f32 0.0, %v892
    %v894 = vpop.f32.mrb[0].mxu0
    %v895 = vpop.f32.mrb[0].mxu0
    %v896 = vpop.f32.mrb[0].mxu0
    %897 = vdwg.mxu0
    %v898 = vpack.c.bf16 %v845, %v845
    %v899 = vpack.c.bf16 %v893, %v893
    %v902 = vunpack.c.l.b16 %v898
    %v903 = vunpack.c.l.b16 %v899
    %v904 = vpack.c.b16 %v902, %v902
    %v905 = vpack.c.b16 %v903, %v903
    %906 = vrot.lane.b32.xlu0 %v904, 16
    %v907 = vpop.permute.xlu0 %906
    %908 = vrot.lane.b32.xlu0 %v905, 16
    %v909 = vpop.permute.xlu0 %908
    %vm912 = vcmask 191616
    %913 = vst.msk [vmem:[#allocation2] sm:$0xf] %vm912, %v907
    %914 = vst.msk [vmem:[#allocation2 + $0x4] sm:$0xf] %vm912, %v909
    %915 = vrot.lane.b32.xlu0 %v210, 104
    %v916 = vpop.permute.xlu0 %915
    %917 = vrot.lane.b32.xlu0 %v210, 72
    %v918 = vpop.permute.xlu0 %917
    %v920 = vsel %vm214, %v916, 0
    %v923 = vsel %vm214, %v918, 0
    %925 = vmatprep.subr.bf16.mxu0 0
    %926 = vmatpush1.bf16.xpose.msra.mxu0 %v923
    %927 = vmatprep.subr.bf16.mxu0 0
    %928 = vmatpush1.bf16.xpose.msra.mxu0 0
    %929 = vmatprep.subr.bf16.mxu0 0
    %930 = vmatpush1.bf16.xpose.msra.mxu0 0
    %931 = vmatprep.subr.bf16.mxu0 0
    %932 = vmatpush1.bf16.xpose.msra.mxu0 0
    %933 = vmatprep.subr.bf16.mxu0 0
    %934 = vmatpush1.bf16.xpose.msra.mxu0 0
    %935 = vmatprep.subr.bf16.mxu0 0
    %936 = vmatpush1.bf16.xpose.msra.mxu0 0
    %937 = vmatprep.subr.bf16.mxu0 0
    %938 = vmatpush1.bf16.xpose.msra.mxu0 0
    %939 = vmatprep.subr.bf16.mxu0 0
    %940 = vmatpush1.bf16.xpose.msra.mxu0 0
    %941 = vmatprep.subr.bf16.mxu0 0
    %942 = vmatpush1.bf16.xpose.msra.mxu0 0
    %943 = vmatprep.subr.bf16.mxu0 0
    %944 = vmatpush1.bf16.xpose.msra.mxu0 0
    %945 = vmatprep.subr.bf16.mxu0 0
    %946 = vmatpush1.bf16.xpose.msra.mxu0 0
    %947 = vmatprep.subr.bf16.mxu0 0
    %948 = vmatpush1.bf16.xpose.msra.mxu0 0
    %949 = vmatprep.subr.bf16.mxu0 0
    %950 = vmatpush1.bf16.xpose.msra.mxu0 0
    %951 = vmatprep.subr.bf16.mxu0 0
    %952 = vmatpush1.bf16.xpose.msra.mxu0 0
    %953 = vmatprep.subr.bf16.mxu0 0
    %954 = vmatpush1.bf16.xpose.msra.mxu0 0
    %955 = vmatprep.subr.bf16.mxu0 0
    %956 = vmatpush1.bf16.xpose.msra.mxu0 0
    %957 = vmatprep.mubr.bf16.mxu0 0
    %958 = vmatmul.mubr.bf16.gmra.mrb[0].mxu0 %v920
    %v959 = vpop.f32.mrb[0].mxu0
    %v960 = vadd.f32 0.0, %v959
    %v961 = vpop.f32.mrb[0].mxu0
    %v962 = vpop.f32.mrb[0].mxu0
    %v963 = vpop.f32.mrb[0].mxu0
    %964 = vdwg.mxu0
    %965 = vrot.lane.b32.xlu0 %v211, 104
    %v966 = vpop.permute.xlu0 %965
    %967 = vrot.lane.b32.xlu0 %v211, 72
    %v968 = vpop.permute.xlu0 %967
    %v970 = vsel %vm214, %v966, 0
    %v973 = vsel %vm214, %v968, 0
    %975 = vmatprep.subr.bf16.mxu0 0
    %976 = vmatpush1.bf16.xpose.msra.mxu0 %v973
    %977 = vmatprep.subr.bf16.mxu0 0
    %978 = vmatpush1.bf16.xpose.msra.mxu0 0
    %979 = vmatprep.subr.bf16.mxu0 0
    %980 = vmatpush1.bf16.xpose.msra.mxu0 0
    %981 = vmatprep.subr.bf16.mxu0 0
    %982 = vmatpush1.bf16.xpose.msra.mxu0 0
    %983 = vmatprep.subr.bf16.mxu0 0
    %984 = vmatpush1.bf16.xpose.msra.mxu0 0
    %985 = vmatprep.subr.bf16.mxu0 0
    %986 = vmatpush1.bf16.xpose.msra.mxu0 0
    %987 = vmatprep.subr.bf16.mxu0 0
    %988 = vmatpush1.bf16.xpose.msra.mxu0 0
    %989 = vmatprep.subr.bf16.mxu0 0
    %990 = vmatpush1.bf16.xpose.msra.mxu0 0
    %991 = vmatprep.subr.bf16.mxu0 0
    %992 = vmatpush1.bf16.xpose.msra.mxu0 0
    %993 = vmatprep.subr.bf16.mxu0 0
    %994 = vmatpush1.bf16.xpose.msra.mxu0 0
    %995 = vmatprep.subr.bf16.mxu0 0
    %996 = vmatpush1.bf16.xpose.msra.mxu0 0
    %997 = vmatprep.subr.bf16.mxu0 0
    %998 = vmatpush1.bf16.xpose.msra.mxu0 0
    %999 = vmatprep.subr.bf16.mxu0 0
    %1000 = vmatpush1.bf16.xpose.msra.mxu0 0
    %1001 = vmatprep.subr.bf16.mxu0 0
    %1002 = vmatpush1.bf16.xpose.msra.mxu0 0
    %1003 = vmatprep.subr.bf16.mxu0 0
    %1004 = vmatpush1.bf16.xpose.msra.mxu0 0
    %1005 = vmatprep.subr.bf16.mxu0 0
    %1006 = vmatpush1.bf16.xpose.msra.mxu0 0
    %1007 = vmatprep.mubr.bf16.mxu0 0
    %1008 = vmatmul.mubr.bf16.gmra.mrb[0].mxu0 %v970
    %v1009 = vpop.f32.mrb[0].mxu0
    %v1010 = vadd.f32 0.0, %v1009
    %v1011 = vpop.f32.mrb[0].mxu0
    %v1012 = vpop.f32.mrb[0].mxu0
    %v1013 = vpop.f32.mrb[0].mxu0
    %1014 = vdwg.mxu0
    %v1015 = vmul.f32 %v960, 0.35355338
    %v1016 = vmul.f32 %v1010, 0.35355338
    %v1017 = vsel %vm214, %v1015, -inf
    %1018 = vmax.xlane.f32.xlu0 %v1017
    %v1019 = vpop.xlane.xlu0 %1018
    %v1020 = vsel %vm214, %v1016, -inf
    %1021 = vmax.xlane.f32.xlu0 %v1020
    %v1022 = vpop.xlane.xlu0 %1021
    %v1023 = vsub.f32 %v1015, %v1019
    %v1024 = vsub.f32 %v1016, %v1022
    %v1025 = vmul.f32 %v1023, 1.442695
    %v1026 = vpow.pop %v1025
    %v1027 = vmul.f32 %v1024, 1.442695
    %v1028 = vpow.pop %v1027
    %v1029 = vsel %vm214, %v1026, 0.0
    %1030 = vadd.xlane.f32.xlu0 %v1029
    %v1031 = vpop.xlane.xlu0 %1030
    %v1032 = vsel %vm214, %v1028, 0.0
    %1033 = vadd.xlane.f32.xlu0 %v1032
    %v1034 = vpop.xlane.xlu0 %1033
    %v1035 = vrcp.pop %v1031
    %v1036 = vrcp.pop %v1034
    %v1037 = vmul.f32 %v1026, %v1035
    %v1038 = vmul.f32 %v1028, %v1036
    %v1039 = vpack.c.bf16 %v1037, %v1037
    %v1040 = vpack.c.bf16 %v1038, %v1038
    %1041 = vrot.lane.b32.xlu0 %v210, 40
    %v1042 = vpop.permute.xlu0 %1041
    %v1044 = vsel %vm214, %v1039, 0
    %v1047 = vsel %vm340, %v1042, 0
    %1049 = vmatprep.subr.bf16.mxu0 0
    %1050 = vmatpush1.bf16.msra.mxu0 %v1047
    %1051 = vmatprep.subr.bf16.mxu0 0
    %1052 = vmatpush1.bf16.msra.mxu0 0
    %1053 = vmatprep.subr.bf16.mxu0 0
    %1054 = vmatpush1.bf16.msra.mxu0 0
    %1055 = vmatprep.subr.bf16.mxu0 0
    %1056 = vmatpush1.bf16.msra.mxu0 0
    %1057 = vmatprep.subr.bf16.mxu0 0
    %1058 = vmatpush1.bf16.msra.mxu0 0
    %1059 = vmatprep.subr.bf16.mxu0 0
    %1060 = vmatpush1.bf16.msra.mxu0 0
    %1061 = vmatprep.subr.bf16.mxu0 0
    %1062 = vmatpush1.bf16.msra.mxu0 0
    %1063 = vmatprep.subr.bf16.mxu0 0
    %1064 = vmatpush1.bf16.msra.mxu0 0
    %1065 = vmatprep.subr.bf16.mxu0 0
    %1066 = vmatpush1.bf16.msra.mxu0 0
    %1067 = vmatprep.subr.bf16.mxu0 0
    %1068 = vmatpush1.bf16.msra.mxu0 0
    %1069 = vmatprep.subr.bf16.mxu0 0
    %1070 = vmatpush1.bf16.msra.mxu0 0
    %1071 = vmatprep.subr.bf16.mxu0 0
    %1072 = vmatpush1.bf16.msra.mxu0 0
    %1073 = vmatprep.subr.bf16.mxu0 0
    %1074 = vmatpush1.bf16.msra.mxu0 0
    %1075 = vmatprep.subr.bf16.mxu0 0
    %1076 = vmatpush1.bf16.msra.mxu0 0
    %1077 = vmatprep.subr.bf16.mxu0 0
    %1078 = vmatpush1.bf16.msra.mxu0 0
    %1079 = vmatprep.subr.bf16.mxu0 0
    %1080 = vmatpush1.bf16.msra.mxu0 0
    %1081 = vmatprep.mubr.bf16.mxu0 0
    %1082 = vmatmul.mubr.bf16.gmra.mrb[0].mxu0 %v1044
    %v1083 = vpop.f32.mrb[0].mxu0
    %v1084 = vadd.f32 0.0, %v1083
    %v1085 = vpop.f32.mrb[0].mxu0
    %v1086 = vpop.f32.mrb[0].mxu0
    %v1087 = vpop.f32.mrb[0].mxu0
    %1088 = vdwg.mxu0
    %1089 = vrot.lane.b32.xlu0 %v211, 40
    %v1090 = vpop.permute.xlu0 %1089
    %v1092 = vsel %vm214, %v1040, 0
    %v1095 = vsel %vm340, %v1090, 0
    %1097 = vmatprep.subr.bf16.mxu0 0
    %1098 = vmatpush1.bf16.msra.mxu0 %v1095
    %1099 = vmatprep.subr.bf16.mxu0 0
    %1100 = vmatpush1.bf16.msra.mxu0 0
    %1101 = vmatprep.subr.bf16.mxu0 0
    %1102 = vmatpush1.bf16.msra.mxu0 0
    %1103 = vmatprep.subr.bf16.mxu0 0
    %1104 = vmatpush1.bf16.msra.mxu0 0
    %1105 = vmatprep.subr.bf16.mxu0 0
    %1106 = vmatpush1.bf16.msra.mxu0 0
    %1107 = vmatprep.subr.bf16.mxu0 0
    %1108 = vmatpush1.bf16.msra.mxu0 0
    %1109 = vmatprep.subr.bf16.mxu0 0
    %1110 = vmatpush1.bf16.msra.mxu0 0
    %1111 = vmatprep.subr.bf16.mxu0 0
    %1112 = vmatpush1.bf16.msra.mxu0 0
    %1113 = vmatprep.subr.bf16.mxu0 0
    %1114 = vmatpush1.bf16.msra.mxu0 0
    %1115 = vmatprep.subr.bf16.mxu0 0
    %1116 = vmatpush1.bf16.msra.mxu0 0
    %1117 = vmatprep.subr.bf16.mxu0 0
    %1118 = vmatpush1.bf16.msra.mxu0 0
    %1119 = vmatprep.subr.bf16.mxu0 0
    %1120 = vmatpush1.bf16.msra.mxu0 0
    %1121 = vmatprep.subr.bf16.mxu0 0
    %1122 = vmatpush1.bf16.msra.mxu0 0
    %1123 = vmatprep.subr.bf16.mxu0 0
    %1124 = vmatpush1.bf16.msra.mxu0 0
    %1125 = vmatprep.subr.bf16.mxu0 0
    %1126 = vmatpush1.bf16.msra.mxu0 0
    %1127 = vmatprep.subr.bf16.mxu0 0
    %1128 = vmatpush1.bf16.msra.mxu0 0
    %1129 = vmatprep.mubr.bf16.mxu0 0
    %1130 = vmatmul.mubr.bf16.gmra.mrb[0].mxu0 %v1092
    %v1131 = vpop.f32.mrb[0].mxu0
    %v1132 = vadd.f32 0.0, %v1131
    %v1133 = vpop.f32.mrb[0].mxu0
    %v1134 = vpop.f32.mrb[0].mxu0
    %v1135 = vpop.f32.mrb[0].mxu0
    %1136 = vdwg.mxu0
    %v1137 = vpack.c.bf16 %v1084, %v1084
    %v1138 = vpack.c.bf16 %v1132, %v1132
    %v1141 = vunpack.c.l.b16 %v1137
    %v1142 = vunpack.c.l.b16 %v1138
    %v1143 = vpack.c.b16 %v1141, %v1141
    %v1144 = vpack.c.b16 %v1142, %v1142
    %1145 = vrot.lane.b32.xlu0 %v1143, 24
    %v1146 = vpop.permute.xlu0 %1145
    %1147 = vrot.lane.b32.xlu0 %v1144, 24
    %v1148 = vpop.permute.xlu0 %1147
    %vm1151 = vcmask 257216
    %1152 = vst.msk [vmem:[#allocation2] sm:$0xf] %vm1151, %v1146
    %1153 = vst.msk [vmem:[#allocation2 + $0x4] sm:$0xf] %vm1151, %v1148
    %v1154 = vld [vmem:[#allocation2] sm:$0xf]
    %v1155 = vld [vmem:[#allocation2 + $0x4] sm:$0xf]
    %v1156 = vld [vmem:[%s5] sm:$0xf]
    %v1157 = vld [vmem:[%s5 + $0x4] sm:$0xf]
    %v1158 = vld [vmem:[%s5 + $0x8] sm:$0xf]
    %v1159 = vld [vmem:[%s5 + $0xc] sm:$0xf]
    %v1160 = vld [vmem:[%s6] sm:$0x1]
    %v1162 = vlaneseq
    %v1163 = vshrl.u32 %v1162, 7
    %v1164 = vsub.s32 0, %v1163
    %v1165 = vrot.slane %v1160, %v1164
    %v1169 = vunpack.c.l.b16 %v1154
    %v1170 = vunpack.c.l.b16 %v1155
    %v1171 = vpack.c.b16 %v1170, %v1169
    %v1176 = vunpack.c.l.b16 %v1156
    %v1177 = vunpack.c.l.b16 %v1157
    %v1178 = vunpack.c.l.b16 %v1158
    %v1179 = vunpack.c.l.b16 %v1159
    %v1180 = vpack.c.b16 %v1177, %v1176
    %v1181 = vpack.c.b16 %v1179, %v1178
    %v1183 = vsel %vm50, %v1171, 0
    %v1186 = vsel %vm50, %v1180, 0
    %v1189 = vsel %vm50, %v1181, 0
    %1191 = vmatprep.subr.bf16.mxu0 0
    %1192 = vmatpush1.bf16.xpose.msra.mxu0 %v1186
    %1193 = vmatprep.subr.bf16.mxu0 0
    %1194 = vmatpush1.bf16.xpose.msra.mxu0 %v1189
    %1195 = vmatprep.subr.bf16.mxu0 0
    %1196 = vmatpush1.bf16.xpose.msra.mxu0 0
    %1197 = vmatprep.subr.bf16.mxu0 0
    %1198 = vmatpush1.bf16.xpose.msra.mxu0 0
    %1199 = vmatprep.subr.bf16.mxu0 0
    %1200 = vmatpush1.bf16.xpose.msra.mxu0 0
    %1201 = vmatprep.subr.bf16.mxu0 0
    %1202 = vmatpush1.bf16.xpose.msra.mxu0 0
    %1203 = vmatprep.subr.bf16.mxu0 0
    %1204 = vmatpush1.bf16.xpose.msra.mxu0 0
    %1205 = vmatprep.subr.bf16.mxu0 0
    %1206 = vmatpush1.bf16.xpose.msra.mxu0 0
    %1207 = vmatprep.subr.bf16.mxu0 0
    %1208 = vmatpush1.bf16.xpose.msra.mxu0 0
    %1209 = vmatprep.subr.bf16.mxu0 0
    %1210 = vmatpush1.bf16.xpose.msra.mxu0 0
    %1211 = vmatprep.subr.bf16.mxu0 0
    %1212 = vmatpush1.bf16.xpose.msra.mxu0 0
    %1213 = vmatprep.subr.bf16.mxu0 0
    %1214 = vmatpush1.bf16.xpose.msra.mxu0 0
    %1215 = vmatprep.subr.bf16.mxu0 0
    %1216 = vmatpush1.bf16.xpose.msra.mxu0 0
    %1217 = vmatprep.subr.bf16.mxu0 0
    %1218 = vmatpush1.bf16.xpose.msra.mxu0 0
    %1219 = vmatprep.subr.bf16.mxu0 0
    %1220 = vmatpush1.bf16.xpose.msra.mxu0 0
    %1221 = vmatprep.subr.bf16.mxu0 0
    %1222 = vmatpush1.bf16.xpose.msra.mxu0 0
    %1223 = vmatprep.mubr.bf16.mxu0 0
    %1224 = vmatmul.mubr.bf16.gmra.mrb[0].mxu0 %v1183
    %v1225 = vpop.f32.mrb[0].mxu0
    %v1226 = vadd.f32 %v1165, %v1225
    %v1227 = vpop.f32.mrb[0].mxu0
    %v1228 = vpop.f32.mrb[0].mxu0
    %v1229 = vadd.f32 %v1165, %v1228
    %v1230 = vpop.f32.mrb[0].mxu0
    %1231 = vdwg.mxu0
    %v1232 = vadd.f32 %v46, %v1226
    %v1233 = vadd.f32 %v47, %v1229
    %v1234 = vld [vmem:[%s7] sm:$0x1]
    %v1235 = vld [vmem:[%s8] sm:$0x1]
    %v1236 = vsel %vm50, %v1232, 0.0
    %1237 = vadd.xlane.f32.xlu0 %v1236
    %v1238 = vpop.xlane.xlu0 %1237
    %v1239 = vsel %vm50, %v1233, 0.0
    %1240 = vadd.xlane.f32.xlu0 %v1239
    %v1241 = vpop.xlane.xlu0 %1240
    %v1242 = vmul.f32 %v1238, %v57
    %v1243 = vmul.f32 %v1241, %v57
    %v1244 = vsub.f32 %v1232, %v1242
    %v1245 = vsub.f32 %v1233, %v1243
    %v1246 = vmul.f32 %v1244, %v1244
    %v1247 = vmul.f32 %v1245, %v1245
    %v1248 = vsel %vm50, %v1246, 0.0
    %1249 = vadd.xlane.f32.xlu0 %v1248
    %v1250 = vpop.xlane.xlu0 %1249
    %v1251 = vsel %vm50, %v1247, 0.0
    %1252 = vadd.xlane.f32.xlu0 %v1251
    %v1253 = vpop.xlane.xlu0 %1252
    %v1254 = vmul.f32 %v1250, %v57
    %v1255 = vmul.f32 %v1253, %v57
    %v1256 = vadd.f32 %v1254, 1e-05
    %v1257 = vadd.f32 %v1255, 1e-05
    %v1258 = vrsqrt.pop %v1256
    %v1259 = vrsqrt.pop %v1257
    %v1260 = vmul.f32 %v1244, %v1258
    %v1261 = vmul.f32 %v1245, %v1259
    %v1263 = vlaneseq
    %v1264 = vshrl.u32 %v1263, 7
    %v1265 = vsub.s32 0, %v1264
    %v1266 = vrot.slane %v1234, %v1265
    %v1268 = vmul.f32 %v1260, %v1266
    %v1269 = vmul.f32 %v1261, %v1266
    %v1271 = vlaneseq
    %v1272 = vshrl.u32 %v1271, 7
    %v1273 = vsub.s32 0, %v1272
    %v1274 = vrot.slane %v1235, %v1273
    %v1276 = vadd.f32 %v1268, %v1274
    %v1277 = vadd.f32 %v1269, %v1274
    %v1278 = vpack.c.bf16 %v1277, %v1276
    %v1279 = vld [vmem:[%s9] sm:$0xf]
    %v1280 = vld [vmem:[%s9 + $0x4] sm:$0xf]
    %v1281 = vld [vmem:[%s9 + $0x8] sm:$0xf]
    %v1282 = vld [vmem:[%s9 + $0xc] sm:$0xf]
    %v1283 = vld [vmem:[%s9 + $0x10] sm:$0xf]
    %v1284 = vld [vmem:[%s9 + $0x14] sm:$0xf]
    %v1285 = vld [vmem:[%s9 + $0x18] sm:$0xf]
    %v1286 = vld [vmem:[%s9 + $0x1c] sm:$0xf]
    %v1287 = vld [vmem:[%s9 + $0x20] sm:$0xf]
    %v1288 = vld [vmem:[%s9 + $0x24] sm:$0xf]
    %v1289 = vld [vmem:[%s9 + $0x28] sm:$0xf]
    %v1290 = vld [vmem:[%s9 + $0x2c] sm:$0xf]
    %v1291 = vld [vmem:[%s9 + $0x30] sm:$0xf]
    %v1292 = vld [vmem:[%s9 + $0x34] sm:$0xf]
    %v1293 = vld [vmem:[%s9 + $0x38] sm:$0xf]
    %v1294 = vld [vmem:[%s9 + $0x3c] sm:$0xf]
    %v1295 = vld [vmem:[%s10] sm:$0x1]
    %v1297 = vlaneseq
    %v1298 = vshrl.u32 %v1297, 7
    %v1299 = vsub.s32 0, %v1298
    %v1300 = vrot.slane %v1295, %v1299
    %v1318 = vunpack.c.l.b16 %v1279
    %v1319 = vunpack.c.l.b16 %v1280
    %v1320 = vunpack.c.l.b16 %v1281
    %v1321 = vunpack.c.l.b16 %v1282
    %v1322 = vunpack.c.l.b16 %v1283
    %v1323 = vunpack.c.l.b16 %v1284
    %v1324 = vunpack.c.l.b16 %v1285
    %v1325 = vunpack.c.l.b16 %v1286
    %v1326 = vunpack.c.l.b16 %v1287
    %v1327 = vunpack.c.l.b16 %v1288
    %v1328 = vunpack.c.l.b16 %v1289
    %v1329 = vunpack.c.l.b16 %v1290
    %v1330 = vunpack.c.l.b16 %v1291
    %v1331 = vunpack.c.l.b16 %v1292
    %v1332 = vunpack.c.l.b16 %v1293
    %v1333 = vunpack.c.l.b16 %v1294
    %v1334 = vpack.c.b16 %v1319, %v1318
    %v1335 = vpack.c.b16 %v1321, %v1320
    %v1336 = vpack.c.b16 %v1323, %v1322
    %v1337 = vpack.c.b16 %v1325, %v1324
    %v1338 = vpack.c.b16 %v1327, %v1326
    %v1339 = vpack.c.b16 %v1329, %v1328
    %v1340 = vpack.c.b16 %v1331, %v1330
    %v1341 = vpack.c.b16 %v1333, %v1332
    %v1343 = vsel %vm50, %v1278, 0
    %v1346 = vsel %vm50, %v1334, 0
    %v1349 = vsel %vm50, %v1335, 0
    %v1352 = vsel %vm50, %v1336, 0
    %v1355 = vsel %vm50, %v1337, 0
    %v1358 = vsel %vm50, %v1338, 0
    %v1361 = vsel %vm50, %v1339, 0
    %v1364 = vsel %vm50, %v1340, 0
    %v1367 = vsel %vm50, %v1341, 0
    %1369 = vmatprep.subr.bf16.mxu0 0
    %1370 = vmatpush1.bf16.xpose.msra.mxu0 %v1346
    %1371 = vmatprep.subr.bf16.mxu0 0
    %1372 = vmatpush1.bf16.xpose.msra.mxu0 %v1349
    %1373 = vmatprep.subr.bf16.mxu0 0
    %1374 = vmatpush1.bf16.xpose.msra.mxu0 %v1352
    %1375 = vmatprep.subr.bf16.mxu0 0
    %1376 = vmatpush1.bf16.xpose.msra.mxu0 %v1355
    %1377 = vmatprep.subr.bf16.mxu0 0
    %1378 = vmatpush1.bf16.xpose.msra.mxu0 %v1358
    %1379 = vmatprep.subr.bf16.mxu0 0
    %1380 = vmatpush1.bf16.xpose.msra.mxu0 %v1361
    %1381 = vmatprep.subr.bf16.mxu0 0
    %1382 = vmatpush1.bf16.xpose.msra.mxu0 %v1364
    %1383 = vmatprep.subr.bf16.mxu0 0
    %1384 = vmatpush1.bf16.xpose.msra.mxu0 %v1367
    %1385 = vmatprep.subr.bf16.mxu0 0
    %1386 = vmatpush1.bf16.xpose.msra.mxu0 0
    %1387 = vmatprep.subr.bf16.mxu0 0
    %1388 = vmatpush1.bf16.xpose.msra.mxu0 0
    %1389 = vmatprep.subr.bf16.mxu0 0
    %1390 = vmatpush1.bf16.xpose.msra.mxu0 0
    %1391 = vmatprep.subr.bf16.mxu0 0
    %1392 = vmatpush1.bf16.xpose.msra.mxu0 0
    %1393 = vmatprep.subr.bf16.mxu0 0
    %1394 = vmatpush1.bf16.xpose.msra.mxu0 0
    %1395 = vmatprep.subr.bf16.mxu0 0
    %1396 = vmatpush1.bf16.xpose.msra.mxu0 0
    %1397 = vmatprep.subr.bf16.mxu0 0
    %1398 = vmatpush1.bf16.xpose.msra.mxu0 0
    %1399 = vmatprep.subr.bf16.mxu0 0
    %1400 = vmatpush1.bf16.xpose.msra.mxu0 0
    %1401 = vmatprep.mubr.bf16.mxu0 0
    %1402 = vmatmul.mubr.bf16.gmra.mrb[0].mxu0 %v1343
    %v1403 = vpop.f32.mrb[0].mxu0
    %v1404 = vadd.f32 %v1300, %v1403
    %v1405 = vpop.f32.mrb[0].mxu0
    %v1406 = vpop.f32.mrb[0].mxu0
    %v1407 = vadd.f32 %v1300, %v1406
    %v1408 = vpop.f32.mrb[0].mxu0
    %1409 = vdwg.mxu0
    %v1410 = vmul.f32 %v1404, 1.702
    %v1411 = vmul.f32 %v1407, 1.702
    %v1412 = vxor.u32 %v1410, 2147483648
    %v1413 = vxor.u32 %v1411, 2147483648
    %v1414 = vmul.f32 %v1412, 1.442695
    %v1415 = vpow.pop %v1414
    %v1416 = vmul.f32 %v1413, 1.442695
    %v1417 = vpow.pop %v1416
    %v1418 = vadd.f32 %v1415, 1.0
    %v1419 = vadd.f32 %v1417, 1.0
    %v1420 = vrcp.pop %v1418
    %v1421 = vmul.f32 1.0, %v1420
    %v1422 = vrcp.pop %v1419
    %v1423 = vmul.f32 1.0, %v1422
    %v1424 = vmul.f32 %v1404, %v1421
    %v1425 = vmul.f32 %v1407, %v1423
    %v1426 = vpack.c.bf16 %v1425, %v1424
    %v1427 = vld [vmem:[%s11] sm:$0xf]
    %v1428 = vld [vmem:[%s11 + $0x4] sm:$0xf]
    %v1429 = vld [vmem:[%s11 + $0x8] sm:$0xf]
    %v1430 = vld [vmem:[%s11 + $0xc] sm:$0xf]
    %v1431 = vld [vmem:[%s12] sm:$0x1]
    %v1433 = vlaneseq
    %v1434 = vshrl.u32 %v1433, 7
    %v1435 = vsub.s32 0, %v1434
    %v1436 = vrot.slane %v1431, %v1435
    %v1442 = vunpack.c.l.b16 %v1427
    %v1443 = vunpack.c.l.b16 %v1428
    %v1444 = vunpack.c.l.b16 %v1429
    %v1445 = vunpack.c.l.b16 %v1430
    %v1446 = vpack.c.b16 %v1443, %v1442
    %v1447 = vpack.c.b16 %v1445, %v1444
    %1450 = vmatprep.subr.bf16.mxu0 0
    %1451 = vmatpush1.bf16.xpose.msra.mxu0 %v1446
    %1452 = vmatprep.subr.bf16.mxu0 0
    %1453 = vmatpush1.bf16.xpose.msra.mxu0 %v1447
    %1454 = vmatprep.subr.bf16.mxu0 0
    %1455 = vmatpush1.bf16.xpose.msra.mxu0 0
    %1456 = vmatprep.subr.bf16.mxu0 0
    %1457 = vmatpush1.bf16.xpose.msra.mxu0 0
    %1458 = vmatprep.subr.bf16.mxu0 0
    %1459 = vmatpush1.bf16.xpose.msra.mxu0 0
    %1460 = vmatprep.subr.bf16.mxu0 0
    %1461 = vmatpush1.bf16.xpose.msra.mxu0 0
    %1462 = vmatprep.subr.bf16.mxu0 0
    %1463 = vmatpush1.bf16.xpose.msra.mxu0 0
    %1464 = vmatprep.subr.bf16.mxu0 0
    %1465 = vmatpush1.bf16.xpose.msra.mxu0 0
    %1466 = vmatprep.subr.bf16.mxu0 0
    %1467 = vmatpush1.bf16.xpose.msra.mxu0 0
    %1468 = vmatprep.subr.bf16.mxu0 0
    %1469 = vmatpush1.bf16.xpose.msra.mxu0 0
    %1470 = vmatprep.subr.bf16.mxu0 0
    %1471 = vmatpush1.bf16.xpose.msra.mxu0 0
    %1472 = vmatprep.subr.bf16.mxu0 0
    %1473 = vmatpush1.bf16.xpose.msra.mxu0 0
    %1474 = vmatprep.subr.bf16.mxu0 0
    %1475 = vmatpush1.bf16.xpose.msra.mxu0 0
    %1476 = vmatprep.subr.bf16.mxu0 0
    %1477 = vmatpush1.bf16.xpose.msra.mxu0 0
    %1478 = vmatprep.subr.bf16.mxu0 0
    %1479 = vmatpush1.bf16.xpose.msra.mxu0 0
    %1480 = vmatprep.subr.bf16.mxu0 0
    %1481 = vmatpush1.bf16.xpose.msra.mxu0 0
    %1482 = vmatprep.mubr.bf16.mxu0 0
    %1483 = vmatmul.mubr.bf16.gmra.mrb[0].mxu0 %v1426
    %v1484 = vpop.f32.mrb[0].mxu0
    %v1485 = vadd.f32 %v1436, %v1484
    %v1486 = vpop.f32.mrb[0].mxu0
    %v1487 = vpop.f32.mrb[0].mxu0
    %v1488 = vadd.f32 %v1436, %v1487
    %v1489 = vpop.f32.mrb[0].mxu0
    %1490 = vdwg.mxu0
    %v1491 = vadd.f32 %v1232, %v1485
    %v1492 = vadd.f32 %v1233, %v1488
    %1493 = vst.msk [vmem:[#allocation3] sm:$0xff] %vm50, %v1491
    %1494 = vst.msk [vmem:[#allocation3 + $0x8] sm:$0xff] %vm50, %v1492
    // Predicated region
    $region54: #{tpu_custom_call.1} parent=1 // pred_check
      _
    $region55: #{tpu_custom_call.1} parent=1 // pred_check_branch
      %1496 = sbr.rel (0) target = $region57
    $region56: #{tpu_custom_call.1} parent=1 // pred_region
      %s1498 = ssub.s32 256, 256
      %1499 = vsyncadd [#allocation4], %s1498
      %s1500 = sshll.u32 [#allocation3], 4
      %s1501 = int_to_ptr.vmem [resolvable:$true] %s1500
      %1506 = dma.vmem_to_hbm [thread:$0]  %s1501, 256, %s13, [#allocation4], 128, 128, 8
    $region57: #{tpu_custom_call.1} parent=1 // pred_fallthru
      _
    // Predicated region
    $region58: #{tpu_custom_call.1} parent=1 // pred_check
      _
    $region59: #{tpu_custom_call.1} parent=1 // pred_check_branch
      %1508 = sbr.rel (0) target = $region61
    $region60: #{tpu_custom_call.1} parent=1 // pred_region
      %1509 = dma.done [#allocation4], 256
    $region61: #{tpu_custom_call.1} parent=1 // pred_fallthru
      _
    %1510 = vsyncpa [#allocation4], 1

</llo_original>
